<compile_context>
chip_gen: v6e
topology: v6e:2x2x1
jax: 0.10.0
libtpu: 0.0.40
codegen_flags: <defaults>
</compile_context>

<pallas_src>
import functools

import jax
import jax.numpy as jnp
import numpy as np
from jax import lax
from jax.experimental import pallas as pl
from jax.experimental.pallas import tpu as pltpu


# ---------------------------------------------------------------------------
# helpers
# ---------------------------------------------------------------------------
def _pick_tile(dim, candidates, override=None):
    """Largest tile from `candidates` (or `override`) that evenly divides `dim`."""
    if override is not None and 0 < override <= dim and dim % override == 0:
        return override
    for c in candidates:
        if c <= dim and dim % c == 0:
            return c
    return dim  # full-dim fallback


def _apply_rope(x, cos, sin_signed, half):
    """x*cos + rotate_half(x)*sin, with the rotate_half sign folded into sin.

    rotate_half(x) = concat(-x2, x1); with sign folded into the sin table the
    permutation is just a swap of the two lane halves.
    """
    xr = jnp.concatenate([x[:, half:], x[:, :half]], axis=-1)
    return x * cos + xr * sin_signed


# ---------------------------------------------------------------------------
# Tiled projection matmul: y = x @ w  (w already in (K, N) math layout)
# ---------------------------------------------------------------------------
def _matmul_kernel(x_ref, w_ref, o_ref, acc_ref):
    @pl.when(pl.program_id(2) == 0)
    def _():
        acc_ref[...] = jnp.zeros(acc_ref.shape, acc_ref.dtype)

    acc_ref[...] += jnp.dot(x_ref[...], w_ref[...],
                            preferred_element_type=jnp.float32)

    @pl.when(pl.program_id(2) == pl.num_programs(2) - 1)
    def _():
        o_ref[...] = acc_ref[...].astype(o_ref.dtype)


def matmul(x, w, out_dtype=None, block_m=None, block_n=None, block_k=None):
    M, K = x.shape
    K2, N = w.shape
    assert K == K2
    out_dtype = out_dtype if out_dtype is not None else x.dtype
    # 512-class tiles amortize per-step overhead; footprint stays < ~7 MiB f32
    # (double-buffered x/w/out + f32 acc), safely under every generation's
    # scoped-VMEM default (incl. v7x's 64 MiB physical / 32 MiB scoped part).
    tm = _pick_tile(M, (512, 256, 128, 64, 32, 16, 8), block_m)
    tn = _pick_tile(N, (512, 256, 128), block_n)
    tk = _pick_tile(K, (512, 256, 128), block_k)
    grid = (M // tm, N // tn, K // tk)
    return pl.pallas_call(
        _matmul_kernel,
        out_shape=jax.ShapeDtypeStruct((M, N), out_dtype),
        grid_spec=pltpu.PrefetchScalarGridSpec(
            num_scalar_prefetch=0,
            grid=grid,
            in_specs=[
                pl.BlockSpec((tm, tk), lambda i, j, k: (i, k)),
                pl.BlockSpec((tk, tn), lambda i, j, k: (k, j)),
            ],
            out_specs=pl.BlockSpec((tm, tn), lambda i, j, k: (i, j)),
            scratch_shapes=[pltpu.VMEM((tm, tn), jnp.float32)],
        ),
        compiler_params=pltpu.CompilerParams(
            dimension_semantics=("parallel", "parallel", "arbitrary")),
    )(x, w)


# ---------------------------------------------------------------------------
# KV preprocessing: ksum = rope(sum_g K), vsum = sum_g V, once per batch.
# Reads the K / V lane slabs straight out of the fused QKV projection output
# (no transpose, no column-slice copy in the wrapper).
# ---------------------------------------------------------------------------
def _kv_prep_kernel(k_ref, v_ref, cos_ref, sin_ref, ks_ref, vs_ref, *, G, Dh):
    kslab = k_ref[0].astype(jnp.float32)            # (tkv, G*Dh)
    vslab = v_ref[0].astype(jnp.float32)
    ksum = kslab[:, :Dh]
    vsum = vslab[:, :Dh]
    for g in range(1, G):                            # G lane-slab VPU adds
        ksum = ksum + kslab[:, g * Dh:(g + 1) * Dh]
        vsum = vsum + vslab[:, g * Dh:(g + 1) * Dh]
    c = cos_ref[...].astype(jnp.float32)
    sn = sin_ref[...].astype(jnp.float32)            # rotate_half sign folded in
    ks_ref[0] = _apply_rope(ksum, c, sn, Dh // 2).astype(ks_ref.dtype)
    vs_ref[0] = vsum.astype(vs_ref.dtype)


def kv_prep(qkv3, cos, sin_signed, H, G, Dh, out_dtype, block_kv=None):
    B, N, _ = qkv3.shape
    tkv = _pick_tile(N, (512, 256, 128), block_kv)
    grid = (B, N // tkv)
    kblk = H // G        # K slab starts at column H*Dh == kblk * (G*Dh)
    kernel = functools.partial(_kv_prep_kernel, G=G, Dh=Dh)
    return pl.pallas_call(
        kernel,
        out_shape=(jax.ShapeDtypeStruct((B, N, Dh), out_dtype),
                   jax.ShapeDtypeStruct((B, N, Dh), out_dtype)),
        grid_spec=pltpu.PrefetchScalarGridSpec(
            num_scalar_prefetch=0,
            grid=grid,
            in_specs=[
                pl.BlockSpec((1, tkv, G * Dh), lambda b, i: (b, i, kblk)),
                pl.BlockSpec((1, tkv, G * Dh), lambda b, i: (b, i, kblk + 1)),
                pl.BlockSpec((tkv, Dh), lambda b, i: (i, 0)),
                pl.BlockSpec((tkv, Dh), lambda b, i: (i, 0)),
            ],
            out_specs=[
                pl.BlockSpec((1, tkv, Dh), lambda b, i: (b, i, 0)),
                pl.BlockSpec((1, tkv, Dh), lambda b, i: (b, i, 0)),
            ],
        ),
        compiler_params=pltpu.CompilerParams(
            dimension_semantics=("parallel", "parallel")),
    )(qkv3, qkv3, cos, sin_signed)


# ---------------------------------------------------------------------------
# Attention: grid (B, H, Nq, Nkv); flash-style online softmax over KV blocks
# against the g-summed K/V. Q heads are read straight from the fused QKV
# output via lane-block indices; output is written as a (B, N, H*Dh) slab.
# ---------------------------------------------------------------------------
def _attn_kernel(q_ref, cos_ref, sin_ref, k_ref, v_ref, o_ref,
                 qrot_sc, m_sc, l_sc, acc_sc, *, scale, half):
    ki = pl.program_id(3)

    @pl.when(ki == 0)
    def _():
        # rope + softmax scale on the Q block, once per (b, h, q-block);
        # cached in VMEM scratch across the KV loop.
        q = q_ref[0].astype(jnp.float32)                      # (tq, Dh)
        c = cos_ref[...].astype(jnp.float32)
        sn = sin_ref[...].astype(jnp.float32)
        qrot_sc[...] = (_apply_rope(q, c, sn, half) * scale).astype(qrot_sc.dtype)
        m_sc[...] = jnp.full(m_sc.shape, -jnp.inf, m_sc.dtype)
        l_sc[...] = jnp.zeros(l_sc.shape, l_sc.dtype)
        acc_sc[...] = jnp.zeros(acc_sc.shape, acc_sc.dtype)

    # scores: contract on head_dim directly (no explicit K transpose).
    scores = lax.dot_general(qrot_sc[...], k_ref[0],
                             dimension_numbers=(((1,), (1,)), ((), ())),
                             preferred_element_type=jnp.float32)   # (tq, tkv)

    m_prev = m_sc[...]
    m_new = jnp.maximum(m_prev, jnp.max(scores, axis=-1, keepdims=True))
    alpha = jnp.exp(m_prev - m_new)
    p = jnp.exp(scores - m_new)
    l_sc[...] = alpha * l_sc[...] + jnp.sum(p, axis=-1, keepdims=True)
    acc_sc[...] = alpha * acc_sc[...] + jnp.dot(
        p.astype(v_ref.dtype), v_ref[0], preferred_element_type=jnp.float32)
    m_sc[...] = m_new

    # TODO(synk): attention dropout omitted (torch nn.Dropout is identity in eval).

    @pl.when(ki == pl.num_programs(3) - 1)
    def _():
        o_ref[0] = (acc_sc[...] / l_sc[...]).astype(o_ref.dtype)


def gqa_attention(qkv3, cos, sin_signed, ksum, vsum, scale, H, Dh,
                  block_q=None, block_kv=None):
    B, N, _ = qkv3.shape
    cd = qkv3.dtype
    tq = _pick_tile(N, (512, 256, 128), block_q)
    tkv = _pick_tile(N, (512, 256, 128), block_kv)
    grid = (B, H, N // tq, N // tkv)
    kernel = functools.partial(_attn_kernel, scale=scale, half=Dh // 2)
    # Note: on v6e a pipeline_mode=pl.Buffered(3) on the K/V specs can hide DMA
    # jitter for a few extra percent; left at the default depth-2 here.
    return pl.pallas_call(
        kernel,
        out_shape=jax.ShapeDtypeStruct((B, N, H * Dh), cd),
        grid_spec=pltpu.PrefetchScalarGridSpec(
            num_scalar_prefetch=0,
            grid=grid,
            in_specs=[
                # Q head h = lane-block h of the fused projection output.
                pl.BlockSpec((1, tq, Dh), lambda b, h, qi, ki: (b, qi, h)),
                pl.BlockSpec((tq, Dh), lambda b, h, qi, ki: (qi, 0)),
                pl.BlockSpec((tq, Dh), lambda b, h, qi, ki: (qi, 0)),
                pl.BlockSpec((1, tkv, Dh), lambda b, h, qi, ki: (b, ki, 0)),
                pl.BlockSpec((1, tkv, Dh), lambda b, h, qi, ki: (b, ki, 0)),
            ],
            out_specs=pl.BlockSpec((1, tq, Dh), lambda b, h, qi, ki: (b, qi, h)),
            scratch_shapes=[
                pltpu.VMEM((tq, Dh), cd),           # cached rope(Q) * scale
                pltpu.VMEM((tq, 1), jnp.float32),   # running max
                pltpu.VMEM((tq, 1), jnp.float32),   # running denominator
                pltpu.VMEM((tq, Dh), jnp.float32),  # output accumulator
            ],
        ),
        compiler_params=pltpu.CompilerParams(
            dimension_semantics=("parallel", "parallel", "parallel", "arbitrary")),
    )(qkv3, cos, sin_signed, ksum, vsum)


# ---------------------------------------------------------------------------
# Module wrapper
# ---------------------------------------------------------------------------
class GroupedMultiQueryAttentionPallas:
    def __init__(self, dim, n_heads, n_kv_heads, key,
                 compute_dtype=jnp.bfloat16, out_dtype=None,
                 block_q=None, block_kv=None, block_k=None):
        assert dim % n_heads == 0 and n_heads % n_kv_heads == 0
        self.dim = dim
        self.n_heads = n_heads
        self.n_kv_heads = n_kv_heads
        self.head_dim = dim // n_heads
        # Lane-block indexing of heads requires a lane-dense head_dim.
        assert self.head_dim % 128 == 0, "this kernel assumes head_dim % 128 == 0"
        self.scale = self.head_dim ** (-0.5)
        self.compute_dtype = compute_dtype
        self.out_dtype = out_dtype if out_dtype is not None else compute_dtype
        self.block_q = block_q
        self.block_kv = block_kv
        self.block_k = block_k

        kq, kkv, ko = jax.random.split(key, 3)
        s = 0.05
        # torch nn.Linear weight layout: (out_features, in_features); f32 masters.
        self.w_q = s * jax.random.normal(kq, (dim, dim), jnp.float32)
        self.w_kv = s * jax.random.normal(
            kkv, (2 * n_kv_heads * self.head_dim, dim), jnp.float32)
        self.w_out = s * jax.random.normal(ko, (dim, dim), jnp.float32)

        # Fused + pre-transposed projection weights in compute dtype:
        # one pass over x for Q/K/V, no per-call transpose, bf16 MXU operands.
        self.w_qkv_t = jnp.concatenate(
            [self.w_q, self.w_kv], axis=0).T.astype(compute_dtype)  # (dim, dim+2*G*Dh)
        self.w_out_t = self.w_out.T.astype(compute_dtype)           # (dim, dim)

        # RotaryEmbedding(head_dim): inv_freq over even indices.
        self.inv_freq = 1.0 / (10000.0 ** (
            jnp.arange(0, self.head_dim, 2, dtype=jnp.float32) / self.head_dim))
        # rotate_half(x) == lane-half swap * sign; fold the sign into sin.
        self.rot_sign = jnp.concatenate([
            -jnp.ones((self.head_dim // 2,), jnp.float32),
            jnp.ones((self.head_dim // 2,), jnp.float32)])

    def _rope_tables(self, N):
        t = jnp.arange(N, dtype=jnp.float32)
        freqs = t[:, None] * self.inv_freq[None, :]
        pos = jnp.concatenate([freqs, freqs], axis=-1)               # (N, Dh)
        return jnp.cos(pos), jnp.sin(pos) * self.rot_sign[None, :]

    def __call__(self, x):
        B, N, C = x.shape
        H, G, Dh = self.n_heads, self.n_kv_heads, self.head_dim
        cd = self.compute_dtype

        # fused Q/KV projection (single tiled MXU matmul)
        x2d = x.reshape(B * N, C).astype(cd)
        qkv = matmul(x2d, self.w_qkv_t, out_dtype=cd, block_k=self.block_k)
        # Free reshape only — Q heads / K slab / V slab are addressed directly
        # by lane-block indices inside the kernels (no transposes, no slices).
        qkv3 = qkv.reshape(B, N, (H + 2 * G) * Dh)

        cos, sin_signed = self._rope_tables(N)                       # (N, Dh) f32

        # K/V reduced over kv heads once per batch (+ rope on K); f32 tables
        # here (read once), compute-dtype tables for the attention kernel.
        ksum, vsum = kv_prep(qkv3, cos, sin_signed, H, G, Dh, cd,
                             block_kv=self.block_kv)

        # flash-style attention over the summed K/V; output is (B, N, H*Dh).
        out = gqa_attention(qkv3, cos.astype(cd), sin_signed.astype(cd),
                            ksum, vsum, self.scale, H, Dh,
                            block_q=self.block_q, block_kv=self.block_kv)

        out2d = out.reshape(B * N, C)                                # free reshape
        y = matmul(out2d, self.w_out_t, out_dtype=self.out_dtype,
                   block_k=self.block_k)
        return y.reshape(B, N, C)

    # pure-jnp f32 reference (mirrors the torch forward literally; note the
    # reference einsum 'bhid,bgjd->bhij' sums over the kv-head axis g, which
    # the kernels reproduce via the g-sum in kv_prep).
    def reference(self, x):
        B, N, C = x.shape
        H, G, Dh = self.n_heads, self.n_kv_heads, self.head_dim
        q = (x @ self.w_q.T).reshape(B, N, H, Dh).transpose(0, 2, 1, 3)
        kv = x @ self.w_kv.T
        k2d, v2d = jnp.split(kv, 2, axis=-1)
        k = k2d.reshape(B, N, G, Dh).transpose(0, 2, 1, 3)
        v = v2d.reshape(B, N, G, Dh).transpose(0, 2, 1, 3)

        t = jnp.arange(N, dtype=jnp.float32)
        freqs = t[:, None] * self.inv_freq[None, :]
        pos = jnp.concatenate([freqs, freqs], axis=-1)

        def rot_half(a):
            a1, a2 = jnp.split(a, 2, axis=-1)
            return jnp.concatenate([-a2, a1], axis=-1)

        def apply_rope(a):
            return a * jnp.cos(pos) + rot_half(a) * jnp.sin(pos)

        q, k = apply_rope(q), apply_rope(k)
        s = jnp.einsum("bhid,bgjd->bhij", q, k) * self.scale
        p = jax.nn.softmax(s, axis=-1)
        o = jnp.einsum("bhij,bgjd->bhid", p, v)
        o = o.transpose(0, 2, 1, 3).reshape(B, N, C)
        return o @ self.w_out.T


if __name__ == "__main__":
    B, N, dim = 2, 256, 512
    n_heads, n_kv_heads = 4, 2            # head_dim = 128 (one full lane tile)

    key = jax.random.PRNGKey(0)
    kx, kw = jax.random.split(key)
    x = jax.random.normal(kx, (B, N, dim), jnp.float32)

    # 128-sized (lane-dense) attention blocks + a 256 K-block so the multi-block
    # pipelines, K-axis accumulation and multi-step online softmax are all
    # exercised while respecting the raised tile floors.
    common = dict(block_q=128, block_kv=128, block_k=256)

    # f32 compute: tight structural check against the pure-jnp reference.
    mod_f32 = GroupedMultiQueryAttentionPallas(
        dim, n_heads, n_kv_heads, kw, compute_dtype=jnp.float32,
        out_dtype=jnp.float32, **common)
    out_f32 = jax.block_until_ready(mod_f32(x))
    ref = jax.block_until_ready(mod_f32.reference(x))
    assert out_f32.shape == (B, N, dim)
    np.testing.assert_allclose(np.asarray(out_f32), np.asarray(ref),
                               atol=2e-2, rtol=2e-2)

    # bf16 MXU operands / f32 accumulation: tolerance scaled to the output
    # magnitude since the reference is pure f32.
    mod_bf16 = GroupedMultiQueryAttentionPallas(
        dim, n_heads, n_kv_heads, kw, compute_dtype=jnp.bfloat16, **common)
    out_bf16 = jax.block_until_ready(mod_bf16(x))
    ref_np = np.asarray(ref)
    out_bf16_np = np.asarray(out_bf16.astype(jnp.float32))
    tol = 4e-2 * float(np.max(np.abs(ref_np)))
    np.testing.assert_allclose(out_bf16_np, ref_np, atol=tol, rtol=4e-2)

    print("KERNEL_OK")
</pallas_src>

<mosaic_0001>
module attributes {stable_mosaic.version = 11 : i64} {
  func.func @_matmul_kernel(%arg0: i32, %arg1: i32, %arg2: i32, %arg3: memref<512x256xf32, #tpu.memory_space<vmem>>, %arg4: memref<256x512xf32, #tpu.memory_space<vmem>>, %arg5: memref<512x512xf32, #tpu.memory_space<vmem>>, %arg6: memref<512x512xf32, #tpu.memory_space<vmem>>) attributes {dimension_semantics = [#tpu.dimension_semantics<parallel>, #tpu.dimension_semantics<parallel>, #tpu.dimension_semantics<arbitrary>], iteration_bounds = array<i64: 1, 2, 2>, scalar_prefetch = 0 : i64, scratch_operands = 1 : i64, tpu.core_type = #tpu.core_type<tc>, window_params = [{transform_indices = @transform_0, window_bounds = array<i64: 512, 256>}, {transform_indices = @transform_1, window_bounds = array<i64: 256, 512>}, {transform_indices = @transform_2, window_bounds = array<i64: 512, 512>}]} {
    %c0_i32 = arith.constant 0 : i32
    %0 = arith.cmpi eq, %arg2, %c0_i32 : i32
    %1 = arith.extui %0 : i1 to i32
    %c0_i32_0 = arith.constant 0 : i32
    %2 = arith.cmpi ne, %1, %c0_i32_0 : i32
    scf.if %2 {
      %cst_9 = arith.constant 0.000000e+00 : f32
      %12 = vector.broadcast %cst_9 : f32 to vector<512x512xf32>
      %c0_10 = arith.constant 0 : index
      %c0_11 = arith.constant 0 : index
      %13 = vector.load %arg6[%c0_10, %c0_11] : memref<512x512xf32, #tpu.memory_space<vmem>>, vector<512x512xf32>
      tpu.vector_store %arg6[%c0_10, %c0_11], %12 {strides = array<i32>} : memref<512x512xf32, #tpu.memory_space<vmem>>, vector<512x512xf32>,
    } else {
    }
    %c0 = arith.constant 0 : index
    %c0_1 = arith.constant 0 : index
    %3 = vector.load %arg6[%c0, %c0_1] : memref<512x512xf32, #tpu.memory_space<vmem>>, vector<512x512xf32>
    %c0_2 = arith.constant 0 : index
    %c0_3 = arith.constant 0 : index
    %4 = vector.load %arg3[%c0_2, %c0_3] : memref<512x256xf32, #tpu.memory_space<vmem>>, vector<512x256xf32>
    %c0_4 = arith.constant 0 : index
    %c0_5 = arith.constant 0 : index
    %5 = vector.load %arg4[%c0_4, %c0_5] : memref<256x512xf32, #tpu.memory_space<vmem>>, vector<256x512xf32>
    %cst = arith.constant dense<0.000000e+00> : vector<512x512xf32>
    %6 = tpu.matmul %4, %5, %cst {dimension_numbers = #tpu.dot_dimension_numbers<[1], [0], [0], [1], [0, 0, 1, 1], [], []>} : vector<512x256xf32>, vector<256x512xf32>, vector<512x512xf32> -> vector<512x512xf32>
    %7 = arith.addf %3, %6 : vector<512x512xf32>
    %c0_6 = arith.constant 0 : index
    %c0_7 = arith.constant 0 : index
    %8 = vector.load %arg6[%c0_6, %c0_7] : memref<512x512xf32, #tpu.memory_space<vmem>>, vector<512x512xf32>
    tpu.vector_store %arg6[%c0_6, %c0_7], %7 {strides = array<i32>} : memref<512x512xf32, #tpu.memory_space<vmem>>, vector<512x512xf32>,
    %c1_i32 = arith.constant 1 : i32
    %9 = arith.cmpi eq, %arg2, %c1_i32 : i32
    %10 = arith.extui %9 : i1 to i32
    %c0_i32_8 = arith.constant 0 : i32
    %11 = arith.cmpi ne, %10, %c0_i32_8 : i32
    scf.if %11 {
      %c0_9 = arith.constant 0 : index
      %c0_10 = arith.constant 0 : index
      %12 = vector.load %arg6[%c0_9, %c0_10] : memref<512x512xf32, #tpu.memory_space<vmem>>, vector<512x512xf32>
      %c0_11 = arith.constant 0 : index
      %c0_12 = arith.constant 0 : index
      %13 = vector.load %arg5[%c0_11, %c0_12] : memref<512x512xf32, #tpu.memory_space<vmem>>, vector<512x512xf32>
      tpu.vector_store %arg5[%c0_11, %c0_12], %12 {strides = array<i32>} : memref<512x512xf32, #tpu.memory_space<vmem>>, vector<512x512xf32>,
    } else {
    }
    return
  }
  func.func @transform_0(%arg0: i32, %arg1: i32, %arg2: i32) -> (i32, i32) {
    %c0_i32 = arith.constant 0 : i32
    return %arg0, %arg2 : i32, i32
  }
  func.func @transform_1(%arg0: i32, %arg1: i32, %arg2: i32) -> (i32, i32) {
    %c0_i32 = arith.constant 0 : i32
    return %arg2, %arg1 : i32, i32
  }
  func.func @transform_2(%arg0: i32, %arg1: i32, %arg2: i32) -> (i32, i32) {
    %c0_i32 = arith.constant 0 : i32
    return %arg0, %arg1 : i32, i32
  }
}

</mosaic_0001>

<llo_original>
// kernel: tpu_custom_call.1
$region0: #{tpu_custom_call.1}
  #allocation0 [shape = 'u32[]', space=smem, size = 0x4, offset = 0x4, fixed_abs, tag = 'smem constant byte address 0x4 - core index']
  #allocation1 [shape = 'u32[144,128]{1,0:T(1,128)}', space=vmem, size = 0x12000, scoped, tag = 'internal scratch']
  #allocation2 [shape = 'f32[512,512]{1,0:T(8,128)}', space=vmem, size = 0x100000, scoped, tag = 'scratch operand']
  %s0 = inlined_call_operand.hbm [shape: f32[512,512], index: 0, kind: input, shape index: {}]
  %s1 = inlined_call_operand.hbm [shape: f32[512,1024], index: 1, kind: input, shape index: {}]
  %s2 = inlined_call_operand.hbm [shape: f32[512,1024], index: 2, kind: output, shape index: {}]
  %s3 = sld [smem:[#allocation0]]
  $region57: #{tpu_custom_call.1} parent=0
    _
  %s5 = ssub.s32 1, %s3
  %s6 = scalar_select 0, %s5, %s3
  $region1: #{tpu_custom_call.1} parent=0
    #allocation3 [shape = 'u8[1048576]{0}', space=vmem, size = 0x100000, scoped, tag = 'input window, operand 0']
    #allocation4 [shape = 's32[2]{0}', space=sflag, size = 0x8, scoped, tag = 'scoped memory for tpu_custom_call.1']
    #allocation5 [shape = 's32[2]{0}', space=sflag, size = 0x8, scoped, tag = 'scoped memory for tpu_custom_call.1']
    #allocation6 [shape = 'u8[1048576]{0}', space=vmem, size = 0x100000, scoped, tag = 'input window, operand 1']
    #allocation7 [shape = 's32[2]{0}', space=sflag, size = 0x8, scoped, tag = 'scoped memory for tpu_custom_call.1']
    #allocation8 [shape = 'u8[2097152]{0}', space=vmem, size = 0x200000, scoped, tag = 'output window, operand 0']
    %7 = vsyncpa [#allocation4], 0
    %s8 = scalar_lea.sflag [#allocation4], 1
    %9 = vsyncpa %s8, 0
    %10 = vsyncpa [#allocation7], 0
    %s11 = scalar_lea.sflag [#allocation7], 1
    %12 = vsyncpa %s11, 0
    %13 = vsyncpa [#allocation5], 0
    %s14 = scalar_lea.sflag [#allocation5], 1
    %15 = vsyncpa %s14, 0
    loop: start=0, step=1, limit=6
    $region2: #{tpu_custom_call.1} parent=1 // loop_pre_header
      _
    $region3: #{tpu_custom_call.1} parent=1 // loop_header
      %s17 = sphi 0, %s21
      %p18 = scmp.ge.s32.totalorder %s17, 6
      %s24 = sphi 0, %s43
      %s25 = sphi 0, %s39
      %s26 = sphi 0, %s35
      %s27 = sphi 0, %s24
      %s28 = sphi 0, %s25
      %s29 = sphi 0, %s26
      %s30 = sphi 0, %s27
      %s31 = sphi 0, %s28
      %s32 = sphi 0, %s29
      %s48 = sphi 0, %s50
      %s51 = sphi 0, %s48
      %s52 = sphi 0, %s51
      %s68 = sphi 0, %s52
      %s76 = sphi 0, %s78
      %s79 = sphi 0, %s76
      %s80 = sphi 0, %s79
      %s96 = sphi 0, %s80
      %s104 = sphi 0, %s106
      %s107 = sphi 0, %s104
      %s108 = sphi 0, %s107
      %s124 = sphi 0, %s108
    $region4: #{tpu_custom_call.1} parent=1 // loop_header_branch
      %20 = sbr.rel (%p18) target = $region8
    $region5: #{tpu_custom_call.1} parent=1 // loop_body
      %s22 = ssub.s32 %s17, 1
      %s23 = ssub.s32 %s17, 2
      %s33 = sadd.s32 1, %s26
      %p34 = scmp.ge.s32.totalorder %s33, 2
      %s35 = scalar_select %p34, 0, %s33
      %s36 = sadd.s32 1, %s25
      %s37 = scalar_select %p34, %s36, %s25
      %p38 = scmp.ge.s32.totalorder %s37, 2
      %s39 = scalar_select %p38, 0, %s37
      %s40 = sadd.s32 1, %s24
      %s41 = scalar_select %p38, %s40, %s24
      %p42 = scmp.ge.s32.totalorder %s41, 1
      %s43 = scalar_select %p42, 0, %s41
      %s44 = ssub.s32 %s24, %s43
      %s45 = ssub.s32 %s26, %s35
      %s46 = sor.u32 %s44, %s45
      %p47 = scmp.eq.s32.totalorder %s46, 0
      %s49 = sadd.s32 %s48, 1
      %s50 = scalar_select %p47, %s48, %s49
      %p53 = pneg %p47
      %p54 = scmp.eq.s32.totalorder %s17, 3
      %p55 = por %p53, %p54
      %p56 = scmp.ne.s32.totalorder %s48, %s51
      %p57 = scmp.eq.s32.totalorder %s17, 0
      %p58 = por %p56, %p57
      %p59 = scmp.ne.s32.totalorder %s48, %s51
      %p60 = scmp.eq.s32.totalorder %s22, 3
      %p61 = por %p59, %p60
      %p62 = scmp.ne.s32.totalorder %s51, %s52
      %p63 = scmp.eq.s32.totalorder %s22, 0
      %p64 = por %p62, %p63
      %p65 = scmp.ne.s32.totalorder %s51, %s52
      %p66 = scmp.eq.s32.totalorder %s23, 3
      %p67 = por %p65, %p66
      %p69 = scmp.ne.s32.totalorder %s52, %s68
      %p70 = scmp.eq.s32.totalorder %s23, 0
      %p71 = por %p69, %p70
      %s72 = ssub.s32 %s26, %s35
      %s73 = ssub.s32 %s25, %s39
      %s74 = sor.u32 %s72, %s73
      %p75 = scmp.eq.s32.totalorder %s74, 0
      %s77 = sadd.s32 %s76, 1
      %s78 = scalar_select %p75, %s76, %s77
      %p81 = pneg %p75
      %p82 = scmp.eq.s32.totalorder %s17, 3
      %p83 = por %p81, %p82
      %p84 = scmp.ne.s32.totalorder %s76, %s79
      %p85 = scmp.eq.s32.totalorder %s17, 0
      %p86 = por %p84, %p85
      %p87 = scmp.ne.s32.totalorder %s76, %s79
      %p88 = scmp.eq.s32.totalorder %s22, 3
      %p89 = por %p87, %p88
      %p90 = scmp.ne.s32.totalorder %s79, %s80
      %p91 = scmp.eq.s32.totalorder %s22, 0
      %p92 = por %p90, %p91
      %p93 = scmp.ne.s32.totalorder %s79, %s80
      %p94 = scmp.eq.s32.totalorder %s23, 3
      %p95 = por %p93, %p94
      %p97 = scmp.ne.s32.totalorder %s80, %s96
      %p98 = scmp.eq.s32.totalorder %s23, 0
      %p99 = por %p97, %p98
      %s100 = ssub.s32 %s24, %s43
      %s101 = ssub.s32 %s25, %s39
      %s102 = sor.u32 %s100, %s101
      %p103 = scmp.eq.s32.totalorder %s102, 0
      %s105 = sadd.s32 %s104, 1
      %s106 = scalar_select %p103, %s104, %s105
      %p109 = pneg %p103
      %p110 = scmp.eq.s32.totalorder %s17, 3
      %p111 = por %p109, %p110
      %p112 = scmp.ne.s32.totalorder %s104, %s107
      %p113 = scmp.eq.s32.totalorder %s17, 0
      %p114 = por %p112, %p113
      %p115 = scmp.ne.s32.totalorder %s104, %s107
      %p116 = scmp.eq.s32.totalorder %s22, 3
      %p117 = por %p115, %p116
      %p118 = scmp.ne.s32.totalorder %s107, %s108
      %p119 = scmp.eq.s32.totalorder %s22, 0
      %p120 = por %p118, %p119
      %p121 = scmp.ne.s32.totalorder %s107, %s108
      %p122 = scmp.eq.s32.totalorder %s23, 3
      %p123 = por %p121, %p122
      %p125 = scmp.ne.s32.totalorder %s108, %s124
      %p126 = scmp.eq.s32.totalorder %s23, 0
      %p127 = por %p125, %p126
      %p128 = scmp.le.s32.totalorder 1, %s17
      %p129 = scmp.lt.s32.totalorder %s17, 5
      %p130 = pnand %p128, %p129
      %p131 = pneg %p130
      // Predicated region
      $region9: #{tpu_custom_call.1} parent=5 // pred_check
        _
      $region10: #{tpu_custom_call.1} parent=5 // pred_check_branch
        %133 = sbr.rel (%p130) target = $region12
      $region11: #{tpu_custom_call.1} parent=5 // pred_region
        %s134 = ssub.s32 %s17, 1
      $region12: #{tpu_custom_call.1} parent=5 // pred_fallthru
        _
      %p135 = scmp.lt.s32.totalorder %s17, 4
      // Predicated region
      $region13: #{tpu_custom_call.1} parent=5 // pred_check
        %p136 = pneg %p135
      $region14: #{tpu_custom_call.1} parent=5 // pred_check_branch
        %138 = sbr.rel (%p136) target = $region16
      $region15: #{tpu_custom_call.1} parent=5 // pred_region
        // Predicated region
        $region17: #{tpu_custom_call.1} parent=15 // pred_check
          %p139 = pneg %p58
        $region18: #{tpu_custom_call.1} parent=15 // pred_check_branch
          %141 = sbr.rel (%p139) target = $region20
        $region19: #{tpu_custom_call.1} parent=15 // pred_region
          %s142 = sand.u32 %s48, 1
          %s143 = scalar_lea.sflag [#allocation4], %s142
          %s144 = sand.u32 %s48, 1
          %s145 = smul.addr %s144, 1024
          %s146 = scalar_lea.vmem [#allocation3], %s145
          %s147 = smul.u32 64, %s24
          %s148 = smul.u32 2, %s26
          %s150 = ssub.s32 16384, 16384
          %151 = vsyncadd %s143, %s150
          %s152 = smul.addr %s147, 4
          %s153 = sadd.s32 %s148, %s152
          %s154 = smul.addr %s153, 128
          %s155 = scalar_lea.hbm %s0, %s154
          %s156 = sshll.u32 %s146, 4
          %s157 = int_to_ptr.vmem [resolvable:$true] %s156
          %162 = dma.hbm_to_vmem [thread:$0]  %s155, 16384, %s157, %s143, 512, 256, 16
        $region20: #{tpu_custom_call.1} parent=15 // pred_fallthru
          _
        // Predicated region
        $region21: #{tpu_custom_call.1} parent=15 // pred_check
          %p163 = pneg %p86
        $region22: #{tpu_custom_call.1} parent=15 // pred_check_branch
          %165 = sbr.rel (%p163) target = $region24
        $region23: #{tpu_custom_call.1} parent=15 // pred_region
          %s166 = sand.u32 %s76, 1
          %s167 = scalar_lea.sflag [#allocation7], %s166
          %s168 = sand.u32 %s76, 1
          %s169 = smul.addr %s168, 1024
          %s170 = scalar_lea.vmem [#allocation6], %s169
          %s171 = smul.u32 32, %s26
          %s172 = smul.u32 4, %s25
          %s174 = ssub.s32 16384, 16384
          %175 = vsyncadd %s167, %s174
          %s176 = smul.addr %s171, 8
          %s177 = sadd.s32 %s172, %s176
          %s178 = smul.addr %s177, 128
          %s179 = scalar_lea.hbm %s1, %s178
          %s180 = sshll.u32 %s170, 4
          %s181 = int_to_ptr.vmem [resolvable:$true] %s180
          %186 = dma.hbm_to_vmem [thread:$0]  %s179, 16384, %s181, %s167, 1024, 512, 32
        $region24: #{tpu_custom_call.1} parent=15 // pred_fallthru
          _
      $region16: #{tpu_custom_call.1} parent=5 // pred_fallthru
        _
      %p187 = scmp.le.s32.totalorder 1, %s17
      %p188 = scmp.lt.s32.totalorder %s17, 5
      %p189 = pnand %p187, %p188
      %p190 = pneg %p189
      // Predicated region
      $region25: #{tpu_custom_call.1} parent=5 // pred_check
        _
      $region26: #{tpu_custom_call.1} parent=5 // pred_check_branch
        %192 = sbr.rel (%p189) target = $region28
      $region27: #{tpu_custom_call.1} parent=5 // pred_region
        %s193 = ssub.s32 %s17, 1
        %s194 = sand.u32 %s51, 1
        %s195 = scalar_lea.sflag [#allocation4], %s194
        %s196 = sand.u32 %s51, 1
        %s197 = smul.addr %s196, 1024
        %s198 = scalar_lea.vmem [#allocation3], %s197
        // Predicated region
        $region29: #{tpu_custom_call.1} parent=27 // pred_check
          %p199 = pneg %p64
        $region30: #{tpu_custom_call.1} parent=27 // pred_check_branch
          %201 = sbr.rel (%p199) target = $region32
        $region31: #{tpu_custom_call.1} parent=27 // pred_region
          %202 = dma.done %s195, 16384
        $region32: #{tpu_custom_call.1} parent=27 // pred_fallthru
          _
        %s203 = sand.u32 %s79, 1
        %s204 = scalar_lea.sflag [#allocation7], %s203
        %s205 = sand.u32 %s79, 1
        %s206 = smul.addr %s205, 1024
        %s207 = scalar_lea.vmem [#allocation6], %s206
        // Predicated region
        $region33: #{tpu_custom_call.1} parent=27 // pred_check
          %p208 = pneg %p92
        $region34: #{tpu_custom_call.1} parent=27 // pred_check_branch
          %210 = sbr.rel (%p208) target = $region36
        $region35: #{tpu_custom_call.1} parent=27 // pred_region
          %211 = dma.done %s204, 16384
        $region36: #{tpu_custom_call.1} parent=27 // pred_fallthru
          _
        %s212 = sand.u32 %s51, 1
        %s213 = scalar_lea.sflag [#allocation4], %s212
        %s214 = sand.u32 %s51, 1
        %s215 = smul.addr %s214, 1024
        %s216 = scalar_lea.vmem [#allocation3], %s215
        %p217 = pneg %p64
        %p218 = pneg %p61
        %s219 = sand.u32 %s79, 1
        %s220 = scalar_lea.sflag [#allocation7], %s219
        %s221 = sand.u32 %s79, 1
        %s222 = smul.addr %s221, 1024
        %s223 = scalar_lea.vmem [#allocation6], %s222
        %p224 = pneg %p92
        %p225 = pneg %p89
        %p226 = pneg %p120
        %p227 = pneg %p117
        %s228 = sand.u32 %s107, 1
        %s229 = scalar_lea.sflag [#allocation5], %s228
        %s230 = sand.u32 %s107, 1
        %s231 = smul.addr %s230, 2048
        %s232 = scalar_lea.vmem [#allocation8], %s231
        %s233 = smul.u32 64, %s27
        %s234 = smul.u32 2, %s29
        %s235 = smul.u32 32, %s29
        %s236 = smul.u32 4, %s28
        %s237 = smul.u32 64, %s27
        %s238 = smul.u32 4, %s28
        %p239 = scmp.eq.s32.totalorder %s29, 0
        // Predicated region
        $region37: #{tpu_custom_call.1} parent=27 // pred_check
          %p240 = pneg %p239
        $region38: #{tpu_custom_call.1} parent=27 // pred_check_branch
          %242 = sbr.rel (%p240) target = $region40
        $region39: #{tpu_custom_call.1} parent=27 // pred_region
          %243 = vst [vmem:[#allocation2] sm:$0xff] 0.0
          %244 = vst [vmem:[#allocation2 + $0x8] sm:$0xff] 0.0
          %245 = vst [vmem:[#allocation2 + $0x10] sm:$0xff] 0.0
          %246 = vst [vmem:[#allocation2 + $0x18] sm:$0xff] 0.0
          %247 = vst [vmem:[#allocation2 + $0x20] sm:$0xff] 0.0
          %248 = vst [vmem:[#allocation2 + $0x28] sm:$0xff] 0.0
          %249 = vst [vmem:[#allocation2 + $0x30] sm:$0xff] 0.0
          %250 = vst [vmem:[#allocation2 + $0x38] sm:$0xff] 0.0
          %251 = vst [vmem:[#allocation2 + $0x40] sm:$0xff] 0.0
          %252 = vst [vmem:[#allocation2 + $0x48] sm:$0xff] 0.0
          %253 = vst [vmem:[#allocation2 + $0x50] sm:$0xff] 0.0
          %254 = vst [vmem:[#allocation2 + $0x58] sm:$0xff] 0.0
          %255 = vst [vmem:[#allocation2 + $0x60] sm:$0xff] 0.0
          %256 = vst [vmem:[#allocation2 + $0x68] sm:$0xff] 0.0
          %257 = vst [vmem:[#allocation2 + $0x70] sm:$0xff] 0.0
          %258 = vst [vmem:[#allocation2 + $0x78] sm:$0xff] 0.0
          %259 = vst [vmem:[#allocation2 + $0x80] sm:$0xff] 0.0
          %260 = vst [vmem:[#allocation2 + $0x88] sm:$0xff] 0.0
          %261 = vst [vmem:[#allocation2 + $0x90] sm:$0xff] 0.0
          %262 = vst [vmem:[#allocation2 + $0x98] sm:$0xff] 0.0
          %263 = vst [vmem:[#allocation2 + $0xa0] sm:$0xff] 0.0
          %264 = vst [vmem:[#allocation2 + $0xa8] sm:$0xff] 0.0
          %265 = vst [vmem:[#allocation2 + $0xb0] sm:$0xff] 0.0
          %266 = vst [vmem:[#allocation2 + $0xb8] sm:$0xff] 0.0
          %267 = vst [vmem:[#allocation2 + $0xc0] sm:$0xff] 0.0
          %268 = vst [vmem:[#allocation2 + $0xc8] sm:$0xff] 0.0
          %269 = vst [vmem:[#allocation2 + $0xd0] sm:$0xff] 0.0
          %270 = vst [vmem:[#allocation2 + $0xd8] sm:$0xff] 0.0
          %271 = vst [vmem:[#allocation2 + $0xe0] sm:$0xff] 0.0
          %272 = vst [vmem:[#allocation2 + $0xe8] sm:$0xff] 0.0
          %273 = vst [vmem:[#allocation2 + $0xf0] sm:$0xff] 0.0
          %274 = vst [vmem:[#allocation2 + $0xf8] sm:$0xff] 0.0
          %275 = vst [vmem:[#allocation2 + $0x100] sm:$0xff] 0.0
          %276 = vst [vmem:[#allocation2 + $0x108] sm:$0xff] 0.0
          %277 = vst [vmem:[#allocation2 + $0x110] sm:$0xff] 0.0
          %278 = vst [vmem:[#allocation2 + $0x118] sm:$0xff] 0.0
          %279 = vst [vmem:[#allocation2 + $0x120] sm:$0xff] 0.0
          %280 = vst [vmem:[#allocation2 + $0x128] sm:$0xff] 0.0
          %281 = vst [vmem:[#allocation2 + $0x130] sm:$0xff] 0.0
          %282 = vst [vmem:[#allocation2 + $0x138] sm:$0xff] 0.0
          %283 = vst [vmem:[#allocation2 + $0x140] sm:$0xff] 0.0
          %284 = vst [vmem:[#allocation2 + $0x148] sm:$0xff] 0.0
          %285 = vst [vmem:[#allocation2 + $0x150] sm:$0xff] 0.0
          %286 = vst [vmem:[#allocation2 + $0x158] sm:$0xff] 0.0
          %287 = vst [vmem:[#allocation2 + $0x160] sm:$0xff] 0.0
          %288 = vst [vmem:[#allocation2 + $0x168] sm:$0xff] 0.0
          %289 = vst [vmem:[#allocation2 + $0x170] sm:$0xff] 0.0
          %290 = vst [vmem:[#allocation2 + $0x178] sm:$0xff] 0.0
          %291 = vst [vmem:[#allocation2 + $0x180] sm:$0xff] 0.0
          %292 = vst [vmem:[#allocation2 + $0x188] sm:$0xff] 0.0
          %293 = vst [vmem:[#allocation2 + $0x190] sm:$0xff] 0.0
          %294 = vst [vmem:[#allocation2 + $0x198] sm:$0xff] 0.0
          %295 = vst [vmem:[#allocation2 + $0x1a0] sm:$0xff] 0.0
          %296 = vst [vmem:[#allocation2 + $0x1a8] sm:$0xff] 0.0
          %297 = vst [vmem:[#allocation2 + $0x1b0] sm:$0xff] 0.0
          %298 = vst [vmem:[#allocation2 + $0x1b8] sm:$0xff] 0.0
          %299 = vst [vmem:[#allocation2 + $0x1c0] sm:$0xff] 0.0
          %300 = vst [vmem:[#allocation2 + $0x1c8] sm:$0xff] 0.0
          %301 = vst [vmem:[#allocation2 + $0x1d0] sm:$0xff] 0.0
          %302 = vst [vmem:[#allocation2 + $0x1d8] sm:$0xff] 0.0
          %303 = vst [vmem:[#allocation2 + $0x1e0] sm:$0xff] 0.0
          %304 = vst [vmem:[#allocation2 + $0x1e8] sm:$0xff] 0.0
          %305 = vst [vmem:[#allocation2 + $0x1f0] sm:$0xff] 0.0
          %306 = vst [vmem:[#allocation2 + $0x1f8] sm:$0xff] 0.0
          %307 = vst [vmem:[#allocation2 + $0x200] sm:$0xff] 0.0
          %308 = vst [vmem:[#allocation2 + $0x208] sm:$0xff] 0.0
          %309 = vst [vmem:[#allocation2 + $0x210] sm:$0xff] 0.0
          %310 = vst [vmem:[#allocation2 + $0x218] sm:$0xff] 0.0
          %311 = vst [vmem:[#allocation2 + $0x220] sm:$0xff] 0.0
          %312 = vst [vmem:[#allocation2 + $0x228] sm:$0xff] 0.0
          %313 = vst [vmem:[#allocation2 + $0x230] sm:$0xff] 0.0
          %314 = vst [vmem:[#allocation2 + $0x238] sm:$0xff] 0.0
          %315 = vst [vmem:[#allocation2 + $0x240] sm:$0xff] 0.0
          %316 = vst [vmem:[#allocation2 + $0x248] sm:$0xff] 0.0
          %317 = vst [vmem:[#allocation2 + $0x250] sm:$0xff] 0.0
          %318 = vst [vmem:[#allocation2 + $0x258] sm:$0xff] 0.0
          %319 = vst [vmem:[#allocation2 + $0x260] sm:$0xff] 0.0
          %320 = vst [vmem:[#allocation2 + $0x268] sm:$0xff] 0.0
          %321 = vst [vmem:[#allocation2 + $0x270] sm:$0xff] 0.0
          %322 = vst [vmem:[#allocation2 + $0x278] sm:$0xff] 0.0
          %323 = vst [vmem:[#allocation2 + $0x280] sm:$0xff] 0.0
          %324 = vst [vmem:[#allocation2 + $0x288] sm:$0xff] 0.0
          %325 = vst [vmem:[#allocation2 + $0x290] sm:$0xff] 0.0
          %326 = vst [vmem:[#allocation2 + $0x298] sm:$0xff] 0.0
          %327 = vst [vmem:[#allocation2 + $0x2a0] sm:$0xff] 0.0
          %328 = vst [vmem:[#allocation2 + $0x2a8] sm:$0xff] 0.0
          %329 = vst [vmem:[#allocation2 + $0x2b0] sm:$0xff] 0.0
          %330 = vst [vmem:[#allocation2 + $0x2b8] sm:$0xff] 0.0
          %331 = vst [vmem:[#allocation2 + $0x2c0] sm:$0xff] 0.0
          %332 = vst [vmem:[#allocation2 + $0x2c8] sm:$0xff] 0.0
          %333 = vst [vmem:[#allocation2 + $0x2d0] sm:$0xff] 0.0
          %334 = vst [vmem:[#allocation2 + $0x2d8] sm:$0xff] 0.0
          %335 = vst [vmem:[#allocation2 + $0x2e0] sm:$0xff] 0.0
          %336 = vst [vmem:[#allocation2 + $0x2e8] sm:$0xff] 0.0
          %337 = vst [vmem:[#allocation2 + $0x2f0] sm:$0xff] 0.0
          %338 = vst [vmem:[#allocation2 + $0x2f8] sm:$0xff] 0.0
          %339 = vst [vmem:[#allocation2 + $0x300] sm:$0xff] 0.0
          %340 = vst [vmem:[#allocation2 + $0x308] sm:$0xff] 0.0
          %341 = vst [vmem:[#allocation2 + $0x310] sm:$0xff] 0.0
          %342 = vst [vmem:[#allocation2 + $0x318] sm:$0xff] 0.0
          %343 = vst [vmem:[#allocation2 + $0x320] sm:$0xff] 0.0
          %344 = vst [vmem:[#allocation2 + $0x328] sm:$0xff] 0.0
          %345 = vst [vmem:[#allocation2 + $0x330] sm:$0xff] 0.0
          %346 = vst [vmem:[#allocation2 + $0x338] sm:$0xff] 0.0
          %347 = vst [vmem:[#allocation2 + $0x340] sm:$0xff] 0.0
          %348 = vst [vmem:[#allocation2 + $0x348] sm:$0xff] 0.0
          %349 = vst [vmem:[#allocation2 + $0x350] sm:$0xff] 0.0
          %350 = vst [vmem:[#allocation2 + $0x358] sm:$0xff] 0.0
          %351 = vst [vmem:[#allocation2 + $0x360] sm:$0xff] 0.0
          %352 = vst [vmem:[#allocation2 + $0x368] sm:$0xff] 0.0
          %353 = vst [vmem:[#allocation2 + $0x370] sm:$0xff] 0.0
          %354 = vst [vmem:[#allocation2 + $0x378] sm:$0xff] 0.0
          %355 = vst [vmem:[#allocation2 + $0x380] sm:$0xff] 0.0
          %356 = vst [vmem:[#allocation2 + $0x388] sm:$0xff] 0.0
          %357 = vst [vmem:[#allocation2 + $0x390] sm:$0xff] 0.0
          %358 = vst [vmem:[#allocation2 + $0x398] sm:$0xff] 0.0
          %359 = vst [vmem:[#allocation2 + $0x3a0] sm:$0xff] 0.0
          %360 = vst [vmem:[#allocation2 + $0x3a8] sm:$0xff] 0.0
          %361 = vst [vmem:[#allocation2 + $0x3b0] sm:$0xff] 0.0
          %362 = vst [vmem:[#allocation2 + $0x3b8] sm:$0xff] 0.0
          %363 = vst [vmem:[#allocation2 + $0x3c0] sm:$0xff] 0.0
          %364 = vst [vmem:[#allocation2 + $0x3c8] sm:$0xff] 0.0
          %365 = vst [vmem:[#allocation2 + $0x3d0] sm:$0xff] 0.0
          %366 = vst [vmem:[#allocation2 + $0x3d8] sm:$0xff] 0.0
          %367 = vst [vmem:[#allocation2 + $0x3e0] sm:$0xff] 0.0
          %368 = vst [vmem:[#allocation2 + $0x3e8] sm:$0xff] 0.0
          %369 = vst [vmem:[#allocation2 + $0x3f0] sm:$0xff] 0.0
          %370 = vst [vmem:[#allocation2 + $0x3f8] sm:$0xff] 0.0
          %371 = vst [vmem:[#allocation2 + $0x400] sm:$0xff] 0.0
          %372 = vst [vmem:[#allocation2 + $0x408] sm:$0xff] 0.0
          %373 = vst [vmem:[#allocation2 + $0x410] sm:$0xff] 0.0
          %374 = vst [vmem:[#allocation2 + $0x418] sm:$0xff] 0.0
          %375 = vst [vmem:[#allocation2 + $0x420] sm:$0xff] 0.0
          %376 = vst [vmem:[#allocation2 + $0x428] sm:$0xff] 0.0
          %377 = vst [vmem:[#allocation2 + $0x430] sm:$0xff] 0.0
          %378 = vst [vmem:[#allocation2 + $0x438] sm:$0xff] 0.0
          %379 = vst [vmem:[#allocation2 + $0x440] sm:$0xff] 0.0
          %380 = vst [vmem:[#allocation2 + $0x448] sm:$0xff] 0.0
          %381 = vst [vmem:[#allocation2 + $0x450] sm:$0xff] 0.0
          %382 = vst [vmem:[#allocation2 + $0x458] sm:$0xff] 0.0
          %383 = vst [vmem:[#allocation2 + $0x460] sm:$0xff] 0.0
          %384 = vst [vmem:[#allocation2 + $0x468] sm:$0xff] 0.0
          %385 = vst [vmem:[#allocation2 + $0x470] sm:$0xff] 0.0
          %386 = vst [vmem:[#allocation2 + $0x478] sm:$0xff] 0.0
          %387 = vst [vmem:[#allocation2 + $0x480] sm:$0xff] 0.0
          %388 = vst [vmem:[#allocation2 + $0x488] sm:$0xff] 0.0
          %389 = vst [vmem:[#allocation2 + $0x490] sm:$0xff] 0.0
          %390 = vst [vmem:[#allocation2 + $0x498] sm:$0xff] 0.0
          %391 = vst [vmem:[#allocation2 + $0x4a0] sm:$0xff] 0.0
          %392 = vst [vmem:[#allocation2 + $0x4a8] sm:$0xff] 0.0
          %393 = vst [vmem:[#allocation2 + $0x4b0] sm:$0xff] 0.0
          %394 = vst [vmem:[#allocation2 + $0x4b8] sm:$0xff] 0.0
          %395 = vst [vmem:[#allocation2 + $0x4c0] sm:$0xff] 0.0
          %396 = vst [vmem:[#allocation2 + $0x4c8] sm:$0xff] 0.0
          %397 = vst [vmem:[#allocation2 + $0x4d0] sm:$0xff] 0.0
          %398 = vst [vmem:[#allocation2 + $0x4d8] sm:$0xff] 0.0
          %399 = vst [vmem:[#allocation2 + $0x4e0] sm:$0xff] 0.0
          %400 = vst [vmem:[#allocation2 + $0x4e8] sm:$0xff] 0.0
          %401 = vst [vmem:[#allocation2 + $0x4f0] sm:$0xff] 0.0
          %402 = vst [vmem:[#allocation2 + $0x4f8] sm:$0xff] 0.0
          %403 = vst [vmem:[#allocation2 + $0x500] sm:$0xff] 0.0
          %404 = vst [vmem:[#allocation2 + $0x508] sm:$0xff] 0.0
          %405 = vst [vmem:[#allocation2 + $0x510] sm:$0xff] 0.0
          %406 = vst [vmem:[#allocation2 + $0x518] sm:$0xff] 0.0
          %407 = vst [vmem:[#allocation2 + $0x520] sm:$0xff] 0.0
          %408 = vst [vmem:[#allocation2 + $0x528] sm:$0xff] 0.0
          %409 = vst [vmem:[#allocation2 + $0x530] sm:$0xff] 0.0
          %410 = vst [vmem:[#allocation2 + $0x538] sm:$0xff] 0.0
          %411 = vst [vmem:[#allocation2 + $0x540] sm:$0xff] 0.0
          %412 = vst [vmem:[#allocation2 + $0x548] sm:$0xff] 0.0
          %413 = vst [vmem:[#allocation2 + $0x550] sm:$0xff] 0.0
          %414 = vst [vmem:[#allocation2 + $0x558] sm:$0xff] 0.0
          %415 = vst [vmem:[#allocation2 + $0x560] sm:$0xff] 0.0
          %416 = vst [vmem:[#allocation2 + $0x568] sm:$0xff] 0.0
          %417 = vst [vmem:[#allocation2 + $0x570] sm:$0xff] 0.0
          %418 = vst [vmem:[#allocation2 + $0x578] sm:$0xff] 0.0
          %419 = vst [vmem:[#allocation2 + $0x580] sm:$0xff] 0.0
          %420 = vst [vmem:[#allocation2 + $0x588] sm:$0xff] 0.0
          %421 = vst [vmem:[#allocation2 + $0x590] sm:$0xff] 0.0
          %422 = vst [vmem:[#allocation2 + $0x598] sm:$0xff] 0.0
          %423 = vst [vmem:[#allocation2 + $0x5a0] sm:$0xff] 0.0
          %424 = vst [vmem:[#allocation2 + $0x5a8] sm:$0xff] 0.0
          %425 = vst [vmem:[#allocation2 + $0x5b0] sm:$0xff] 0.0
          %426 = vst [vmem:[#allocation2 + $0x5b8] sm:$0xff] 0.0
          %427 = vst [vmem:[#allocation2 + $0x5c0] sm:$0xff] 0.0
          %428 = vst [vmem:[#allocation2 + $0x5c8] sm:$0xff] 0.0
          %429 = vst [vmem:[#allocation2 + $0x5d0] sm:$0xff] 0.0
          %430 = vst [vmem:[#allocation2 + $0x5d8] sm:$0xff] 0.0
          %431 = vst [vmem:[#allocation2 + $0x5e0] sm:$0xff] 0.0
          %432 = vst [vmem:[#allocation2 + $0x5e8] sm:$0xff] 0.0
          %433 = vst [vmem:[#allocation2 + $0x5f0] sm:$0xff] 0.0
          %434 = vst [vmem:[#allocation2 + $0x5f8] sm:$0xff] 0.0
          %435 = vst [vmem:[#allocation2 + $0x600] sm:$0xff] 0.0
          %436 = vst [vmem:[#allocation2 + $0x608] sm:$0xff] 0.0
          %437 = vst [vmem:[#allocation2 + $0x610] sm:$0xff] 0.0
          %438 = vst [vmem:[#allocation2 + $0x618] sm:$0xff] 0.0
          %439 = vst [vmem:[#allocation2 + $0x620] sm:$0xff] 0.0
          %440 = vst [vmem:[#allocation2 + $0x628] sm:$0xff] 0.0
          %441 = vst [vmem:[#allocation2 + $0x630] sm:$0xff] 0.0
          %442 = vst [vmem:[#allocation2 + $0x638] sm:$0xff] 0.0
          %443 = vst [vmem:[#allocation2 + $0x640] sm:$0xff] 0.0
          %444 = vst [vmem:[#allocation2 + $0x648] sm:$0xff] 0.0
          %445 = vst [vmem:[#allocation2 + $0x650] sm:$0xff] 0.0
          %446 = vst [vmem:[#allocation2 + $0x658] sm:$0xff] 0.0
          %447 = vst [vmem:[#allocation2 + $0x660] sm:$0xff] 0.0
          %448 = vst [vmem:[#allocation2 + $0x668] sm:$0xff] 0.0
          %449 = vst [vmem:[#allocation2 + $0x670] sm:$0xff] 0.0
          %450 = vst [vmem:[#allocation2 + $0x678] sm:$0xff] 0.0
          %451 = vst [vmem:[#allocation2 + $0x680] sm:$0xff] 0.0
          %452 = vst [vmem:[#allocation2 + $0x688] sm:$0xff] 0.0
          %453 = vst [vmem:[#allocation2 + $0x690] sm:$0xff] 0.0
          %454 = vst [vmem:[#allocation2 + $0x698] sm:$0xff] 0.0
          %455 = vst [vmem:[#allocation2 + $0x6a0] sm:$0xff] 0.0
          %456 = vst [vmem:[#allocation2 + $0x6a8] sm:$0xff] 0.0
          %457 = vst [vmem:[#allocation2 + $0x6b0] sm:$0xff] 0.0
          %458 = vst [vmem:[#allocation2 + $0x6b8] sm:$0xff] 0.0
          %459 = vst [vmem:[#allocation2 + $0x6c0] sm:$0xff] 0.0
          %460 = vst [vmem:[#allocation2 + $0x6c8] sm:$0xff] 0.0
          %461 = vst [vmem:[#allocation2 + $0x6d0] sm:$0xff] 0.0
          %462 = vst [vmem:[#allocation2 + $0x6d8] sm:$0xff] 0.0
          %463 = vst [vmem:[#allocation2 + $0x6e0] sm:$0xff] 0.0
          %464 = vst [vmem:[#allocation2 + $0x6e8] sm:$0xff] 0.0
          %465 = vst [vmem:[#allocation2 + $0x6f0] sm:$0xff] 0.0
          %466 = vst [vmem:[#allocation2 + $0x6f8] sm:$0xff] 0.0
          %467 = vst [vmem:[#allocation2 + $0x700] sm:$0xff] 0.0
          %468 = vst [vmem:[#allocation2 + $0x708] sm:$0xff] 0.0
          %469 = vst [vmem:[#allocation2 + $0x710] sm:$0xff] 0.0
          %470 = vst [vmem:[#allocation2 + $0x718] sm:$0xff] 0.0
          %471 = vst [vmem:[#allocation2 + $0x720] sm:$0xff] 0.0
          %472 = vst [vmem:[#allocation2 + $0x728] sm:$0xff] 0.0
          %473 = vst [vmem:[#allocation2 + $0x730] sm:$0xff] 0.0
          %474 = vst [vmem:[#allocation2 + $0x738] sm:$0xff] 0.0
          %475 = vst [vmem:[#allocation2 + $0x740] sm:$0xff] 0.0
          %476 = vst [vmem:[#allocation2 + $0x748] sm:$0xff] 0.0
          %477 = vst [vmem:[#allocation2 + $0x750] sm:$0xff] 0.0
          %478 = vst [vmem:[#allocation2 + $0x758] sm:$0xff] 0.0
          %479 = vst [vmem:[#allocation2 + $0x760] sm:$0xff] 0.0
          %480 = vst [vmem:[#allocation2 + $0x768] sm:$0xff] 0.0
          %481 = vst [vmem:[#allocation2 + $0x770] sm:$0xff] 0.0
          %482 = vst [vmem:[#allocation2 + $0x778] sm:$0xff] 0.0
          %483 = vst [vmem:[#allocation2 + $0x780] sm:$0xff] 0.0
          %484 = vst [vmem:[#allocation2 + $0x788] sm:$0xff] 0.0
          %485 = vst [vmem:[#allocation2 + $0x790] sm:$0xff] 0.0
          %486 = vst [vmem:[#allocation2 + $0x798] sm:$0xff] 0.0
          %487 = vst [vmem:[#allocation2 + $0x7a0] sm:$0xff] 0.0
          %488 = vst [vmem:[#allocation2 + $0x7a8] sm:$0xff] 0.0
          %489 = vst [vmem:[#allocation2 + $0x7b0] sm:$0xff] 0.0
          %490 = vst [vmem:[#allocation2 + $0x7b8] sm:$0xff] 0.0
          %491 = vst [vmem:[#allocation2 + $0x7c0] sm:$0xff] 0.0
          %492 = vst [vmem:[#allocation2 + $0x7c8] sm:$0xff] 0.0
          %493 = vst [vmem:[#allocation2 + $0x7d0] sm:$0xff] 0.0
          %494 = vst [vmem:[#allocation2 + $0x7d8] sm:$0xff] 0.0
          %495 = vst [vmem:[#allocation2 + $0x7e0] sm:$0xff] 0.0
          %496 = vst [vmem:[#allocation2 + $0x7e8] sm:$0xff] 0.0
          %497 = vst [vmem:[#allocation2 + $0x7f0] sm:$0xff] 0.0
          %498 = vst [vmem:[#allocation2 + $0x7f8] sm:$0xff] 0.0
        $region40: #{tpu_custom_call.1} parent=27 // pred_fallthru
          _
        %v499 = vld [vmem:[#allocation2] sm:$0xff]
        %v500 = vld [vmem:[#allocation2 + $0x8] sm:$0xff]
        %v501 = vld [vmem:[#allocation2 + $0x10] sm:$0xff]
        %v502 = vld [vmem:[#allocation2 + $0x18] sm:$0xff]
        %v503 = vld [vmem:[#allocation2 + $0x20] sm:$0xff]
        %v504 = vld [vmem:[#allocation2 + $0x28] sm:$0xff]
        %v505 = vld [vmem:[#allocation2 + $0x30] sm:$0xff]
        %v506 = vld [vmem:[#allocation2 + $0x38] sm:$0xff]
        %v507 = vld [vmem:[#allocation2 + $0x40] sm:$0xff]
        %v508 = vld [vmem:[#allocation2 + $0x48] sm:$0xff]
        %v509 = vld [vmem:[#allocation2 + $0x50] sm:$0xff]
        %v510 = vld [vmem:[#allocation2 + $0x58] sm:$0xff]
        %v511 = vld [vmem:[#allocation2 + $0x60] sm:$0xff]
        %v512 = vld [vmem:[#allocation2 + $0x68] sm:$0xff]
        %v513 = vld [vmem:[#allocation2 + $0x70] sm:$0xff]
        %v514 = vld [vmem:[#allocation2 + $0x78] sm:$0xff]
        %v515 = vld [vmem:[#allocation2 + $0x80] sm:$0xff]
        %v516 = vld [vmem:[#allocation2 + $0x88] sm:$0xff]
        %v517 = vld [vmem:[#allocation2 + $0x90] sm:$0xff]
        %v518 = vld [vmem:[#allocation2 + $0x98] sm:$0xff]
        %v519 = vld [vmem:[#allocation2 + $0xa0] sm:$0xff]
        %v520 = vld [vmem:[#allocation2 + $0xa8] sm:$0xff]
        %v521 = vld [vmem:[#allocation2 + $0xb0] sm:$0xff]
        %v522 = vld [vmem:[#allocation2 + $0xb8] sm:$0xff]
        %v523 = vld [vmem:[#allocation2 + $0xc0] sm:$0xff]
        %v524 = vld [vmem:[#allocation2 + $0xc8] sm:$0xff]
        %v525 = vld [vmem:[#allocation2 + $0xd0] sm:$0xff]
        %v526 = vld [vmem:[#allocation2 + $0xd8] sm:$0xff]
        %v527 = vld [vmem:[#allocation2 + $0xe0] sm:$0xff]
        %v528 = vld [vmem:[#allocation2 + $0xe8] sm:$0xff]
        %v529 = vld [vmem:[#allocation2 + $0xf0] sm:$0xff]
        %v530 = vld [vmem:[#allocation2 + $0xf8] sm:$0xff]
        %v531 = vld [vmem:[#allocation2 + $0x100] sm:$0xff]
        %v532 = vld [vmem:[#allocation2 + $0x108] sm:$0xff]
        %v533 = vld [vmem:[#allocation2 + $0x110] sm:$0xff]
        %v534 = vld [vmem:[#allocation2 + $0x118] sm:$0xff]
        %v535 = vld [vmem:[#allocation2 + $0x120] sm:$0xff]
        %v536 = vld [vmem:[#allocation2 + $0x128] sm:$0xff]
        %v537 = vld [vmem:[#allocation2 + $0x130] sm:$0xff]
        %v538 = vld [vmem:[#allocation2 + $0x138] sm:$0xff]
        %v539 = vld [vmem:[#allocation2 + $0x140] sm:$0xff]
        %v540 = vld [vmem:[#allocation2 + $0x148] sm:$0xff]
        %v541 = vld [vmem:[#allocation2 + $0x150] sm:$0xff]
        %v542 = vld [vmem:[#allocation2 + $0x158] sm:$0xff]
        %v543 = vld [vmem:[#allocation2 + $0x160] sm:$0xff]
        %v544 = vld [vmem:[#allocation2 + $0x168] sm:$0xff]
        %v545 = vld [vmem:[#allocation2 + $0x170] sm:$0xff]
        %v546 = vld [vmem:[#allocation2 + $0x178] sm:$0xff]
        %v547 = vld [vmem:[#allocation2 + $0x180] sm:$0xff]
        %v548 = vld [vmem:[#allocation2 + $0x188] sm:$0xff]
        %v549 = vld [vmem:[#allocation2 + $0x190] sm:$0xff]
        %v550 = vld [vmem:[#allocation2 + $0x198] sm:$0xff]
        %v551 = vld [vmem:[#allocation2 + $0x1a0] sm:$0xff]
        %v552 = vld [vmem:[#allocation2 + $0x1a8] sm:$0xff]
        %v553 = vld [vmem:[#allocation2 + $0x1b0] sm:$0xff]
        %v554 = vld [vmem:[#allocation2 + $0x1b8] sm:$0xff]
        %v555 = vld [vmem:[#allocation2 + $0x1c0] sm:$0xff]
        %v556 = vld [vmem:[#allocation2 + $0x1c8] sm:$0xff]
        %v557 = vld [vmem:[#allocation2 + $0x1d0] sm:$0xff]
        %v558 = vld [vmem:[#allocation2 + $0x1d8] sm:$0xff]
        %v559 = vld [vmem:[#allocation2 + $0x1e0] sm:$0xff]
        %v560 = vld [vmem:[#allocation2 + $0x1e8] sm:$0xff]
        %v561 = vld [vmem:[#allocation2 + $0x1f0] sm:$0xff]
        %v562 = vld [vmem:[#allocation2 + $0x1f8] sm:$0xff]
        %v563 = vld [vmem:[#allocation2 + $0x200] sm:$0xff]
        %v564 = vld [vmem:[#allocation2 + $0x208] sm:$0xff]
        %v565 = vld [vmem:[#allocation2 + $0x210] sm:$0xff]
        %v566 = vld [vmem:[#allocation2 + $0x218] sm:$0xff]
        %v567 = vld [vmem:[#allocation2 + $0x220] sm:$0xff]
        %v568 = vld [vmem:[#allocation2 + $0x228] sm:$0xff]
        %v569 = vld [vmem:[#allocation2 + $0x230] sm:$0xff]
        %v570 = vld [vmem:[#allocation2 + $0x238] sm:$0xff]
        %v571 = vld [vmem:[#allocation2 + $0x240] sm:$0xff]
        %v572 = vld [vmem:[#allocation2 + $0x248] sm:$0xff]
        %v573 = vld [vmem:[#allocation2 + $0x250] sm:$0xff]
        %v574 = vld [vmem:[#allocation2 + $0x258] sm:$0xff]
        %v575 = vld [vmem:[#allocation2 + $0x260] sm:$0xff]
        %v576 = vld [vmem:[#allocation2 + $0x268] sm:$0xff]
        %v577 = vld [vmem:[#allocation2 + $0x270] sm:$0xff]
        %v578 = vld [vmem:[#allocation2 + $0x278] sm:$0xff]
        %v579 = vld [vmem:[#allocation2 + $0x280] sm:$0xff]
        %v580 = vld [vmem:[#allocation2 + $0x288] sm:$0xff]
        %v581 = vld [vmem:[#allocation2 + $0x290] sm:$0xff]
        %v582 = vld [vmem:[#allocation2 + $0x298] sm:$0xff]
        %v583 = vld [vmem:[#allocation2 + $0x2a0] sm:$0xff]
        %v584 = vld [vmem:[#allocation2 + $0x2a8] sm:$0xff]
        %v585 = vld [vmem:[#allocation2 + $0x2b0] sm:$0xff]
        %v586 = vld [vmem:[#allocation2 + $0x2b8] sm:$0xff]
        %v587 = vld [vmem:[#allocation2 + $0x2c0] sm:$0xff]
        %v588 = vld [vmem:[#allocation2 + $0x2c8] sm:$0xff]
        %v589 = vld [vmem:[#allocation2 + $0x2d0] sm:$0xff]
        %v590 = vld [vmem:[#allocation2 + $0x2d8] sm:$0xff]
        %v591 = vld [vmem:[#allocation2 + $0x2e0] sm:$0xff]
        %v592 = vld [vmem:[#allocation2 + $0x2e8] sm:$0xff]
        %v593 = vld [vmem:[#allocation2 + $0x2f0] sm:$0xff]
        %v594 = vld [vmem:[#allocation2 + $0x2f8] sm:$0xff]
        %v595 = vld [vmem:[#allocation2 + $0x300] sm:$0xff]
        %v596 = vld [vmem:[#allocation2 + $0x308] sm:$0xff]
        %v597 = vld [vmem:[#allocation2 + $0x310] sm:$0xff]
        %v598 = vld [vmem:[#allocation2 + $0x318] sm:$0xff]
        %v599 = vld [vmem:[#allocation2 + $0x320] sm:$0xff]
        %v600 = vld [vmem:[#allocation2 + $0x328] sm:$0xff]
        %v601 = vld [vmem:[#allocation2 + $0x330] sm:$0xff]
        %v602 = vld [vmem:[#allocation2 + $0x338] sm:$0xff]
        %v603 = vld [vmem:[#allocation2 + $0x340] sm:$0xff]
        %v604 = vld [vmem:[#allocation2 + $0x348] sm:$0xff]
        %v605 = vld [vmem:[#allocation2 + $0x350] sm:$0xff]
        %v606 = vld [vmem:[#allocation2 + $0x358] sm:$0xff]
        %v607 = vld [vmem:[#allocation2 + $0x360] sm:$0xff]
        %v608 = vld [vmem:[#allocation2 + $0x368] sm:$0xff]
        %v609 = vld [vmem:[#allocation2 + $0x370] sm:$0xff]
        %v610 = vld [vmem:[#allocation2 + $0x378] sm:$0xff]
        %v611 = vld [vmem:[#allocation2 + $0x380] sm:$0xff]
        %v612 = vld [vmem:[#allocation2 + $0x388] sm:$0xff]
        %v613 = vld [vmem:[#allocation2 + $0x390] sm:$0xff]
        %v614 = vld [vmem:[#allocation2 + $0x398] sm:$0xff]
        %v615 = vld [vmem:[#allocation2 + $0x3a0] sm:$0xff]
        %v616 = vld [vmem:[#allocation2 + $0x3a8] sm:$0xff]
        %v617 = vld [vmem:[#allocation2 + $0x3b0] sm:$0xff]
        %v618 = vld [vmem:[#allocation2 + $0x3b8] sm:$0xff]
        %v619 = vld [vmem:[#allocation2 + $0x3c0] sm:$0xff]
        %v620 = vld [vmem:[#allocation2 + $0x3c8] sm:$0xff]
        %v621 = vld [vmem:[#allocation2 + $0x3d0] sm:$0xff]
        %v622 = vld [vmem:[#allocation2 + $0x3d8] sm:$0xff]
        %v623 = vld [vmem:[#allocation2 + $0x3e0] sm:$0xff]
        %v624 = vld [vmem:[#allocation2 + $0x3e8] sm:$0xff]
        %v625 = vld [vmem:[#allocation2 + $0x3f0] sm:$0xff]
        %v626 = vld [vmem:[#allocation2 + $0x3f8] sm:$0xff]
        %v627 = vld [vmem:[#allocation2 + $0x400] sm:$0xff]
        %v628 = vld [vmem:[#allocation2 + $0x408] sm:$0xff]
        %v629 = vld [vmem:[#allocation2 + $0x410] sm:$0xff]
        %v630 = vld [vmem:[#allocation2 + $0x418] sm:$0xff]
        %v631 = vld [vmem:[#allocation2 + $0x420] sm:$0xff]
        %v632 = vld [vmem:[#allocation2 + $0x428] sm:$0xff]
        %v633 = vld [vmem:[#allocation2 + $0x430] sm:$0xff]
        %v634 = vld [vmem:[#allocation2 + $0x438] sm:$0xff]
        %v635 = vld [vmem:[#allocation2 + $0x440] sm:$0xff]
        %v636 = vld [vmem:[#allocation2 + $0x448] sm:$0xff]
        %v637 = vld [vmem:[#allocation2 + $0x450] sm:$0xff]
        %v638 = vld [vmem:[#allocation2 + $0x458] sm:$0xff]
        %v639 = vld [vmem:[#allocation2 + $0x460] sm:$0xff]
        %v640 = vld [vmem:[#allocation2 + $0x468] sm:$0xff]
        %v641 = vld [vmem:[#allocation2 + $0x470] sm:$0xff]
        %v642 = vld [vmem:[#allocation2 + $0x478] sm:$0xff]
        %v643 = vld [vmem:[#allocation2 + $0x480] sm:$0xff]
        %v644 = vld [vmem:[#allocation2 + $0x488] sm:$0xff]
        %v645 = vld [vmem:[#allocation2 + $0x490] sm:$0xff]
        %v646 = vld [vmem:[#allocation2 + $0x498] sm:$0xff]
        %v647 = vld [vmem:[#allocation2 + $0x4a0] sm:$0xff]
        %v648 = vld [vmem:[#allocation2 + $0x4a8] sm:$0xff]
        %v649 = vld [vmem:[#allocation2 + $0x4b0] sm:$0xff]
        %v650 = vld [vmem:[#allocation2 + $0x4b8] sm:$0xff]
        %v651 = vld [vmem:[#allocation2 + $0x4c0] sm:$0xff]
        %v652 = vld [vmem:[#allocation2 + $0x4c8] sm:$0xff]
        %v653 = vld [vmem:[#allocation2 + $0x4d0] sm:$0xff]
        %v654 = vld [vmem:[#allocation2 + $0x4d8] sm:$0xff]
        %v655 = vld [vmem:[#allocation2 + $0x4e0] sm:$0xff]
        %v656 = vld [vmem:[#allocation2 + $0x4e8] sm:$0xff]
        %v657 = vld [vmem:[#allocation2 + $0x4f0] sm:$0xff]
        %v658 = vld [vmem:[#allocation2 + $0x4f8] sm:$0xff]
        %v659 = vld [vmem:[#allocation2 + $0x500] sm:$0xff]
        %v660 = vld [vmem:[#allocation2 + $0x508] sm:$0xff]
        %v661 = vld [vmem:[#allocation2 + $0x510] sm:$0xff]
        %v662 = vld [vmem:[#allocation2 + $0x518] sm:$0xff]
        %v663 = vld [vmem:[#allocation2 + $0x520] sm:$0xff]
        %v664 = vld [vmem:[#allocation2 + $0x528] sm:$0xff]
        %v665 = vld [vmem:[#allocation2 + $0x530] sm:$0xff]
        %v666 = vld [vmem:[#allocation2 + $0x538] sm:$0xff]
        %v667 = vld [vmem:[#allocation2 + $0x540] sm:$0xff]
        %v668 = vld [vmem:[#allocation2 + $0x548] sm:$0xff]
        %v669 = vld [vmem:[#allocation2 + $0x550] sm:$0xff]
        %v670 = vld [vmem:[#allocation2 + $0x558] sm:$0xff]
        %v671 = vld [vmem:[#allocation2 + $0x560] sm:$0xff]
        %v672 = vld [vmem:[#allocation2 + $0x568] sm:$0xff]
        %v673 = vld [vmem:[#allocation2 + $0x570] sm:$0xff]
        %v674 = vld [vmem:[#allocation2 + $0x578] sm:$0xff]
        %v675 = vld [vmem:[#allocation2 + $0x580] sm:$0xff]
        %v676 = vld [vmem:[#allocation2 + $0x588] sm:$0xff]
        %v677 = vld [vmem:[#allocation2 + $0x590] sm:$0xff]
        %v678 = vld [vmem:[#allocation2 + $0x598] sm:$0xff]
        %v679 = vld [vmem:[#allocation2 + $0x5a0] sm:$0xff]
        %v680 = vld [vmem:[#allocation2 + $0x5a8] sm:$0xff]
        %v681 = vld [vmem:[#allocation2 + $0x5b0] sm:$0xff]
        %v682 = vld [vmem:[#allocation2 + $0x5b8] sm:$0xff]
        %v683 = vld [vmem:[#allocation2 + $0x5c0] sm:$0xff]
        %v684 = vld [vmem:[#allocation2 + $0x5c8] sm:$0xff]
        %v685 = vld [vmem:[#allocation2 + $0x5d0] sm:$0xff]
        %v686 = vld [vmem:[#allocation2 + $0x5d8] sm:$0xff]
        %v687 = vld [vmem:[#allocation2 + $0x5e0] sm:$0xff]
        %v688 = vld [vmem:[#allocation2 + $0x5e8] sm:$0xff]
        %v689 = vld [vmem:[#allocation2 + $0x5f0] sm:$0xff]
        %v690 = vld [vmem:[#allocation2 + $0x5f8] sm:$0xff]
        %v691 = vld [vmem:[#allocation2 + $0x600] sm:$0xff]
        %v692 = vld [vmem:[#allocation2 + $0x608] sm:$0xff]
        %v693 = vld [vmem:[#allocation2 + $0x610] sm:$0xff]
        %v694 = vld [vmem:[#allocation2 + $0x618] sm:$0xff]
        %v695 = vld [vmem:[#allocation2 + $0x620] sm:$0xff]
        %v696 = vld [vmem:[#allocation2 + $0x628] sm:$0xff]
        %v697 = vld [vmem:[#allocation2 + $0x630] sm:$0xff]
        %v698 = vld [vmem:[#allocation2 + $0x638] sm:$0xff]
        %v699 = vld [vmem:[#allocation2 + $0x640] sm:$0xff]
        %v700 = vld [vmem:[#allocation2 + $0x648] sm:$0xff]
        %v701 = vld [vmem:[#allocation2 + $0x650] sm:$0xff]
        %v702 = vld [vmem:[#allocation2 + $0x658] sm:$0xff]
        %v703 = vld [vmem:[#allocation2 + $0x660] sm:$0xff]
        %v704 = vld [vmem:[#allocation2 + $0x668] sm:$0xff]
        %v705 = vld [vmem:[#allocation2 + $0x670] sm:$0xff]
        %v706 = vld [vmem:[#allocation2 + $0x678] sm:$0xff]
        %v707 = vld [vmem:[#allocation2 + $0x680] sm:$0xff]
        %v708 = vld [vmem:[#allocation2 + $0x688] sm:$0xff]
        %v709 = vld [vmem:[#allocation2 + $0x690] sm:$0xff]
        %v710 = vld [vmem:[#allocation2 + $0x698] sm:$0xff]
        %v711 = vld [vmem:[#allocation2 + $0x6a0] sm:$0xff]
        %v712 = vld [vmem:[#allocation2 + $0x6a8] sm:$0xff]
        %v713 = vld [vmem:[#allocation2 + $0x6b0] sm:$0xff]
        %v714 = vld [vmem:[#allocation2 + $0x6b8] sm:$0xff]
        %v715 = vld [vmem:[#allocation2 + $0x6c0] sm:$0xff]
        %v716 = vld [vmem:[#allocation2 + $0x6c8] sm:$0xff]
        %v717 = vld [vmem:[#allocation2 + $0x6d0] sm:$0xff]
        %v718 = vld [vmem:[#allocation2 + $0x6d8] sm:$0xff]
        %v719 = vld [vmem:[#allocation2 + $0x6e0] sm:$0xff]
        %v720 = vld [vmem:[#allocation2 + $0x6e8] sm:$0xff]
        %v721 = vld [vmem:[#allocation2 + $0x6f0] sm:$0xff]
        %v722 = vld [vmem:[#allocation2 + $0x6f8] sm:$0xff]
        %v723 = vld [vmem:[#allocation2 + $0x700] sm:$0xff]
        %v724 = vld [vmem:[#allocation2 + $0x708] sm:$0xff]
        %v725 = vld [vmem:[#allocation2 + $0x710] sm:$0xff]
        %v726 = vld [vmem:[#allocation2 + $0x718] sm:$0xff]
        %v727 = vld [vmem:[#allocation2 + $0x720] sm:$0xff]
        %v728 = vld [vmem:[#allocation2 + $0x728] sm:$0xff]
        %v729 = vld [vmem:[#allocation2 + $0x730] sm:$0xff]
        %v730 = vld [vmem:[#allocation2 + $0x738] sm:$0xff]
        %v731 = vld [vmem:[#allocation2 + $0x740] sm:$0xff]
        %v732 = vld [vmem:[#allocation2 + $0x748] sm:$0xff]
        %v733 = vld [vmem:[#allocation2 + $0x750] sm:$0xff]
        %v734 = vld [vmem:[#allocation2 + $0x758] sm:$0xff]
        %v735 = vld [vmem:[#allocation2 + $0x760] sm:$0xff]
        %v736 = vld [vmem:[#allocation2 + $0x768] sm:$0xff]
        %v737 = vld [vmem:[#allocation2 + $0x770] sm:$0xff]
        %v738 = vld [vmem:[#allocation2 + $0x778] sm:$0xff]
        %v739 = vld [vmem:[#allocation2 + $0x780] sm:$0xff]
        %v740 = vld [vmem:[#allocation2 + $0x788] sm:$0xff]
        %v741 = vld [vmem:[#allocation2 + $0x790] sm:$0xff]
        %v742 = vld [vmem:[#allocation2 + $0x798] sm:$0xff]
        %v743 = vld [vmem:[#allocation2 + $0x7a0] sm:$0xff]
        %v744 = vld [vmem:[#allocation2 + $0x7a8] sm:$0xff]
        %v745 = vld [vmem:[#allocation2 + $0x7b0] sm:$0xff]
        %v746 = vld [vmem:[#allocation2 + $0x7b8] sm:$0xff]
        %v747 = vld [vmem:[#allocation2 + $0x7c0] sm:$0xff]
        %v748 = vld [vmem:[#allocation2 + $0x7c8] sm:$0xff]
        %v749 = vld [vmem:[#allocation2 + $0x7d0] sm:$0xff]
        %v750 = vld [vmem:[#allocation2 + $0x7d8] sm:$0xff]
        %v751 = vld [vmem:[#allocation2 + $0x7e0] sm:$0xff]
        %v752 = vld [vmem:[#allocation2 + $0x7e8] sm:$0xff]
        %v753 = vld [vmem:[#allocation2 + $0x7f0] sm:$0xff]
        %v754 = vld [vmem:[#allocation2 + $0x7f8] sm:$0xff]
        %v755 = vld [vmem:[%s198] sm:$0xff]
        %v756 = vld [vmem:[%s198 + $0x8] sm:$0xff]
        %v757 = vld [vmem:[%s198 + $0x10] sm:$0xff]
        %v758 = vld [vmem:[%s198 + $0x18] sm:$0xff]
        %v759 = vld [vmem:[%s198 + $0x20] sm:$0xff]
        %v760 = vld [vmem:[%s198 + $0x28] sm:$0xff]
        %v761 = vld [vmem:[%s198 + $0x30] sm:$0xff]
        %v762 = vld [vmem:[%s198 + $0x38] sm:$0xff]
        %v763 = vld [vmem:[%s198 + $0x40] sm:$0xff]
        %v764 = vld [vmem:[%s198 + $0x48] sm:$0xff]
        %v765 = vld [vmem:[%s198 + $0x50] sm:$0xff]
        %v766 = vld [vmem:[%s198 + $0x58] sm:$0xff]
        %v767 = vld [vmem:[%s198 + $0x60] sm:$0xff]
        %v768 = vld [vmem:[%s198 + $0x68] sm:$0xff]
        %v769 = vld [vmem:[%s198 + $0x70] sm:$0xff]
        %v770 = vld [vmem:[%s198 + $0x78] sm:$0xff]
        %v771 = vld [vmem:[%s198 + $0x80] sm:$0xff]
        %v772 = vld [vmem:[%s198 + $0x88] sm:$0xff]
        %v773 = vld [vmem:[%s198 + $0x90] sm:$0xff]
        %v774 = vld [vmem:[%s198 + $0x98] sm:$0xff]
        %v775 = vld [vmem:[%s198 + $0xa0] sm:$0xff]
        %v776 = vld [vmem:[%s198 + $0xa8] sm:$0xff]
        %v777 = vld [vmem:[%s198 + $0xb0] sm:$0xff]
        %v778 = vld [vmem:[%s198 + $0xb8] sm:$0xff]
        %v779 = vld [vmem:[%s198 + $0xc0] sm:$0xff]
        %v780 = vld [vmem:[%s198 + $0xc8] sm:$0xff]
        %v781 = vld [vmem:[%s198 + $0xd0] sm:$0xff]
        %v782 = vld [vmem:[%s198 + $0xd8] sm:$0xff]
        %v783 = vld [vmem:[%s198 + $0xe0] sm:$0xff]
        %v784 = vld [vmem:[%s198 + $0xe8] sm:$0xff]
        %v785 = vld [vmem:[%s198 + $0xf0] sm:$0xff]
        %v786 = vld [vmem:[%s198 + $0xf8] sm:$0xff]
        %v787 = vld [vmem:[%s198 + $0x100] sm:$0xff]
        %v788 = vld [vmem:[%s198 + $0x108] sm:$0xff]
        %v789 = vld [vmem:[%s198 + $0x110] sm:$0xff]
        %v790 = vld [vmem:[%s198 + $0x118] sm:$0xff]
        %v791 = vld [vmem:[%s198 + $0x120] sm:$0xff]
        %v792 = vld [vmem:[%s198 + $0x128] sm:$0xff]
        %v793 = vld [vmem:[%s198 + $0x130] sm:$0xff]
        %v794 = vld [vmem:[%s198 + $0x138] sm:$0xff]
        %v795 = vld [vmem:[%s198 + $0x140] sm:$0xff]
        %v796 = vld [vmem:[%s198 + $0x148] sm:$0xff]
        %v797 = vld [vmem:[%s198 + $0x150] sm:$0xff]
        %v798 = vld [vmem:[%s198 + $0x158] sm:$0xff]
        %v799 = vld [vmem:[%s198 + $0x160] sm:$0xff]
        %v800 = vld [vmem:[%s198 + $0x168] sm:$0xff]
        %v801 = vld [vmem:[%s198 + $0x170] sm:$0xff]
        %v802 = vld [vmem:[%s198 + $0x178] sm:$0xff]
        %v803 = vld [vmem:[%s198 + $0x180] sm:$0xff]
        %v804 = vld [vmem:[%s198 + $0x188] sm:$0xff]
        %v805 = vld [vmem:[%s198 + $0x190] sm:$0xff]
        %v806 = vld [vmem:[%s198 + $0x198] sm:$0xff]
        %v807 = vld [vmem:[%s198 + $0x1a0] sm:$0xff]
        %v808 = vld [vmem:[%s198 + $0x1a8] sm:$0xff]
        %v809 = vld [vmem:[%s198 + $0x1b0] sm:$0xff]
        %v810 = vld [vmem:[%s198 + $0x1b8] sm:$0xff]
        %v811 = vld [vmem:[%s198 + $0x1c0] sm:$0xff]
        %v812 = vld [vmem:[%s198 + $0x1c8] sm:$0xff]
        %v813 = vld [vmem:[%s198 + $0x1d0] sm:$0xff]
        %v814 = vld [vmem:[%s198 + $0x1d8] sm:$0xff]
        %v815 = vld [vmem:[%s198 + $0x1e0] sm:$0xff]
        %v816 = vld [vmem:[%s198 + $0x1e8] sm:$0xff]
        %v817 = vld [vmem:[%s198 + $0x1f0] sm:$0xff]
        %v818 = vld [vmem:[%s198 + $0x1f8] sm:$0xff]
        %v819 = vld [vmem:[%s198 + $0x200] sm:$0xff]
        %v820 = vld [vmem:[%s198 + $0x208] sm:$0xff]
        %v821 = vld [vmem:[%s198 + $0x210] sm:$0xff]
        %v822 = vld [vmem:[%s198 + $0x218] sm:$0xff]
        %v823 = vld [vmem:[%s198 + $0x220] sm:$0xff]
        %v824 = vld [vmem:[%s198 + $0x228] sm:$0xff]
        %v825 = vld [vmem:[%s198 + $0x230] sm:$0xff]
        %v826 = vld [vmem:[%s198 + $0x238] sm:$0xff]
        %v827 = vld [vmem:[%s198 + $0x240] sm:$0xff]
        %v828 = vld [vmem:[%s198 + $0x248] sm:$0xff]
        %v829 = vld [vmem:[%s198 + $0x250] sm:$0xff]
        %v830 = vld [vmem:[%s198 + $0x258] sm:$0xff]
        %v831 = vld [vmem:[%s198 + $0x260] sm:$0xff]
        %v832 = vld [vmem:[%s198 + $0x268] sm:$0xff]
        %v833 = vld [vmem:[%s198 + $0x270] sm:$0xff]
        %v834 = vld [vmem:[%s198 + $0x278] sm:$0xff]
        %v835 = vld [vmem:[%s198 + $0x280] sm:$0xff]
        %v836 = vld [vmem:[%s198 + $0x288] sm:$0xff]
        %v837 = vld [vmem:[%s198 + $0x290] sm:$0xff]
        %v838 = vld [vmem:[%s198 + $0x298] sm:$0xff]
        %v839 = vld [vmem:[%s198 + $0x2a0] sm:$0xff]
        %v840 = vld [vmem:[%s198 + $0x2a8] sm:$0xff]
        %v841 = vld [vmem:[%s198 + $0x2b0] sm:$0xff]
        %v842 = vld [vmem:[%s198 + $0x2b8] sm:$0xff]
        %v843 = vld [vmem:[%s198 + $0x2c0] sm:$0xff]
        %v844 = vld [vmem:[%s198 + $0x2c8] sm:$0xff]
        %v845 = vld [vmem:[%s198 + $0x2d0] sm:$0xff]
        %v846 = vld [vmem:[%s198 + $0x2d8] sm:$0xff]
        %v847 = vld [vmem:[%s198 + $0x2e0] sm:$0xff]
        %v848 = vld [vmem:[%s198 + $0x2e8] sm:$0xff]
        %v849 = vld [vmem:[%s198 + $0x2f0] sm:$0xff]
        %v850 = vld [vmem:[%s198 + $0x2f8] sm:$0xff]
        %v851 = vld [vmem:[%s198 + $0x300] sm:$0xff]
        %v852 = vld [vmem:[%s198 + $0x308] sm:$0xff]
        %v853 = vld [vmem:[%s198 + $0x310] sm:$0xff]
        %v854 = vld [vmem:[%s198 + $0x318] sm:$0xff]
        %v855 = vld [vmem:[%s198 + $0x320] sm:$0xff]
        %v856 = vld [vmem:[%s198 + $0x328] sm:$0xff]
        %v857 = vld [vmem:[%s198 + $0x330] sm:$0xff]
        %v858 = vld [vmem:[%s198 + $0x338] sm:$0xff]
        %v859 = vld [vmem:[%s198 + $0x340] sm:$0xff]
        %v860 = vld [vmem:[%s198 + $0x348] sm:$0xff]
        %v861 = vld [vmem:[%s198 + $0x350] sm:$0xff]
        %v862 = vld [vmem:[%s198 + $0x358] sm:$0xff]
        %v863 = vld [vmem:[%s198 + $0x360] sm:$0xff]
        %v864 = vld [vmem:[%s198 + $0x368] sm:$0xff]
        %v865 = vld [vmem:[%s198 + $0x370] sm:$0xff]
        %v866 = vld [vmem:[%s198 + $0x378] sm:$0xff]
        %v867 = vld [vmem:[%s198 + $0x380] sm:$0xff]
        %v868 = vld [vmem:[%s198 + $0x388] sm:$0xff]
        %v869 = vld [vmem:[%s198 + $0x390] sm:$0xff]
        %v870 = vld [vmem:[%s198 + $0x398] sm:$0xff]
        %v871 = vld [vmem:[%s198 + $0x3a0] sm:$0xff]
        %v872 = vld [vmem:[%s198 + $0x3a8] sm:$0xff]
        %v873 = vld [vmem:[%s198 + $0x3b0] sm:$0xff]
        %v874 = vld [vmem:[%s198 + $0x3b8] sm:$0xff]
        %v875 = vld [vmem:[%s198 + $0x3c0] sm:$0xff]
        %v876 = vld [vmem:[%s198 + $0x3c8] sm:$0xff]
        %v877 = vld [vmem:[%s198 + $0x3d0] sm:$0xff]
        %v878 = vld [vmem:[%s198 + $0x3d8] sm:$0xff]
        %v879 = vld [vmem:[%s198 + $0x3e0] sm:$0xff]
        %v880 = vld [vmem:[%s198 + $0x3e8] sm:$0xff]
        %v881 = vld [vmem:[%s198 + $0x3f0] sm:$0xff]
        %v882 = vld [vmem:[%s198 + $0x3f8] sm:$0xff]
        %v883 = vld [vmem:[%s207] sm:$0xff]
        %v884 = vld [vmem:[%s207 + $0x8] sm:$0xff]
        %v885 = vld [vmem:[%s207 + $0x10] sm:$0xff]
        %v886 = vld [vmem:[%s207 + $0x18] sm:$0xff]
        %v887 = vld [vmem:[%s207 + $0x20] sm:$0xff]
        %v888 = vld [vmem:[%s207 + $0x28] sm:$0xff]
        %v889 = vld [vmem:[%s207 + $0x30] sm:$0xff]
        %v890 = vld [vmem:[%s207 + $0x38] sm:$0xff]
        %v891 = vld [vmem:[%s207 + $0x40] sm:$0xff]
        %v892 = vld [vmem:[%s207 + $0x48] sm:$0xff]
        %v893 = vld [vmem:[%s207 + $0x50] sm:$0xff]
        %v894 = vld [vmem:[%s207 + $0x58] sm:$0xff]
        %v895 = vld [vmem:[%s207 + $0x60] sm:$0xff]
        %v896 = vld [vmem:[%s207 + $0x68] sm:$0xff]
        %v897 = vld [vmem:[%s207 + $0x70] sm:$0xff]
        %v898 = vld [vmem:[%s207 + $0x78] sm:$0xff]
        %v899 = vld [vmem:[%s207 + $0x80] sm:$0xff]
        %v900 = vld [vmem:[%s207 + $0x88] sm:$0xff]
        %v901 = vld [vmem:[%s207 + $0x90] sm:$0xff]
        %v902 = vld [vmem:[%s207 + $0x98] sm:$0xff]
        %v903 = vld [vmem:[%s207 + $0xa0] sm:$0xff]
        %v904 = vld [vmem:[%s207 + $0xa8] sm:$0xff]
        %v905 = vld [vmem:[%s207 + $0xb0] sm:$0xff]
        %v906 = vld [vmem:[%s207 + $0xb8] sm:$0xff]
        %v907 = vld [vmem:[%s207 + $0xc0] sm:$0xff]
        %v908 = vld [vmem:[%s207 + $0xc8] sm:$0xff]
        %v909 = vld [vmem:[%s207 + $0xd0] sm:$0xff]
        %v910 = vld [vmem:[%s207 + $0xd8] sm:$0xff]
        %v911 = vld [vmem:[%s207 + $0xe0] sm:$0xff]
        %v912 = vld [vmem:[%s207 + $0xe8] sm:$0xff]
        %v913 = vld [vmem:[%s207 + $0xf0] sm:$0xff]
        %v914 = vld [vmem:[%s207 + $0xf8] sm:$0xff]
        %v915 = vld [vmem:[%s207 + $0x100] sm:$0xff]
        %v916 = vld [vmem:[%s207 + $0x108] sm:$0xff]
        %v917 = vld [vmem:[%s207 + $0x110] sm:$0xff]
        %v918 = vld [vmem:[%s207 + $0x118] sm:$0xff]
        %v919 = vld [vmem:[%s207 + $0x120] sm:$0xff]
        %v920 = vld [vmem:[%s207 + $0x128] sm:$0xff]
        %v921 = vld [vmem:[%s207 + $0x130] sm:$0xff]
        %v922 = vld [vmem:[%s207 + $0x138] sm:$0xff]
        %v923 = vld [vmem:[%s207 + $0x140] sm:$0xff]
        %v924 = vld [vmem:[%s207 + $0x148] sm:$0xff]
        %v925 = vld [vmem:[%s207 + $0x150] sm:$0xff]
        %v926 = vld [vmem:[%s207 + $0x158] sm:$0xff]
        %v927 = vld [vmem:[%s207 + $0x160] sm:$0xff]
        %v928 = vld [vmem:[%s207 + $0x168] sm:$0xff]
        %v929 = vld [vmem:[%s207 + $0x170] sm:$0xff]
        %v930 = vld [vmem:[%s207 + $0x178] sm:$0xff]
        %v931 = vld [vmem:[%s207 + $0x180] sm:$0xff]
        %v932 = vld [vmem:[%s207 + $0x188] sm:$0xff]
        %v933 = vld [vmem:[%s207 + $0x190] sm:$0xff]
        %v934 = vld [vmem:[%s207 + $0x198] sm:$0xff]
        %v935 = vld [vmem:[%s207 + $0x1a0] sm:$0xff]
        %v936 = vld [vmem:[%s207 + $0x1a8] sm:$0xff]
        %v937 = vld [vmem:[%s207 + $0x1b0] sm:$0xff]
        %v938 = vld [vmem:[%s207 + $0x1b8] sm:$0xff]
        %v939 = vld [vmem:[%s207 + $0x1c0] sm:$0xff]
        %v940 = vld [vmem:[%s207 + $0x1c8] sm:$0xff]
        %v941 = vld [vmem:[%s207 + $0x1d0] sm:$0xff]
        %v942 = vld [vmem:[%s207 + $0x1d8] sm:$0xff]
        %v943 = vld [vmem:[%s207 + $0x1e0] sm:$0xff]
        %v944 = vld [vmem:[%s207 + $0x1e8] sm:$0xff]
        %v945 = vld [vmem:[%s207 + $0x1f0] sm:$0xff]
        %v946 = vld [vmem:[%s207 + $0x1f8] sm:$0xff]
        %v947 = vld [vmem:[%s207 + $0x200] sm:$0xff]
        %v948 = vld [vmem:[%s207 + $0x208] sm:$0xff]
        %v949 = vld [vmem:[%s207 + $0x210] sm:$0xff]
        %v950 = vld [vmem:[%s207 + $0x218] sm:$0xff]
        %v951 = vld [vmem:[%s207 + $0x220] sm:$0xff]
        %v952 = vld [vmem:[%s207 + $0x228] sm:$0xff]
        %v953 = vld [vmem:[%s207 + $0x230] sm:$0xff]
        %v954 = vld [vmem:[%s207 + $0x238] sm:$0xff]
        %v955 = vld [vmem:[%s207 + $0x240] sm:$0xff]
        %v956 = vld [vmem:[%s207 + $0x248] sm:$0xff]
        %v957 = vld [vmem:[%s207 + $0x250] sm:$0xff]
        %v958 = vld [vmem:[%s207 + $0x258] sm:$0xff]
        %v959 = vld [vmem:[%s207 + $0x260] sm:$0xff]
        %v960 = vld [vmem:[%s207 + $0x268] sm:$0xff]
        %v961 = vld [vmem:[%s207 + $0x270] sm:$0xff]
        %v962 = vld [vmem:[%s207 + $0x278] sm:$0xff]
        %v963 = vld [vmem:[%s207 + $0x280] sm:$0xff]
        %v964 = vld [vmem:[%s207 + $0x288] sm:$0xff]
        %v965 = vld [vmem:[%s207 + $0x290] sm:$0xff]
        %v966 = vld [vmem:[%s207 + $0x298] sm:$0xff]
        %v967 = vld [vmem:[%s207 + $0x2a0] sm:$0xff]
        %v968 = vld [vmem:[%s207 + $0x2a8] sm:$0xff]
        %v969 = vld [vmem:[%s207 + $0x2b0] sm:$0xff]
        %v970 = vld [vmem:[%s207 + $0x2b8] sm:$0xff]
        %v971 = vld [vmem:[%s207 + $0x2c0] sm:$0xff]
        %v972 = vld [vmem:[%s207 + $0x2c8] sm:$0xff]
        %v973 = vld [vmem:[%s207 + $0x2d0] sm:$0xff]
        %v974 = vld [vmem:[%s207 + $0x2d8] sm:$0xff]
        %v975 = vld [vmem:[%s207 + $0x2e0] sm:$0xff]
        %v976 = vld [vmem:[%s207 + $0x2e8] sm:$0xff]
        %v977 = vld [vmem:[%s207 + $0x2f0] sm:$0xff]
        %v978 = vld [vmem:[%s207 + $0x2f8] sm:$0xff]
        %v979 = vld [vmem:[%s207 + $0x300] sm:$0xff]
        %v980 = vld [vmem:[%s207 + $0x308] sm:$0xff]
        %v981 = vld [vmem:[%s207 + $0x310] sm:$0xff]
        %v982 = vld [vmem:[%s207 + $0x318] sm:$0xff]
        %v983 = vld [vmem:[%s207 + $0x320] sm:$0xff]
        %v984 = vld [vmem:[%s207 + $0x328] sm:$0xff]
        %v985 = vld [vmem:[%s207 + $0x330] sm:$0xff]
        %v986 = vld [vmem:[%s207 + $0x338] sm:$0xff]
        %v987 = vld [vmem:[%s207 + $0x340] sm:$0xff]
        %v988 = vld [vmem:[%s207 + $0x348] sm:$0xff]
        %v989 = vld [vmem:[%s207 + $0x350] sm:$0xff]
        %v990 = vld [vmem:[%s207 + $0x358] sm:$0xff]
        %v991 = vld [vmem:[%s207 + $0x360] sm:$0xff]
        %v992 = vld [vmem:[%s207 + $0x368] sm:$0xff]
        %v993 = vld [vmem:[%s207 + $0x370] sm:$0xff]
        %v994 = vld [vmem:[%s207 + $0x378] sm:$0xff]
        %v995 = vld [vmem:[%s207 + $0x380] sm:$0xff]
        %v996 = vld [vmem:[%s207 + $0x388] sm:$0xff]
        %v997 = vld [vmem:[%s207 + $0x390] sm:$0xff]
        %v998 = vld [vmem:[%s207 + $0x398] sm:$0xff]
        %v999 = vld [vmem:[%s207 + $0x3a0] sm:$0xff]
        %v1000 = vld [vmem:[%s207 + $0x3a8] sm:$0xff]
        %v1001 = vld [vmem:[%s207 + $0x3b0] sm:$0xff]
        %v1002 = vld [vmem:[%s207 + $0x3b8] sm:$0xff]
        %v1003 = vld [vmem:[%s207 + $0x3c0] sm:$0xff]
        %v1004 = vld [vmem:[%s207 + $0x3c8] sm:$0xff]
        %v1005 = vld [vmem:[%s207 + $0x3d0] sm:$0xff]
        %v1006 = vld [vmem:[%s207 + $0x3d8] sm:$0xff]
        %v1007 = vld [vmem:[%s207 + $0x3e0] sm:$0xff]
        %v1008 = vld [vmem:[%s207 + $0x3e8] sm:$0xff]
        %v1009 = vld [vmem:[%s207 + $0x3f0] sm:$0xff]
        %v1010 = vld [vmem:[%s207 + $0x3f8] sm:$0xff]
        %1011 = vmatprep.subr.mxu0 %v944
        %1012 = vmatpush1.msra.mxu0 %v943
        %1013 = vmatprep.subr.mxu0 %v940
        %1014 = vmatpush1.msra.mxu0 %v939
        %1015 = vmatprep.subr.mxu0 %v936
        %1016 = vmatpush1.msra.mxu0 %v935
        %1017 = vmatprep.subr.mxu0 %v932
        %1018 = vmatpush1.msra.mxu0 %v931
        %1019 = vmatprep.subr.mxu0 %v928
        %1020 = vmatpush1.msra.mxu0 %v927
        %1021 = vmatprep.subr.mxu0 %v924
        %1022 = vmatpush1.msra.mxu0 %v923
        %1023 = vmatprep.subr.mxu0 %v920
        %1024 = vmatpush1.msra.mxu0 %v919
        %1025 = vmatprep.subr.mxu0 %v916
        %1026 = vmatpush1.msra.mxu0 %v915
        %1027 = vmatprep.subr.mxu0 %v912
        %1028 = vmatpush1.msra.mxu0 %v911
        %1029 = vmatprep.subr.mxu0 %v908
        %1030 = vmatpush1.msra.mxu0 %v907
        %1031 = vmatprep.subr.mxu0 %v904
        %1032 = vmatpush1.msra.mxu0 %v903
        %1033 = vmatprep.subr.mxu0 %v900
        %1034 = vmatpush1.msra.mxu0 %v899
        %1035 = vmatprep.subr.mxu0 %v896
        %1036 = vmatpush1.msra.mxu0 %v895
        %1037 = vmatprep.subr.mxu0 %v892
        %1038 = vmatpush1.msra.mxu0 %v891
        %1039 = vmatprep.subr.mxu0 %v888
        %1040 = vmatpush1.msra.mxu0 %v887
        %1041 = vmatprep.subr.mxu0 %v884
        %1042 = vmatpush1.msra.mxu0 %v883
        %1043 = vmatprep.subr.mxu0 %v1008
        %1044 = vmatpush2.msra.mxu0 %v1007
        %1045 = vmatprep.subr.mxu0 %v1004
        %1046 = vmatpush2.msra.mxu0 %v1003
        %1047 = vmatprep.subr.mxu0 %v1000
        %1048 = vmatpush2.msra.mxu0 %v999
        %1049 = vmatprep.subr.mxu0 %v996
        %1050 = vmatpush2.msra.mxu0 %v995
        %1051 = vmatprep.subr.mxu0 %v992
        %1052 = vmatpush2.msra.mxu0 %v991
        %1053 = vmatprep.subr.mxu0 %v988
        %1054 = vmatpush2.msra.mxu0 %v987
        %1055 = vmatprep.subr.mxu0 %v984
        %1056 = vmatpush2.msra.mxu0 %v983
        %1057 = vmatprep.subr.mxu0 %v980
        %1058 = vmatpush2.msra.mxu0 %v979
        %1059 = vmatprep.subr.mxu0 %v976
        %1060 = vmatpush2.msra.mxu0 %v975
        %1061 = vmatprep.subr.mxu0 %v972
        %1062 = vmatpush2.msra.mxu0 %v971
        %1063 = vmatprep.subr.mxu0 %v968
        %1064 = vmatpush2.msra.mxu0 %v967
        %1065 = vmatprep.subr.mxu0 %v964
        %1066 = vmatpush2.msra.mxu0 %v963
        %1067 = vmatprep.subr.mxu0 %v960
        %1068 = vmatpush2.msra.mxu0 %v959
        %1069 = vmatprep.subr.mxu0 %v956
        %1070 = vmatpush2.msra.mxu0 %v955
        %1071 = vmatprep.subr.mxu0 %v952
        %1072 = vmatpush2.msra.mxu0 %v951
        %1073 = vmatprep.subr.mxu0 %v948
        %1074 = vmatpush2.msra.mxu0 %v947
        %1075 = vmatprep.mubr.f32.mxu0 %v756
        %1076 = vmatmul.mubr.f32.gmra.mxu0 %v755
        %v1077 = vpop.f32.mrf.mxu0
        %v1078 = vadd.f32 0.0, %v1077
        %v1079 = vpop.f32.mrf.mxu0
        %v1080 = vadd.f32 0.0, %v1079
        %1081 = vmatprep.mubr.f32.mxu0 %v758
        %1082 = vmatmul.mubr.f32.gmra.mxu0 %v757
        %v1083 = vpop.f32.mrf.mxu0
        %v1084 = vadd.f32 0.0, %v1083
        %v1085 = vpop.f32.mrf.mxu0
        %v1086 = vadd.f32 0.0, %v1085
        %1087 = vmatprep.mubr.f32.mxu0 %v760
        %1088 = vmatmul.mubr.f32.gmra.mxu0 %v759
        %v1089 = vpop.f32.mrf.mxu0
        %v1090 = vadd.f32 0.0, %v1089
        %v1091 = vpop.f32.mrf.mxu0
        %v1092 = vadd.f32 0.0, %v1091
        %1093 = vmatprep.mubr.f32.mxu0 %v762
        %1094 = vmatmul.mubr.f32.gmra.mxu0 %v761
        %v1095 = vpop.f32.mrf.mxu0
        %v1096 = vadd.f32 0.0, %v1095
        %v1097 = vpop.f32.mrf.mxu0
        %v1098 = vadd.f32 0.0, %v1097
        %1099 = vmatprep.mubr.f32.mxu0 %v764
        %1100 = vmatmul.mubr.f32.gmra.mxu0 %v763
        %v1101 = vpop.f32.mrf.mxu0
        %v1102 = vadd.f32 0.0, %v1101
        %v1103 = vpop.f32.mrf.mxu0
        %v1104 = vadd.f32 0.0, %v1103
        %1105 = vmatprep.mubr.f32.mxu0 %v766
        %1106 = vmatmul.mubr.f32.gmra.mxu0 %v765
        %v1107 = vpop.f32.mrf.mxu0
        %v1108 = vadd.f32 0.0, %v1107
        %v1109 = vpop.f32.mrf.mxu0
        %v1110 = vadd.f32 0.0, %v1109
        %1111 = vmatprep.mubr.f32.mxu0 %v768
        %1112 = vmatmul.mubr.f32.gmra.mxu0 %v767
        %v1113 = vpop.f32.mrf.mxu0
        %v1114 = vadd.f32 0.0, %v1113
        %v1115 = vpop.f32.mrf.mxu0
        %v1116 = vadd.f32 0.0, %v1115
        %1117 = vmatprep.mubr.f32.mxu0 %v770
        %1118 = vmatmul.mubr.f32.gmra.mxu0 %v769
        %v1119 = vpop.f32.mrf.mxu0
        %v1120 = vadd.f32 0.0, %v1119
        %v1121 = vpop.f32.mrf.mxu0
        %v1122 = vadd.f32 0.0, %v1121
        %1123 = vmatprep.mubr.f32.mxu0 %v772
        %1124 = vmatmul.mubr.f32.gmra.mxu0 %v771
        %v1125 = vpop.f32.mrf.mxu0
        %v1126 = vadd.f32 0.0, %v1125
        %v1127 = vpop.f32.mrf.mxu0
        %v1128 = vadd.f32 0.0, %v1127
        %1129 = vmatprep.mubr.f32.mxu0 %v774
        %1130 = vmatmul.mubr.f32.gmra.mxu0 %v773
        %v1131 = vpop.f32.mrf.mxu0
        %v1132 = vadd.f32 0.0, %v1131
        %v1133 = vpop.f32.mrf.mxu0
        %v1134 = vadd.f32 0.0, %v1133
        %1135 = vmatprep.mubr.f32.mxu0 %v776
        %1136 = vmatmul.mubr.f32.gmra.mxu0 %v775
        %v1137 = vpop.f32.mrf.mxu0
        %v1138 = vadd.f32 0.0, %v1137
        %v1139 = vpop.f32.mrf.mxu0
        %v1140 = vadd.f32 0.0, %v1139
        %1141 = vmatprep.mubr.f32.mxu0 %v778
        %1142 = vmatmul.mubr.f32.gmra.mxu0 %v777
        %v1143 = vpop.f32.mrf.mxu0
        %v1144 = vadd.f32 0.0, %v1143
        %v1145 = vpop.f32.mrf.mxu0
        %v1146 = vadd.f32 0.0, %v1145
        %1147 = vmatprep.mubr.f32.mxu0 %v780
        %1148 = vmatmul.mubr.f32.gmra.mxu0 %v779
        %v1149 = vpop.f32.mrf.mxu0
        %v1150 = vadd.f32 0.0, %v1149
        %v1151 = vpop.f32.mrf.mxu0
        %v1152 = vadd.f32 0.0, %v1151
        %1153 = vmatprep.mubr.f32.mxu0 %v782
        %1154 = vmatmul.mubr.f32.gmra.mxu0 %v781
        %v1155 = vpop.f32.mrf.mxu0
        %v1156 = vadd.f32 0.0, %v1155
        %v1157 = vpop.f32.mrf.mxu0
        %v1158 = vadd.f32 0.0, %v1157
        %1159 = vmatprep.mubr.f32.mxu0 %v784
        %1160 = vmatmul.mubr.f32.gmra.mxu0 %v783
        %v1161 = vpop.f32.mrf.mxu0
        %v1162 = vadd.f32 0.0, %v1161
        %v1163 = vpop.f32.mrf.mxu0
        %v1164 = vadd.f32 0.0, %v1163
        %1165 = vmatprep.mubr.f32.mxu0 %v786
        %1166 = vmatmul.mubr.f32.gmra.mxu0 %v785
        %v1167 = vpop.f32.mrf.mxu0
        %v1168 = vadd.f32 0.0, %v1167
        %v1169 = vpop.f32.mrf.mxu0
        %v1170 = vadd.f32 0.0, %v1169
        %1171 = vmatprep.mubr.f32.mxu0 %v788
        %1172 = vmatmul.mubr.f32.gmra.mxu0 %v787
        %v1173 = vpop.f32.mrf.mxu0
        %v1174 = vadd.f32 0.0, %v1173
        %v1175 = vpop.f32.mrf.mxu0
        %v1176 = vadd.f32 0.0, %v1175
        %1177 = vmatprep.mubr.f32.mxu0 %v790
        %1178 = vmatmul.mubr.f32.gmra.mxu0 %v789
        %v1179 = vpop.f32.mrf.mxu0
        %v1180 = vadd.f32 0.0, %v1179
        %v1181 = vpop.f32.mrf.mxu0
        %v1182 = vadd.f32 0.0, %v1181
        %1183 = vmatprep.mubr.f32.mxu0 %v792
        %1184 = vmatmul.mubr.f32.gmra.mxu0 %v791
        %v1185 = vpop.f32.mrf.mxu0
        %v1186 = vadd.f32 0.0, %v1185
        %v1187 = vpop.f32.mrf.mxu0
        %v1188 = vadd.f32 0.0, %v1187
        %1189 = vmatprep.mubr.f32.mxu0 %v794
        %1190 = vmatmul.mubr.f32.gmra.mxu0 %v793
        %v1191 = vpop.f32.mrf.mxu0
        %v1192 = vadd.f32 0.0, %v1191
        %v1193 = vpop.f32.mrf.mxu0
        %v1194 = vadd.f32 0.0, %v1193
        %1195 = vmatprep.mubr.f32.mxu0 %v796
        %1196 = vmatmul.mubr.f32.gmra.mxu0 %v795
        %v1197 = vpop.f32.mrf.mxu0
        %v1198 = vadd.f32 0.0, %v1197
        %v1199 = vpop.f32.mrf.mxu0
        %v1200 = vadd.f32 0.0, %v1199
        %1201 = vmatprep.mubr.f32.mxu0 %v798
        %1202 = vmatmul.mubr.f32.gmra.mxu0 %v797
        %v1203 = vpop.f32.mrf.mxu0
        %v1204 = vadd.f32 0.0, %v1203
        %v1205 = vpop.f32.mrf.mxu0
        %v1206 = vadd.f32 0.0, %v1205
        %1207 = vmatprep.mubr.f32.mxu0 %v800
        %1208 = vmatmul.mubr.f32.gmra.mxu0 %v799
        %v1209 = vpop.f32.mrf.mxu0
        %v1210 = vadd.f32 0.0, %v1209
        %v1211 = vpop.f32.mrf.mxu0
        %v1212 = vadd.f32 0.0, %v1211
        %1213 = vmatprep.mubr.f32.mxu0 %v802
        %1214 = vmatmul.mubr.f32.gmra.mxu0 %v801
        %v1215 = vpop.f32.mrf.mxu0
        %v1216 = vadd.f32 0.0, %v1215
        %v1217 = vpop.f32.mrf.mxu0
        %v1218 = vadd.f32 0.0, %v1217
        %1219 = vmatprep.mubr.f32.mxu0 %v804
        %1220 = vmatmul.mubr.f32.gmra.mxu0 %v803
        %v1221 = vpop.f32.mrf.mxu0
        %v1222 = vadd.f32 0.0, %v1221
        %v1223 = vpop.f32.mrf.mxu0
        %v1224 = vadd.f32 0.0, %v1223
        %1225 = vmatprep.mubr.f32.mxu0 %v806
        %1226 = vmatmul.mubr.f32.gmra.mxu0 %v805
        %v1227 = vpop.f32.mrf.mxu0
        %v1228 = vadd.f32 0.0, %v1227
        %v1229 = vpop.f32.mrf.mxu0
        %v1230 = vadd.f32 0.0, %v1229
        %1231 = vmatprep.mubr.f32.mxu0 %v808
        %1232 = vmatmul.mubr.f32.gmra.mxu0 %v807
        %v1233 = vpop.f32.mrf.mxu0
        %v1234 = vadd.f32 0.0, %v1233
        %v1235 = vpop.f32.mrf.mxu0
        %v1236 = vadd.f32 0.0, %v1235
        %1237 = vmatprep.mubr.f32.mxu0 %v810
        %1238 = vmatmul.mubr.f32.gmra.mxu0 %v809
        %v1239 = vpop.f32.mrf.mxu0
        %v1240 = vadd.f32 0.0, %v1239
        %v1241 = vpop.f32.mrf.mxu0
        %v1242 = vadd.f32 0.0, %v1241
        %1243 = vmatprep.mubr.f32.mxu0 %v812
        %1244 = vmatmul.mubr.f32.gmra.mxu0 %v811
        %v1245 = vpop.f32.mrf.mxu0
        %v1246 = vadd.f32 0.0, %v1245
        %v1247 = vpop.f32.mrf.mxu0
        %v1248 = vadd.f32 0.0, %v1247
        %1249 = vmatprep.mubr.f32.mxu0 %v814
        %1250 = vmatmul.mubr.f32.gmra.mxu0 %v813
        %v1251 = vpop.f32.mrf.mxu0
        %v1252 = vadd.f32 0.0, %v1251
        %v1253 = vpop.f32.mrf.mxu0
        %v1254 = vadd.f32 0.0, %v1253
        %1255 = vmatprep.mubr.f32.mxu0 %v816
        %1256 = vmatmul.mubr.f32.gmra.mxu0 %v815
        %v1257 = vpop.f32.mrf.mxu0
        %v1258 = vadd.f32 0.0, %v1257
        %v1259 = vpop.f32.mrf.mxu0
        %v1260 = vadd.f32 0.0, %v1259
        %1261 = vmatprep.mubr.f32.mxu0 %v818
        %1262 = vmatmul.mubr.f32.gmra.mxu0 %v817
        %v1263 = vpop.f32.mrf.mxu0
        %v1264 = vadd.f32 0.0, %v1263
        %v1265 = vpop.f32.mrf.mxu0
        %v1266 = vadd.f32 0.0, %v1265
        %1267 = vmatprep.mubr.f32.mxu0 %v820
        %1268 = vmatmul.mubr.f32.gmra.mxu0 %v819
        %v1269 = vpop.f32.mrf.mxu0
        %v1270 = vadd.f32 0.0, %v1269
        %v1271 = vpop.f32.mrf.mxu0
        %v1272 = vadd.f32 0.0, %v1271
        %1273 = vmatprep.mubr.f32.mxu0 %v822
        %1274 = vmatmul.mubr.f32.gmra.mxu0 %v821
        %v1275 = vpop.f32.mrf.mxu0
        %v1276 = vadd.f32 0.0, %v1275
        %v1277 = vpop.f32.mrf.mxu0
        %v1278 = vadd.f32 0.0, %v1277
        %1279 = vmatprep.mubr.f32.mxu0 %v824
        %1280 = vmatmul.mubr.f32.gmra.mxu0 %v823
        %v1281 = vpop.f32.mrf.mxu0
        %v1282 = vadd.f32 0.0, %v1281
        %v1283 = vpop.f32.mrf.mxu0
        %v1284 = vadd.f32 0.0, %v1283
        %1285 = vmatprep.mubr.f32.mxu0 %v826
        %1286 = vmatmul.mubr.f32.gmra.mxu0 %v825
        %v1287 = vpop.f32.mrf.mxu0
        %v1288 = vadd.f32 0.0, %v1287
        %v1289 = vpop.f32.mrf.mxu0
        %v1290 = vadd.f32 0.0, %v1289
        %1291 = vmatprep.mubr.f32.mxu0 %v828
        %1292 = vmatmul.mubr.f32.gmra.mxu0 %v827
        %v1293 = vpop.f32.mrf.mxu0
        %v1294 = vadd.f32 0.0, %v1293
        %v1295 = vpop.f32.mrf.mxu0
        %v1296 = vadd.f32 0.0, %v1295
        %1297 = vmatprep.mubr.f32.mxu0 %v830
        %1298 = vmatmul.mubr.f32.gmra.mxu0 %v829
        %v1299 = vpop.f32.mrf.mxu0
        %v1300 = vadd.f32 0.0, %v1299
        %v1301 = vpop.f32.mrf.mxu0
        %v1302 = vadd.f32 0.0, %v1301
        %1303 = vmatprep.mubr.f32.mxu0 %v832
        %1304 = vmatmul.mubr.f32.gmra.mxu0 %v831
        %v1305 = vpop.f32.mrf.mxu0
        %v1306 = vadd.f32 0.0, %v1305
        %v1307 = vpop.f32.mrf.mxu0
        %v1308 = vadd.f32 0.0, %v1307
        %1309 = vmatprep.mubr.f32.mxu0 %v834
        %1310 = vmatmul.mubr.f32.gmra.mxu0 %v833
        %v1311 = vpop.f32.mrf.mxu0
        %v1312 = vadd.f32 0.0, %v1311
        %v1313 = vpop.f32.mrf.mxu0
        %v1314 = vadd.f32 0.0, %v1313
        %1315 = vmatprep.mubr.f32.mxu0 %v836
        %1316 = vmatmul.mubr.f32.gmra.mxu0 %v835
        %v1317 = vpop.f32.mrf.mxu0
        %v1318 = vadd.f32 0.0, %v1317
        %v1319 = vpop.f32.mrf.mxu0
        %v1320 = vadd.f32 0.0, %v1319
        %1321 = vmatprep.mubr.f32.mxu0 %v838
        %1322 = vmatmul.mubr.f32.gmra.mxu0 %v837
        %v1323 = vpop.f32.mrf.mxu0
        %v1324 = vadd.f32 0.0, %v1323
        %v1325 = vpop.f32.mrf.mxu0
        %v1326 = vadd.f32 0.0, %v1325
        %1327 = vmatprep.mubr.f32.mxu0 %v840
        %1328 = vmatmul.mubr.f32.gmra.mxu0 %v839
        %v1329 = vpop.f32.mrf.mxu0
        %v1330 = vadd.f32 0.0, %v1329
        %v1331 = vpop.f32.mrf.mxu0
        %v1332 = vadd.f32 0.0, %v1331
        %1333 = vmatprep.mubr.f32.mxu0 %v842
        %1334 = vmatmul.mubr.f32.gmra.mxu0 %v841
        %v1335 = vpop.f32.mrf.mxu0
        %v1336 = vadd.f32 0.0, %v1335
        %v1337 = vpop.f32.mrf.mxu0
        %v1338 = vadd.f32 0.0, %v1337
        %1339 = vmatprep.mubr.f32.mxu0 %v844
        %1340 = vmatmul.mubr.f32.gmra.mxu0 %v843
        %v1341 = vpop.f32.mrf.mxu0
        %v1342 = vadd.f32 0.0, %v1341
        %v1343 = vpop.f32.mrf.mxu0
        %v1344 = vadd.f32 0.0, %v1343
        %1345 = vmatprep.mubr.f32.mxu0 %v846
        %1346 = vmatmul.mubr.f32.gmra.mxu0 %v845
        %v1347 = vpop.f32.mrf.mxu0
        %v1348 = vadd.f32 0.0, %v1347
        %v1349 = vpop.f32.mrf.mxu0
        %v1350 = vadd.f32 0.0, %v1349
        %1351 = vmatprep.mubr.f32.mxu0 %v848
        %1352 = vmatmul.mubr.f32.gmra.mxu0 %v847
        %v1353 = vpop.f32.mrf.mxu0
        %v1354 = vadd.f32 0.0, %v1353
        %v1355 = vpop.f32.mrf.mxu0
        %v1356 = vadd.f32 0.0, %v1355
        %1357 = vmatprep.mubr.f32.mxu0 %v850
        %1358 = vmatmul.mubr.f32.gmra.mxu0 %v849
        %v1359 = vpop.f32.mrf.mxu0
        %v1360 = vadd.f32 0.0, %v1359
        %v1361 = vpop.f32.mrf.mxu0
        %v1362 = vadd.f32 0.0, %v1361
        %1363 = vmatprep.mubr.f32.mxu0 %v852
        %1364 = vmatmul.mubr.f32.gmra.mxu0 %v851
        %v1365 = vpop.f32.mrf.mxu0
        %v1366 = vadd.f32 0.0, %v1365
        %v1367 = vpop.f32.mrf.mxu0
        %v1368 = vadd.f32 0.0, %v1367
        %1369 = vmatprep.mubr.f32.mxu0 %v854
        %1370 = vmatmul.mubr.f32.gmra.mxu0 %v853
        %v1371 = vpop.f32.mrf.mxu0
        %v1372 = vadd.f32 0.0, %v1371
        %v1373 = vpop.f32.mrf.mxu0
        %v1374 = vadd.f32 0.0, %v1373
        %1375 = vmatprep.mubr.f32.mxu0 %v856
        %1376 = vmatmul.mubr.f32.gmra.mxu0 %v855
        %v1377 = vpop.f32.mrf.mxu0
        %v1378 = vadd.f32 0.0, %v1377
        %v1379 = vpop.f32.mrf.mxu0
        %v1380 = vadd.f32 0.0, %v1379
        %1381 = vmatprep.mubr.f32.mxu0 %v858
        %1382 = vmatmul.mubr.f32.gmra.mxu0 %v857
        %v1383 = vpop.f32.mrf.mxu0
        %v1384 = vadd.f32 0.0, %v1383
        %v1385 = vpop.f32.mrf.mxu0
        %v1386 = vadd.f32 0.0, %v1385
        %1387 = vmatprep.mubr.f32.mxu0 %v860
        %1388 = vmatmul.mubr.f32.gmra.mxu0 %v859
        %v1389 = vpop.f32.mrf.mxu0
        %v1390 = vadd.f32 0.0, %v1389
        %v1391 = vpop.f32.mrf.mxu0
        %v1392 = vadd.f32 0.0, %v1391
        %1393 = vmatprep.mubr.f32.mxu0 %v862
        %1394 = vmatmul.mubr.f32.gmra.mxu0 %v861
        %v1395 = vpop.f32.mrf.mxu0
        %v1396 = vadd.f32 0.0, %v1395
        %v1397 = vpop.f32.mrf.mxu0
        %v1398 = vadd.f32 0.0, %v1397
        %1399 = vmatprep.mubr.f32.mxu0 %v864
        %1400 = vmatmul.mubr.f32.gmra.mxu0 %v863
        %v1401 = vpop.f32.mrf.mxu0
        %v1402 = vadd.f32 0.0, %v1401
        %v1403 = vpop.f32.mrf.mxu0
        %v1404 = vadd.f32 0.0, %v1403
        %1405 = vmatprep.mubr.f32.mxu0 %v866
        %1406 = vmatmul.mubr.f32.gmra.mxu0 %v865
        %v1407 = vpop.f32.mrf.mxu0
        %v1408 = vadd.f32 0.0, %v1407
        %v1409 = vpop.f32.mrf.mxu0
        %v1410 = vadd.f32 0.0, %v1409
        %1411 = vmatprep.mubr.f32.mxu0 %v868
        %1412 = vmatmul.mubr.f32.gmra.mxu0 %v867
        %v1413 = vpop.f32.mrf.mxu0
        %v1414 = vadd.f32 0.0, %v1413
        %v1415 = vpop.f32.mrf.mxu0
        %v1416 = vadd.f32 0.0, %v1415
        %1417 = vmatprep.mubr.f32.mxu0 %v870
        %1418 = vmatmul.mubr.f32.gmra.mxu0 %v869
        %v1419 = vpop.f32.mrf.mxu0
        %v1420 = vadd.f32 0.0, %v1419
        %v1421 = vpop.f32.mrf.mxu0
        %v1422 = vadd.f32 0.0, %v1421
        %1423 = vmatprep.mubr.f32.mxu0 %v872
        %1424 = vmatmul.mubr.f32.gmra.mxu0 %v871
        %v1425 = vpop.f32.mrf.mxu0
        %v1426 = vadd.f32 0.0, %v1425
        %v1427 = vpop.f32.mrf.mxu0
        %v1428 = vadd.f32 0.0, %v1427
        %1429 = vmatprep.mubr.f32.mxu0 %v874
        %1430 = vmatmul.mubr.f32.gmra.mxu0 %v873
        %v1431 = vpop.f32.mrf.mxu0
        %v1432 = vadd.f32 0.0, %v1431
        %v1433 = vpop.f32.mrf.mxu0
        %v1434 = vadd.f32 0.0, %v1433
        %1435 = vmatprep.mubr.f32.mxu0 %v876
        %1436 = vmatmul.mubr.f32.gmra.mxu0 %v875
        %v1437 = vpop.f32.mrf.mxu0
        %v1438 = vadd.f32 0.0, %v1437
        %v1439 = vpop.f32.mrf.mxu0
        %v1440 = vadd.f32 0.0, %v1439
        %1441 = vmatprep.mubr.f32.mxu0 %v878
        %1442 = vmatmul.mubr.f32.gmra.mxu0 %v877
        %v1443 = vpop.f32.mrf.mxu0
        %v1444 = vadd.f32 0.0, %v1443
        %v1445 = vpop.f32.mrf.mxu0
        %v1446 = vadd.f32 0.0, %v1445
        %1447 = vmatprep.mubr.f32.mxu0 %v880
        %1448 = vmatmul.mubr.f32.gmra.mxu0 %v879
        %v1449 = vpop.f32.mrf.mxu0
        %v1450 = vadd.f32 0.0, %v1449
        %v1451 = vpop.f32.mrf.mxu0
        %v1452 = vadd.f32 0.0, %v1451
        %1453 = vmatprep.mubr.f32.mxu0 %v882
        %1454 = vmatmul.mubr.f32.gmra.mxu0 %v881
        %v1455 = vpop.f32.mrf.mxu0
        %v1456 = vadd.f32 0.0, %v1455
        %v1457 = vpop.f32.mrf.mxu0
        %v1458 = vadd.f32 0.0, %v1457
        %1459 = vdwg.mxu0
        %1460 = vmatprep.subr.mxu0 %v946
        %1461 = vmatpush1.msra.mxu0 %v945
        %1462 = vmatprep.subr.mxu0 %v942
        %1463 = vmatpush1.msra.mxu0 %v941
        %1464 = vmatprep.subr.mxu0 %v938
        %1465 = vmatpush1.msra.mxu0 %v937
        %1466 = vmatprep.subr.mxu0 %v934
        %1467 = vmatpush1.msra.mxu0 %v933
        %1468 = vmatprep.subr.mxu0 %v930
        %1469 = vmatpush1.msra.mxu0 %v929
        %1470 = vmatprep.subr.mxu0 %v926
        %1471 = vmatpush1.msra.mxu0 %v925
        %1472 = vmatprep.subr.mxu0 %v922
        %1473 = vmatpush1.msra.mxu0 %v921
        %1474 = vmatprep.subr.mxu0 %v918
        %1475 = vmatpush1.msra.mxu0 %v917
        %1476 = vmatprep.subr.mxu0 %v914
        %1477 = vmatpush1.msra.mxu0 %v913
        %1478 = vmatprep.subr.mxu0 %v910
        %1479 = vmatpush1.msra.mxu0 %v909
        %1480 = vmatprep.subr.mxu0 %v906
        %1481 = vmatpush1.msra.mxu0 %v905
        %1482 = vmatprep.subr.mxu0 %v902
        %1483 = vmatpush1.msra.mxu0 %v901
        %1484 = vmatprep.subr.mxu0 %v898
        %1485 = vmatpush1.msra.mxu0 %v897
        %1486 = vmatprep.subr.mxu0 %v894
        %1487 = vmatpush1.msra.mxu0 %v893
        %1488 = vmatprep.subr.mxu0 %v890
        %1489 = vmatpush1.msra.mxu0 %v889
        %1490 = vmatprep.subr.mxu0 %v886
        %1491 = vmatpush1.msra.mxu0 %v885
        %1492 = vmatprep.subr.mxu0 %v1010
        %1493 = vmatpush2.msra.mxu0 %v1009
        %1494 = vmatprep.subr.mxu0 %v1006
        %1495 = vmatpush2.msra.mxu0 %v1005
        %1496 = vmatprep.subr.mxu0 %v1002
        %1497 = vmatpush2.msra.mxu0 %v1001
        %1498 = vmatprep.subr.mxu0 %v998
        %1499 = vmatpush2.msra.mxu0 %v997
        %1500 = vmatprep.subr.mxu0 %v994
        %1501 = vmatpush2.msra.mxu0 %v993
        %1502 = vmatprep.subr.mxu0 %v990
        %1503 = vmatpush2.msra.mxu0 %v989
        %1504 = vmatprep.subr.mxu0 %v986
        %1505 = vmatpush2.msra.mxu0 %v985
        %1506 = vmatprep.subr.mxu0 %v982
        %1507 = vmatpush2.msra.mxu0 %v981
        %1508 = vmatprep.subr.mxu0 %v978
        %1509 = vmatpush2.msra.mxu0 %v977
        %1510 = vmatprep.subr.mxu0 %v974
        %1511 = vmatpush2.msra.mxu0 %v973
        %1512 = vmatprep.subr.mxu0 %v970
        %1513 = vmatpush2.msra.mxu0 %v969
        %1514 = vmatprep.subr.mxu0 %v966
        %1515 = vmatpush2.msra.mxu0 %v965
        %1516 = vmatprep.subr.mxu0 %v962
        %1517 = vmatpush2.msra.mxu0 %v961
        %1518 = vmatprep.subr.mxu0 %v958
        %1519 = vmatpush2.msra.mxu0 %v957
        %1520 = vmatprep.subr.mxu0 %v954
        %1521 = vmatpush2.msra.mxu0 %v953
        %1522 = vmatprep.subr.mxu0 %v950
        %1523 = vmatpush2.msra.mxu0 %v949
        %1524 = vmatprep.mubr.f32.mxu0 %v756
        %1525 = vmatmul.mubr.f32.gmra.mxu0 %v755
        %v1526 = vpop.f32.mrf.mxu0
        %v1527 = vadd.f32 0.0, %v1526
        %v1528 = vpop.f32.mrf.mxu0
        %v1529 = vadd.f32 0.0, %v1528
        %1530 = vmatprep.mubr.f32.mxu0 %v758
        %1531 = vmatmul.mubr.f32.gmra.mxu0 %v757
        %v1532 = vpop.f32.mrf.mxu0
        %v1533 = vadd.f32 0.0, %v1532
        %v1534 = vpop.f32.mrf.mxu0
        %v1535 = vadd.f32 0.0, %v1534
        %1536 = vmatprep.mubr.f32.mxu0 %v760
        %1537 = vmatmul.mubr.f32.gmra.mxu0 %v759
        %v1538 = vpop.f32.mrf.mxu0
        %v1539 = vadd.f32 0.0, %v1538
        %v1540 = vpop.f32.mrf.mxu0
        %v1541 = vadd.f32 0.0, %v1540
        %1542 = vmatprep.mubr.f32.mxu0 %v762
        %1543 = vmatmul.mubr.f32.gmra.mxu0 %v761
        %v1544 = vpop.f32.mrf.mxu0
        %v1545 = vadd.f32 0.0, %v1544
        %v1546 = vpop.f32.mrf.mxu0
        %v1547 = vadd.f32 0.0, %v1546
        %1548 = vmatprep.mubr.f32.mxu0 %v764
        %1549 = vmatmul.mubr.f32.gmra.mxu0 %v763
        %v1550 = vpop.f32.mrf.mxu0
        %v1551 = vadd.f32 0.0, %v1550
        %v1552 = vpop.f32.mrf.mxu0
        %v1553 = vadd.f32 0.0, %v1552
        %1554 = vmatprep.mubr.f32.mxu0 %v766
        %1555 = vmatmul.mubr.f32.gmra.mxu0 %v765
        %v1556 = vpop.f32.mrf.mxu0
        %v1557 = vadd.f32 0.0, %v1556
        %v1558 = vpop.f32.mrf.mxu0
        %v1559 = vadd.f32 0.0, %v1558
        %1560 = vmatprep.mubr.f32.mxu0 %v768
        %1561 = vmatmul.mubr.f32.gmra.mxu0 %v767
        %v1562 = vpop.f32.mrf.mxu0
        %v1563 = vadd.f32 0.0, %v1562
        %v1564 = vpop.f32.mrf.mxu0
        %v1565 = vadd.f32 0.0, %v1564
        %1566 = vmatprep.mubr.f32.mxu0 %v770
        %1567 = vmatmul.mubr.f32.gmra.mxu0 %v769
        %v1568 = vpop.f32.mrf.mxu0
        %v1569 = vadd.f32 0.0, %v1568
        %v1570 = vpop.f32.mrf.mxu0
        %v1571 = vadd.f32 0.0, %v1570
        %1572 = vmatprep.mubr.f32.mxu0 %v772
        %1573 = vmatmul.mubr.f32.gmra.mxu0 %v771
        %v1574 = vpop.f32.mrf.mxu0
        %v1575 = vadd.f32 0.0, %v1574
        %v1576 = vpop.f32.mrf.mxu0
        %v1577 = vadd.f32 0.0, %v1576
        %1578 = vmatprep.mubr.f32.mxu0 %v774
        %1579 = vmatmul.mubr.f32.gmra.mxu0 %v773
        %v1580 = vpop.f32.mrf.mxu0
        %v1581 = vadd.f32 0.0, %v1580
        %v1582 = vpop.f32.mrf.mxu0
        %v1583 = vadd.f32 0.0, %v1582
        %1584 = vmatprep.mubr.f32.mxu0 %v776
        %1585 = vmatmul.mubr.f32.gmra.mxu0 %v775
        %v1586 = vpop.f32.mrf.mxu0
        %v1587 = vadd.f32 0.0, %v1586
        %v1588 = vpop.f32.mrf.mxu0
        %v1589 = vadd.f32 0.0, %v1588
        %1590 = vmatprep.mubr.f32.mxu0 %v778
        %1591 = vmatmul.mubr.f32.gmra.mxu0 %v777
        %v1592 = vpop.f32.mrf.mxu0
        %v1593 = vadd.f32 0.0, %v1592
        %v1594 = vpop.f32.mrf.mxu0
        %v1595 = vadd.f32 0.0, %v1594
        %1596 = vmatprep.mubr.f32.mxu0 %v780
        %1597 = vmatmul.mubr.f32.gmra.mxu0 %v779
        %v1598 = vpop.f32.mrf.mxu0
        %v1599 = vadd.f32 0.0, %v1598
        %v1600 = vpop.f32.mrf.mxu0
        %v1601 = vadd.f32 0.0, %v1600
        %1602 = vmatprep.mubr.f32.mxu0 %v782
        %1603 = vmatmul.mubr.f32.gmra.mxu0 %v781
        %v1604 = vpop.f32.mrf.mxu0
        %v1605 = vadd.f32 0.0, %v1604
        %v1606 = vpop.f32.mrf.mxu0
        %v1607 = vadd.f32 0.0, %v1606
        %1608 = vmatprep.mubr.f32.mxu0 %v784
        %1609 = vmatmul.mubr.f32.gmra.mxu0 %v783
        %v1610 = vpop.f32.mrf.mxu0
        %v1611 = vadd.f32 0.0, %v1610
        %v1612 = vpop.f32.mrf.mxu0
        %v1613 = vadd.f32 0.0, %v1612
        %1614 = vmatprep.mubr.f32.mxu0 %v786
        %1615 = vmatmul.mubr.f32.gmra.mxu0 %v785
        %v1616 = vpop.f32.mrf.mxu0
        %v1617 = vadd.f32 0.0, %v1616
        %v1618 = vpop.f32.mrf.mxu0
        %v1619 = vadd.f32 0.0, %v1618
        %1620 = vmatprep.mubr.f32.mxu0 %v788
        %1621 = vmatmul.mubr.f32.gmra.mxu0 %v787
        %v1622 = vpop.f32.mrf.mxu0
        %v1623 = vadd.f32 0.0, %v1622
        %v1624 = vpop.f32.mrf.mxu0
        %v1625 = vadd.f32 0.0, %v1624
        %1626 = vmatprep.mubr.f32.mxu0 %v790
        %1627 = vmatmul.mubr.f32.gmra.mxu0 %v789
        %v1628 = vpop.f32.mrf.mxu0
        %v1629 = vadd.f32 0.0, %v1628
        %v1630 = vpop.f32.mrf.mxu0
        %v1631 = vadd.f32 0.0, %v1630
        %1632 = vmatprep.mubr.f32.mxu0 %v792
        %1633 = vmatmul.mubr.f32.gmra.mxu0 %v791
        %v1634 = vpop.f32.mrf.mxu0
        %v1635 = vadd.f32 0.0, %v1634
        %v1636 = vpop.f32.mrf.mxu0
        %v1637 = vadd.f32 0.0, %v1636
        %1638 = vmatprep.mubr.f32.mxu0 %v794
        %1639 = vmatmul.mubr.f32.gmra.mxu0 %v793
        %v1640 = vpop.f32.mrf.mxu0
        %v1641 = vadd.f32 0.0, %v1640
        %v1642 = vpop.f32.mrf.mxu0
        %v1643 = vadd.f32 0.0, %v1642
        %1644 = vmatprep.mubr.f32.mxu0 %v796
        %1645 = vmatmul.mubr.f32.gmra.mxu0 %v795
        %v1646 = vpop.f32.mrf.mxu0
        %v1647 = vadd.f32 0.0, %v1646
        %v1648 = vpop.f32.mrf.mxu0
        %v1649 = vadd.f32 0.0, %v1648
        %1650 = vmatprep.mubr.f32.mxu0 %v798
        %1651 = vmatmul.mubr.f32.gmra.mxu0 %v797
        %v1652 = vpop.f32.mrf.mxu0
        %v1653 = vadd.f32 0.0, %v1652
        %v1654 = vpop.f32.mrf.mxu0
        %v1655 = vadd.f32 0.0, %v1654
        %1656 = vmatprep.mubr.f32.mxu0 %v800
        %1657 = vmatmul.mubr.f32.gmra.mxu0 %v799
        %v1658 = vpop.f32.mrf.mxu0
        %v1659 = vadd.f32 0.0, %v1658
        %v1660 = vpop.f32.mrf.mxu0
        %v1661 = vadd.f32 0.0, %v1660
        %1662 = vmatprep.mubr.f32.mxu0 %v802
        %1663 = vmatmul.mubr.f32.gmra.mxu0 %v801
        %v1664 = vpop.f32.mrf.mxu0
        %v1665 = vadd.f32 0.0, %v1664
        %v1666 = vpop.f32.mrf.mxu0
        %v1667 = vadd.f32 0.0, %v1666
        %1668 = vmatprep.mubr.f32.mxu0 %v804
        %1669 = vmatmul.mubr.f32.gmra.mxu0 %v803
        %v1670 = vpop.f32.mrf.mxu0
        %v1671 = vadd.f32 0.0, %v1670
        %v1672 = vpop.f32.mrf.mxu0
        %v1673 = vadd.f32 0.0, %v1672
        %1674 = vmatprep.mubr.f32.mxu0 %v806
        %1675 = vmatmul.mubr.f32.gmra.mxu0 %v805
        %v1676 = vpop.f32.mrf.mxu0
        %v1677 = vadd.f32 0.0, %v1676
        %v1678 = vpop.f32.mrf.mxu0
        %v1679 = vadd.f32 0.0, %v1678
        %1680 = vmatprep.mubr.f32.mxu0 %v808
        %1681 = vmatmul.mubr.f32.gmra.mxu0 %v807
        %v1682 = vpop.f32.mrf.mxu0
        %v1683 = vadd.f32 0.0, %v1682
        %v1684 = vpop.f32.mrf.mxu0
        %v1685 = vadd.f32 0.0, %v1684
        %1686 = vmatprep.mubr.f32.mxu0 %v810
        %1687 = vmatmul.mubr.f32.gmra.mxu0 %v809
        %v1688 = vpop.f32.mrf.mxu0
        %v1689 = vadd.f32 0.0, %v1688
        %v1690 = vpop.f32.mrf.mxu0
        %v1691 = vadd.f32 0.0, %v1690
        %1692 = vmatprep.mubr.f32.mxu0 %v812
        %1693 = vmatmul.mubr.f32.gmra.mxu0 %v811
        %v1694 = vpop.f32.mrf.mxu0
        %v1695 = vadd.f32 0.0, %v1694
        %v1696 = vpop.f32.mrf.mxu0
        %v1697 = vadd.f32 0.0, %v1696
        %1698 = vmatprep.mubr.f32.mxu0 %v814
        %1699 = vmatmul.mubr.f32.gmra.mxu0 %v813
        %v1700 = vpop.f32.mrf.mxu0
        %v1701 = vadd.f32 0.0, %v1700
        %v1702 = vpop.f32.mrf.mxu0
        %v1703 = vadd.f32 0.0, %v1702
        %1704 = vmatprep.mubr.f32.mxu0 %v816
        %1705 = vmatmul.mubr.f32.gmra.mxu0 %v815
        %v1706 = vpop.f32.mrf.mxu0
        %v1707 = vadd.f32 0.0, %v1706
        %v1708 = vpop.f32.mrf.mxu0
        %v1709 = vadd.f32 0.0, %v1708
        %1710 = vmatprep.mubr.f32.mxu0 %v818
        %1711 = vmatmul.mubr.f32.gmra.mxu0 %v817
        %v1712 = vpop.f32.mrf.mxu0
        %v1713 = vadd.f32 0.0, %v1712
        %v1714 = vpop.f32.mrf.mxu0
        %v1715 = vadd.f32 0.0, %v1714
        %1716 = vmatprep.mubr.f32.mxu0 %v820
        %1717 = vmatmul.mubr.f32.gmra.mxu0 %v819
        %v1718 = vpop.f32.mrf.mxu0
        %v1719 = vadd.f32 0.0, %v1718
        %v1720 = vpop.f32.mrf.mxu0
        %v1721 = vadd.f32 0.0, %v1720
        %1722 = vmatprep.mubr.f32.mxu0 %v822
        %1723 = vmatmul.mubr.f32.gmra.mxu0 %v821
        %v1724 = vpop.f32.mrf.mxu0
        %v1725 = vadd.f32 0.0, %v1724
        %v1726 = vpop.f32.mrf.mxu0
        %v1727 = vadd.f32 0.0, %v1726
        %1728 = vmatprep.mubr.f32.mxu0 %v824
        %1729 = vmatmul.mubr.f32.gmra.mxu0 %v823
        %v1730 = vpop.f32.mrf.mxu0
        %v1731 = vadd.f32 0.0, %v1730
        %v1732 = vpop.f32.mrf.mxu0
        %v1733 = vadd.f32 0.0, %v1732
        %1734 = vmatprep.mubr.f32.mxu0 %v826
        %1735 = vmatmul.mubr.f32.gmra.mxu0 %v825
        %v1736 = vpop.f32.mrf.mxu0
        %v1737 = vadd.f32 0.0, %v1736
        %v1738 = vpop.f32.mrf.mxu0
        %v1739 = vadd.f32 0.0, %v1738
        %1740 = vmatprep.mubr.f32.mxu0 %v828
        %1741 = vmatmul.mubr.f32.gmra.mxu0 %v827
        %v1742 = vpop.f32.mrf.mxu0
        %v1743 = vadd.f32 0.0, %v1742
        %v1744 = vpop.f32.mrf.mxu0
        %v1745 = vadd.f32 0.0, %v1744
        %1746 = vmatprep.mubr.f32.mxu0 %v830
        %1747 = vmatmul.mubr.f32.gmra.mxu0 %v829
        %v1748 = vpop.f32.mrf.mxu0
        %v1749 = vadd.f32 0.0, %v1748
        %v1750 = vpop.f32.mrf.mxu0
        %v1751 = vadd.f32 0.0, %v1750
        %1752 = vmatprep.mubr.f32.mxu0 %v832
        %1753 = vmatmul.mubr.f32.gmra.mxu0 %v831
        %v1754 = vpop.f32.mrf.mxu0
        %v1755 = vadd.f32 0.0, %v1754
        %v1756 = vpop.f32.mrf.mxu0
        %v1757 = vadd.f32 0.0, %v1756
        %1758 = vmatprep.mubr.f32.mxu0 %v834
        %1759 = vmatmul.mubr.f32.gmra.mxu0 %v833
        %v1760 = vpop.f32.mrf.mxu0
        %v1761 = vadd.f32 0.0, %v1760
        %v1762 = vpop.f32.mrf.mxu0
        %v1763 = vadd.f32 0.0, %v1762
        %1764 = vmatprep.mubr.f32.mxu0 %v836
        %1765 = vmatmul.mubr.f32.gmra.mxu0 %v835
        %v1766 = vpop.f32.mrf.mxu0
        %v1767 = vadd.f32 0.0, %v1766
        %v1768 = vpop.f32.mrf.mxu0
        %v1769 = vadd.f32 0.0, %v1768
        %1770 = vmatprep.mubr.f32.mxu0 %v838
        %1771 = vmatmul.mubr.f32.gmra.mxu0 %v837
        %v1772 = vpop.f32.mrf.mxu0
        %v1773 = vadd.f32 0.0, %v1772
        %v1774 = vpop.f32.mrf.mxu0
        %v1775 = vadd.f32 0.0, %v1774
        %1776 = vmatprep.mubr.f32.mxu0 %v840
        %1777 = vmatmul.mubr.f32.gmra.mxu0 %v839
        %v1778 = vpop.f32.mrf.mxu0
        %v1779 = vadd.f32 0.0, %v1778
        %v1780 = vpop.f32.mrf.mxu0
        %v1781 = vadd.f32 0.0, %v1780
        %1782 = vmatprep.mubr.f32.mxu0 %v842
        %1783 = vmatmul.mubr.f32.gmra.mxu0 %v841
        %v1784 = vpop.f32.mrf.mxu0
        %v1785 = vadd.f32 0.0, %v1784
        %v1786 = vpop.f32.mrf.mxu0
        %v1787 = vadd.f32 0.0, %v1786
        %1788 = vmatprep.mubr.f32.mxu0 %v844
        %1789 = vmatmul.mubr.f32.gmra.mxu0 %v843
        %v1790 = vpop.f32.mrf.mxu0
        %v1791 = vadd.f32 0.0, %v1790
        %v1792 = vpop.f32.mrf.mxu0
        %v1793 = vadd.f32 0.0, %v1792
        %1794 = vmatprep.mubr.f32.mxu0 %v846
        %1795 = vmatmul.mubr.f32.gmra.mxu0 %v845
        %v1796 = vpop.f32.mrf.mxu0
        %v1797 = vadd.f32 0.0, %v1796
        %v1798 = vpop.f32.mrf.mxu0
        %v1799 = vadd.f32 0.0, %v1798
        %1800 = vmatprep.mubr.f32.mxu0 %v848
        %1801 = vmatmul.mubr.f32.gmra.mxu0 %v847
        %v1802 = vpop.f32.mrf.mxu0
        %v1803 = vadd.f32 0.0, %v1802
        %v1804 = vpop.f32.mrf.mxu0
        %v1805 = vadd.f32 0.0, %v1804
        %1806 = vmatprep.mubr.f32.mxu0 %v850
        %1807 = vmatmul.mubr.f32.gmra.mxu0 %v849
        %v1808 = vpop.f32.mrf.mxu0
        %v1809 = vadd.f32 0.0, %v1808
        %v1810 = vpop.f32.mrf.mxu0
        %v1811 = vadd.f32 0.0, %v1810
        %1812 = vmatprep.mubr.f32.mxu0 %v852
        %1813 = vmatmul.mubr.f32.gmra.mxu0 %v851
        %v1814 = vpop.f32.mrf.mxu0
        %v1815 = vadd.f32 0.0, %v1814
        %v1816 = vpop.f32.mrf.mxu0
        %v1817 = vadd.f32 0.0, %v1816
        %1818 = vmatprep.mubr.f32.mxu0 %v854
        %1819 = vmatmul.mubr.f32.gmra.mxu0 %v853
        %v1820 = vpop.f32.mrf.mxu0
        %v1821 = vadd.f32 0.0, %v1820
        %v1822 = vpop.f32.mrf.mxu0
        %v1823 = vadd.f32 0.0, %v1822
        %1824 = vmatprep.mubr.f32.mxu0 %v856
        %1825 = vmatmul.mubr.f32.gmra.mxu0 %v855
        %v1826 = vpop.f32.mrf.mxu0
        %v1827 = vadd.f32 0.0, %v1826
        %v1828 = vpop.f32.mrf.mxu0
        %v1829 = vadd.f32 0.0, %v1828
        %1830 = vmatprep.mubr.f32.mxu0 %v858
        %1831 = vmatmul.mubr.f32.gmra.mxu0 %v857
        %v1832 = vpop.f32.mrf.mxu0
        %v1833 = vadd.f32 0.0, %v1832
        %v1834 = vpop.f32.mrf.mxu0
        %v1835 = vadd.f32 0.0, %v1834
        %1836 = vmatprep.mubr.f32.mxu0 %v860
        %1837 = vmatmul.mubr.f32.gmra.mxu0 %v859
        %v1838 = vpop.f32.mrf.mxu0
        %v1839 = vadd.f32 0.0, %v1838
        %v1840 = vpop.f32.mrf.mxu0
        %v1841 = vadd.f32 0.0, %v1840
        %1842 = vmatprep.mubr.f32.mxu0 %v862
        %1843 = vmatmul.mubr.f32.gmra.mxu0 %v861
        %v1844 = vpop.f32.mrf.mxu0
        %v1845 = vadd.f32 0.0, %v1844
        %v1846 = vpop.f32.mrf.mxu0
        %v1847 = vadd.f32 0.0, %v1846
        %1848 = vmatprep.mubr.f32.mxu0 %v864
        %1849 = vmatmul.mubr.f32.gmra.mxu0 %v863
        %v1850 = vpop.f32.mrf.mxu0
        %v1851 = vadd.f32 0.0, %v1850
        %v1852 = vpop.f32.mrf.mxu0
        %v1853 = vadd.f32 0.0, %v1852
        %1854 = vmatprep.mubr.f32.mxu0 %v866
        %1855 = vmatmul.mubr.f32.gmra.mxu0 %v865
        %v1856 = vpop.f32.mrf.mxu0
        %v1857 = vadd.f32 0.0, %v1856
        %v1858 = vpop.f32.mrf.mxu0
        %v1859 = vadd.f32 0.0, %v1858
        %1860 = vmatprep.mubr.f32.mxu0 %v868
        %1861 = vmatmul.mubr.f32.gmra.mxu0 %v867
        %v1862 = vpop.f32.mrf.mxu0
        %v1863 = vadd.f32 0.0, %v1862
        %v1864 = vpop.f32.mrf.mxu0
        %v1865 = vadd.f32 0.0, %v1864
        %1866 = vmatprep.mubr.f32.mxu0 %v870
        %1867 = vmatmul.mubr.f32.gmra.mxu0 %v869
        %v1868 = vpop.f32.mrf.mxu0
        %v1869 = vadd.f32 0.0, %v1868
        %v1870 = vpop.f32.mrf.mxu0
        %v1871 = vadd.f32 0.0, %v1870
        %1872 = vmatprep.mubr.f32.mxu0 %v872
        %1873 = vmatmul.mubr.f32.gmra.mxu0 %v871
        %v1874 = vpop.f32.mrf.mxu0
        %v1875 = vadd.f32 0.0, %v1874
        %v1876 = vpop.f32.mrf.mxu0
        %v1877 = vadd.f32 0.0, %v1876
        %1878 = vmatprep.mubr.f32.mxu0 %v874
        %1879 = vmatmul.mubr.f32.gmra.mxu0 %v873
        %v1880 = vpop.f32.mrf.mxu0
        %v1881 = vadd.f32 0.0, %v1880
        %v1882 = vpop.f32.mrf.mxu0
        %v1883 = vadd.f32 0.0, %v1882
        %1884 = vmatprep.mubr.f32.mxu0 %v876
        %1885 = vmatmul.mubr.f32.gmra.mxu0 %v875
        %v1886 = vpop.f32.mrf.mxu0
        %v1887 = vadd.f32 0.0, %v1886
        %v1888 = vpop.f32.mrf.mxu0
        %v1889 = vadd.f32 0.0, %v1888
        %1890 = vmatprep.mubr.f32.mxu0 %v878
        %1891 = vmatmul.mubr.f32.gmra.mxu0 %v877
        %v1892 = vpop.f32.mrf.mxu0
        %v1893 = vadd.f32 0.0, %v1892
        %v1894 = vpop.f32.mrf.mxu0
        %v1895 = vadd.f32 0.0, %v1894
        %1896 = vmatprep.mubr.f32.mxu0 %v880
        %1897 = vmatmul.mubr.f32.gmra.mxu0 %v879
        %v1898 = vpop.f32.mrf.mxu0
        %v1899 = vadd.f32 0.0, %v1898
        %v1900 = vpop.f32.mrf.mxu0
        %v1901 = vadd.f32 0.0, %v1900
        %1902 = vmatprep.mubr.f32.mxu0 %v882
        %1903 = vmatmul.mubr.f32.gmra.mxu0 %v881
        %v1904 = vpop.f32.mrf.mxu0
        %v1905 = vadd.f32 0.0, %v1904
        %v1906 = vpop.f32.mrf.mxu0
        %v1907 = vadd.f32 0.0, %v1906
        %1908 = vdwg.mxu0
        %v1909 = vadd.f32 %v499, %v1078
        %v1910 = vadd.f32 %v500, %v1080
        %v1911 = vadd.f32 %v501, %v1527
        %v1912 = vadd.f32 %v502, %v1529
        %v1913 = vadd.f32 %v503, %v1084
        %v1914 = vadd.f32 %v504, %v1086
        %v1915 = vadd.f32 %v505, %v1533
        %v1916 = vadd.f32 %v506, %v1535
        %v1917 = vadd.f32 %v507, %v1090
        %v1918 = vadd.f32 %v508, %v1092
        %v1919 = vadd.f32 %v509, %v1539
        %v1920 = vadd.f32 %v510, %v1541
        %v1921 = vadd.f32 %v511, %v1096
        %v1922 = vadd.f32 %v512, %v1098
        %v1923 = vadd.f32 %v513, %v1545
        %v1924 = vadd.f32 %v514, %v1547
        %v1925 = vadd.f32 %v515, %v1102
        %v1926 = vadd.f32 %v516, %v1104
        %v1927 = vadd.f32 %v517, %v1551
        %v1928 = vadd.f32 %v518, %v1553
        %v1929 = vadd.f32 %v519, %v1108
        %v1930 = vadd.f32 %v520, %v1110
        %v1931 = vadd.f32 %v521, %v1557
        %v1932 = vadd.f32 %v522, %v1559
        %v1933 = vadd.f32 %v523, %v1114
        %v1934 = vadd.f32 %v524, %v1116
        %v1935 = vadd.f32 %v525, %v1563
        %v1936 = vadd.f32 %v526, %v1565
        %v1937 = vadd.f32 %v527, %v1120
        %v1938 = vadd.f32 %v528, %v1122
        %v1939 = vadd.f32 %v529, %v1569
        %v1940 = vadd.f32 %v530, %v1571
        %v1941 = vadd.f32 %v531, %v1126
        %v1942 = vadd.f32 %v532, %v1128
        %v1943 = vadd.f32 %v533, %v1575
        %v1944 = vadd.f32 %v534, %v1577
        %v1945 = vadd.f32 %v535, %v1132
        %v1946 = vadd.f32 %v536, %v1134
        %v1947 = vadd.f32 %v537, %v1581
        %v1948 = vadd.f32 %v538, %v1583
        %v1949 = vadd.f32 %v539, %v1138
        %v1950 = vadd.f32 %v540, %v1140
        %v1951 = vadd.f32 %v541, %v1587
        %v1952 = vadd.f32 %v542, %v1589
        %v1953 = vadd.f32 %v543, %v1144
        %v1954 = vadd.f32 %v544, %v1146
        %v1955 = vadd.f32 %v545, %v1593
        %v1956 = vadd.f32 %v546, %v1595
        %v1957 = vadd.f32 %v547, %v1150
        %v1958 = vadd.f32 %v548, %v1152
        %v1959 = vadd.f32 %v549, %v1599
        %v1960 = vadd.f32 %v550, %v1601
        %v1961 = vadd.f32 %v551, %v1156
        %v1962 = vadd.f32 %v552, %v1158
        %v1963 = vadd.f32 %v553, %v1605
        %v1964 = vadd.f32 %v554, %v1607
        %v1965 = vadd.f32 %v555, %v1162
        %v1966 = vadd.f32 %v556, %v1164
        %v1967 = vadd.f32 %v557, %v1611
        %v1968 = vadd.f32 %v558, %v1613
        %v1969 = vadd.f32 %v559, %v1168
        %v1970 = vadd.f32 %v560, %v1170
        %v1971 = vadd.f32 %v561, %v1617
        %v1972 = vadd.f32 %v562, %v1619
        %v1973 = vadd.f32 %v563, %v1174
        %v1974 = vadd.f32 %v564, %v1176
        %v1975 = vadd.f32 %v565, %v1623
        %v1976 = vadd.f32 %v566, %v1625
        %v1977 = vadd.f32 %v567, %v1180
        %v1978 = vadd.f32 %v568, %v1182
        %v1979 = vadd.f32 %v569, %v1629
        %v1980 = vadd.f32 %v570, %v1631
        %v1981 = vadd.f32 %v571, %v1186
        %v1982 = vadd.f32 %v572, %v1188
        %v1983 = vadd.f32 %v573, %v1635
        %v1984 = vadd.f32 %v574, %v1637
        %v1985 = vadd.f32 %v575, %v1192
        %v1986 = vadd.f32 %v576, %v1194
        %v1987 = vadd.f32 %v577, %v1641
        %v1988 = vadd.f32 %v578, %v1643
        %v1989 = vadd.f32 %v579, %v1198
        %v1990 = vadd.f32 %v580, %v1200
        %v1991 = vadd.f32 %v581, %v1647
        %v1992 = vadd.f32 %v582, %v1649
        %v1993 = vadd.f32 %v583, %v1204
        %v1994 = vadd.f32 %v584, %v1206
        %v1995 = vadd.f32 %v585, %v1653
        %v1996 = vadd.f32 %v586, %v1655
        %v1997 = vadd.f32 %v587, %v1210
        %v1998 = vadd.f32 %v588, %v1212
        %v1999 = vadd.f32 %v589, %v1659
        %v2000 = vadd.f32 %v590, %v1661
        %v2001 = vadd.f32 %v591, %v1216
        %v2002 = vadd.f32 %v592, %v1218
        %v2003 = vadd.f32 %v593, %v1665
        %v2004 = vadd.f32 %v594, %v1667
        %v2005 = vadd.f32 %v595, %v1222
        %v2006 = vadd.f32 %v596, %v1224
        %v2007 = vadd.f32 %v597, %v1671
        %v2008 = vadd.f32 %v598, %v1673
        %v2009 = vadd.f32 %v599, %v1228
        %v2010 = vadd.f32 %v600, %v1230
        %v2011 = vadd.f32 %v601, %v1677
        %v2012 = vadd.f32 %v602, %v1679
        %v2013 = vadd.f32 %v603, %v1234
        %v2014 = vadd.f32 %v604, %v1236
        %v2015 = vadd.f32 %v605, %v1683
        %v2016 = vadd.f32 %v606, %v1685
        %v2017 = vadd.f32 %v607, %v1240
        %v2018 = vadd.f32 %v608, %v1242
        %v2019 = vadd.f32 %v609, %v1689
        %v2020 = vadd.f32 %v610, %v1691
        %v2021 = vadd.f32 %v611, %v1246
        %v2022 = vadd.f32 %v612, %v1248
        %v2023 = vadd.f32 %v613, %v1695
        %v2024 = vadd.f32 %v614, %v1697
        %v2025 = vadd.f32 %v615, %v1252
        %v2026 = vadd.f32 %v616, %v1254
        %v2027 = vadd.f32 %v617, %v1701
        %v2028 = vadd.f32 %v618, %v1703
        %v2029 = vadd.f32 %v619, %v1258
        %v2030 = vadd.f32 %v620, %v1260
        %v2031 = vadd.f32 %v621, %v1707
        %v2032 = vadd.f32 %v622, %v1709
        %v2033 = vadd.f32 %v623, %v1264
        %v2034 = vadd.f32 %v624, %v1266
        %v2035 = vadd.f32 %v625, %v1713
        %v2036 = vadd.f32 %v626, %v1715
        %v2037 = vadd.f32 %v627, %v1270
        %v2038 = vadd.f32 %v628, %v1272
        %v2039 = vadd.f32 %v629, %v1719
        %v2040 = vadd.f32 %v630, %v1721
        %v2041 = vadd.f32 %v631, %v1276
        %v2042 = vadd.f32 %v632, %v1278
        %v2043 = vadd.f32 %v633, %v1725
        %v2044 = vadd.f32 %v634, %v1727
        %v2045 = vadd.f32 %v635, %v1282
        %v2046 = vadd.f32 %v636, %v1284
        %v2047 = vadd.f32 %v637, %v1731
        %v2048 = vadd.f32 %v638, %v1733
        %v2049 = vadd.f32 %v639, %v1288
        %v2050 = vadd.f32 %v640, %v1290
        %v2051 = vadd.f32 %v641, %v1737
        %v2052 = vadd.f32 %v642, %v1739
        %v2053 = vadd.f32 %v643, %v1294
        %v2054 = vadd.f32 %v644, %v1296
        %v2055 = vadd.f32 %v645, %v1743
        %v2056 = vadd.f32 %v646, %v1745
        %v2057 = vadd.f32 %v647, %v1300
        %v2058 = vadd.f32 %v648, %v1302
        %v2059 = vadd.f32 %v649, %v1749
        %v2060 = vadd.f32 %v650, %v1751
        %v2061 = vadd.f32 %v651, %v1306
        %v2062 = vadd.f32 %v652, %v1308
        %v2063 = vadd.f32 %v653, %v1755
        %v2064 = vadd.f32 %v654, %v1757
        %v2065 = vadd.f32 %v655, %v1312
        %v2066 = vadd.f32 %v656, %v1314
        %v2067 = vadd.f32 %v657, %v1761
        %v2068 = vadd.f32 %v658, %v1763
        %v2069 = vadd.f32 %v659, %v1318
        %v2070 = vadd.f32 %v660, %v1320
        %v2071 = vadd.f32 %v661, %v1767
        %v2072 = vadd.f32 %v662, %v1769
        %v2073 = vadd.f32 %v663, %v1324
        %v2074 = vadd.f32 %v664, %v1326
        %v2075 = vadd.f32 %v665, %v1773
        %v2076 = vadd.f32 %v666, %v1775
        %v2077 = vadd.f32 %v667, %v1330
        %v2078 = vadd.f32 %v668, %v1332
        %v2079 = vadd.f32 %v669, %v1779
        %v2080 = vadd.f32 %v670, %v1781
        %v2081 = vadd.f32 %v671, %v1336
        %v2082 = vadd.f32 %v672, %v1338
        %v2083 = vadd.f32 %v673, %v1785
        %v2084 = vadd.f32 %v674, %v1787
        %v2085 = vadd.f32 %v675, %v1342
        %v2086 = vadd.f32 %v676, %v1344
        %v2087 = vadd.f32 %v677, %v1791
        %v2088 = vadd.f32 %v678, %v1793
        %v2089 = vadd.f32 %v679, %v1348
        %v2090 = vadd.f32 %v680, %v1350
        %v2091 = vadd.f32 %v681, %v1797
        %v2092 = vadd.f32 %v682, %v1799
        %v2093 = vadd.f32 %v683, %v1354
        %v2094 = vadd.f32 %v684, %v1356
        %v2095 = vadd.f32 %v685, %v1803
        %v2096 = vadd.f32 %v686, %v1805
        %v2097 = vadd.f32 %v687, %v1360
        %v2098 = vadd.f32 %v688, %v1362
        %v2099 = vadd.f32 %v689, %v1809
        %v2100 = vadd.f32 %v690, %v1811
        %v2101 = vadd.f32 %v691, %v1366
        %v2102 = vadd.f32 %v692, %v1368
        %v2103 = vadd.f32 %v693, %v1815
        %v2104 = vadd.f32 %v694, %v1817
        %v2105 = vadd.f32 %v695, %v1372
        %v2106 = vadd.f32 %v696, %v1374
        %v2107 = vadd.f32 %v697, %v1821
        %v2108 = vadd.f32 %v698, %v1823
        %v2109 = vadd.f32 %v699, %v1378
        %v2110 = vadd.f32 %v700, %v1380
        %v2111 = vadd.f32 %v701, %v1827
        %v2112 = vadd.f32 %v702, %v1829
        %v2113 = vadd.f32 %v703, %v1384
        %v2114 = vadd.f32 %v704, %v1386
        %v2115 = vadd.f32 %v705, %v1833
        %v2116 = vadd.f32 %v706, %v1835
        %v2117 = vadd.f32 %v707, %v1390
        %v2118 = vadd.f32 %v708, %v1392
        %v2119 = vadd.f32 %v709, %v1839
        %v2120 = vadd.f32 %v710, %v1841
        %v2121 = vadd.f32 %v711, %v1396
        %v2122 = vadd.f32 %v712, %v1398
        %v2123 = vadd.f32 %v713, %v1845
        %v2124 = vadd.f32 %v714, %v1847
        %v2125 = vadd.f32 %v715, %v1402
        %v2126 = vadd.f32 %v716, %v1404
        %v2127 = vadd.f32 %v717, %v1851
        %v2128 = vadd.f32 %v718, %v1853
        %v2129 = vadd.f32 %v719, %v1408
        %v2130 = vadd.f32 %v720, %v1410
        %v2131 = vadd.f32 %v721, %v1857
        %v2132 = vadd.f32 %v722, %v1859
        %v2133 = vadd.f32 %v723, %v1414
        %v2134 = vadd.f32 %v724, %v1416
        %v2135 = vadd.f32 %v725, %v1863
        %v2136 = vadd.f32 %v726, %v1865
        %v2137 = vadd.f32 %v727, %v1420
        %v2138 = vadd.f32 %v728, %v1422
        %v2139 = vadd.f32 %v729, %v1869
        %v2140 = vadd.f32 %v730, %v1871
        %v2141 = vadd.f32 %v731, %v1426
        %v2142 = vadd.f32 %v732, %v1428
        %v2143 = vadd.f32 %v733, %v1875
        %v2144 = vadd.f32 %v734, %v1877
        %v2145 = vadd.f32 %v735, %v1432
        %v2146 = vadd.f32 %v736, %v1434
        %v2147 = vadd.f32 %v737, %v1881
        %v2148 = vadd.f32 %v738, %v1883
        %v2149 = vadd.f32 %v739, %v1438
        %v2150 = vadd.f32 %v740, %v1440
        %v2151 = vadd.f32 %v741, %v1887
        %v2152 = vadd.f32 %v742, %v1889
        %v2153 = vadd.f32 %v743, %v1444
        %v2154 = vadd.f32 %v744, %v1446
        %v2155 = vadd.f32 %v745, %v1893
        %v2156 = vadd.f32 %v746, %v1895
        %v2157 = vadd.f32 %v747, %v1450
        %v2158 = vadd.f32 %v748, %v1452
        %v2159 = vadd.f32 %v749, %v1899
        %v2160 = vadd.f32 %v750, %v1901
        %v2161 = vadd.f32 %v751, %v1456
        %v2162 = vadd.f32 %v752, %v1458
        %v2163 = vadd.f32 %v753, %v1905
        %v2164 = vadd.f32 %v754, %v1907
        %2165 = vst [vmem:[#allocation2] sm:$0xff] %v1909
        %2166 = vst [vmem:[#allocation2 + $0x8] sm:$0xff] %v1910
        %2167 = vst [vmem:[#allocation2 + $0x10] sm:$0xff] %v1911
        %2168 = vst [vmem:[#allocation2 + $0x18] sm:$0xff] %v1912
        %2169 = vst [vmem:[#allocation2 + $0x20] sm:$0xff] %v1913
        %2170 = vst [vmem:[#allocation2 + $0x28] sm:$0xff] %v1914
        %2171 = vst [vmem:[#allocation2 + $0x30] sm:$0xff] %v1915
        %2172 = vst [vmem:[#allocation2 + $0x38] sm:$0xff] %v1916
        %2173 = vst [vmem:[#allocation2 + $0x40] sm:$0xff] %v1917
        %2174 = vst [vmem:[#allocation2 + $0x48] sm:$0xff] %v1918
        %2175 = vst [vmem:[#allocation2 + $0x50] sm:$0xff] %v1919
        %2176 = vst [vmem:[#allocation2 + $0x58] sm:$0xff] %v1920
        %2177 = vst [vmem:[#allocation2 + $0x60] sm:$0xff] %v1921
        %2178 = vst [vmem:[#allocation2 + $0x68] sm:$0xff] %v1922
        %2179 = vst [vmem:[#allocation2 + $0x70] sm:$0xff] %v1923
        %2180 = vst [vmem:[#allocation2 + $0x78] sm:$0xff] %v1924
        %2181 = vst [vmem:[#allocation2 + $0x80] sm:$0xff] %v1925
        %2182 = vst [vmem:[#allocation2 + $0x88] sm:$0xff] %v1926
        %2183 = vst [vmem:[#allocation2 + $0x90] sm:$0xff] %v1927
        %2184 = vst [vmem:[#allocation2 + $0x98] sm:$0xff] %v1928
        %2185 = vst [vmem:[#allocation2 + $0xa0] sm:$0xff] %v1929
        %2186 = vst [vmem:[#allocation2 + $0xa8] sm:$0xff] %v1930
        %2187 = vst [vmem:[#allocation2 + $0xb0] sm:$0xff] %v1931
        %2188 = vst [vmem:[#allocation2 + $0xb8] sm:$0xff] %v1932
        %2189 = vst [vmem:[#allocation2 + $0xc0] sm:$0xff] %v1933
        %2190 = vst [vmem:[#allocation2 + $0xc8] sm:$0xff] %v1934
        %2191 = vst [vmem:[#allocation2 + $0xd0] sm:$0xff] %v1935
        %2192 = vst [vmem:[#allocation2 + $0xd8] sm:$0xff] %v1936
        %2193 = vst [vmem:[#allocation2 + $0xe0] sm:$0xff] %v1937
        %2194 = vst [vmem:[#allocation2 + $0xe8] sm:$0xff] %v1938
        %2195 = vst [vmem:[#allocation2 + $0xf0] sm:$0xff] %v1939
        %2196 = vst [vmem:[#allocation2 + $0xf8] sm:$0xff] %v1940
        %2197 = vst [vmem:[#allocation2 + $0x100] sm:$0xff] %v1941
        %2198 = vst [vmem:[#allocation2 + $0x108] sm:$0xff] %v1942
        %2199 = vst [vmem:[#allocation2 + $0x110] sm:$0xff] %v1943
        %2200 = vst [vmem:[#allocation2 + $0x118] sm:$0xff] %v1944
        %2201 = vst [vmem:[#allocation2 + $0x120] sm:$0xff] %v1945
        %2202 = vst [vmem:[#allocation2 + $0x128] sm:$0xff] %v1946
        %2203 = vst [vmem:[#allocation2 + $0x130] sm:$0xff] %v1947
        %2204 = vst [vmem:[#allocation2 + $0x138] sm:$0xff] %v1948
        %2205 = vst [vmem:[#allocation2 + $0x140] sm:$0xff] %v1949
        %2206 = vst [vmem:[#allocation2 + $0x148] sm:$0xff] %v1950
        %2207 = vst [vmem:[#allocation2 + $0x150] sm:$0xff] %v1951
        %2208 = vst [vmem:[#allocation2 + $0x158] sm:$0xff] %v1952
        %2209 = vst [vmem:[#allocation2 + $0x160] sm:$0xff] %v1953
        %2210 = vst [vmem:[#allocation2 + $0x168] sm:$0xff] %v1954
        %2211 = vst [vmem:[#allocation2 + $0x170] sm:$0xff] %v1955
        %2212 = vst [vmem:[#allocation2 + $0x178] sm:$0xff] %v1956
        %2213 = vst [vmem:[#allocation2 + $0x180] sm:$0xff] %v1957
        %2214 = vst [vmem:[#allocation2 + $0x188] sm:$0xff] %v1958
        %2215 = vst [vmem:[#allocation2 + $0x190] sm:$0xff] %v1959
        %2216 = vst [vmem:[#allocation2 + $0x198] sm:$0xff] %v1960
        %2217 = vst [vmem:[#allocation2 + $0x1a0] sm:$0xff] %v1961
        %2218 = vst [vmem:[#allocation2 + $0x1a8] sm:$0xff] %v1962
        %2219 = vst [vmem:[#allocation2 + $0x1b0] sm:$0xff] %v1963
        %2220 = vst [vmem:[#allocation2 + $0x1b8] sm:$0xff] %v1964
        %2221 = vst [vmem:[#allocation2 + $0x1c0] sm:$0xff] %v1965
        %2222 = vst [vmem:[#allocation2 + $0x1c8] sm:$0xff] %v1966
        %2223 = vst [vmem:[#allocation2 + $0x1d0] sm:$0xff] %v1967
        %2224 = vst [vmem:[#allocation2 + $0x1d8] sm:$0xff] %v1968
        %2225 = vst [vmem:[#allocation2 + $0x1e0] sm:$0xff] %v1969
        %2226 = vst [vmem:[#allocation2 + $0x1e8] sm:$0xff] %v1970
        %2227 = vst [vmem:[#allocation2 + $0x1f0] sm:$0xff] %v1971
        %2228 = vst [vmem:[#allocation2 + $0x1f8] sm:$0xff] %v1972
        %2229 = vst [vmem:[#allocation2 + $0x200] sm:$0xff] %v1973
        %2230 = vst [vmem:[#allocation2 + $0x208] sm:$0xff] %v1974
        %2231 = vst [vmem:[#allocation2 + $0x210] sm:$0xff] %v1975
        %2232 = vst [vmem:[#allocation2 + $0x218] sm:$0xff] %v1976
        %2233 = vst [vmem:[#allocation2 + $0x220] sm:$0xff] %v1977
        %2234 = vst [vmem:[#allocation2 + $0x228] sm:$0xff] %v1978
        %2235 = vst [vmem:[#allocation2 + $0x230] sm:$0xff] %v1979
        %2236 = vst [vmem:[#allocation2 + $0x238] sm:$0xff] %v1980
        %2237 = vst [vmem:[#allocation2 + $0x240] sm:$0xff] %v1981
        %2238 = vst [vmem:[#allocation2 + $0x248] sm:$0xff] %v1982
        %2239 = vst [vmem:[#allocation2 + $0x250] sm:$0xff] %v1983
        %2240 = vst [vmem:[#allocation2 + $0x258] sm:$0xff] %v1984
        %2241 = vst [vmem:[#allocation2 + $0x260] sm:$0xff] %v1985
        %2242 = vst [vmem:[#allocation2 + $0x268] sm:$0xff] %v1986
        %2243 = vst [vmem:[#allocation2 + $0x270] sm:$0xff] %v1987
        %2244 = vst [vmem:[#allocation2 + $0x278] sm:$0xff] %v1988
        %2245 = vst [vmem:[#allocation2 + $0x280] sm:$0xff] %v1989
        %2246 = vst [vmem:[#allocation2 + $0x288] sm:$0xff] %v1990
        %2247 = vst [vmem:[#allocation2 + $0x290] sm:$0xff] %v1991
        %2248 = vst [vmem:[#allocation2 + $0x298] sm:$0xff] %v1992
        %2249 = vst [vmem:[#allocation2 + $0x2a0] sm:$0xff] %v1993
        %2250 = vst [vmem:[#allocation2 + $0x2a8] sm:$0xff] %v1994
        %2251 = vst [vmem:[#allocation2 + $0x2b0] sm:$0xff] %v1995
        %2252 = vst [vmem:[#allocation2 + $0x2b8] sm:$0xff] %v1996
        %2253 = vst [vmem:[#allocation2 + $0x2c0] sm:$0xff] %v1997
        %2254 = vst [vmem:[#allocation2 + $0x2c8] sm:$0xff] %v1998
        %2255 = vst [vmem:[#allocation2 + $0x2d0] sm:$0xff] %v1999
        %2256 = vst [vmem:[#allocation2 + $0x2d8] sm:$0xff] %v2000
        %2257 = vst [vmem:[#allocation2 + $0x2e0] sm:$0xff] %v2001
        %2258 = vst [vmem:[#allocation2 + $0x2e8] sm:$0xff] %v2002
        %2259 = vst [vmem:[#allocation2 + $0x2f0] sm:$0xff] %v2003
        %2260 = vst [vmem:[#allocation2 + $0x2f8] sm:$0xff] %v2004
        %2261 = vst [vmem:[#allocation2 + $0x300] sm:$0xff] %v2005
        %2262 = vst [vmem:[#allocation2 + $0x308] sm:$0xff] %v2006
        %2263 = vst [vmem:[#allocation2 + $0x310] sm:$0xff] %v2007
        %2264 = vst [vmem:[#allocation2 + $0x318] sm:$0xff] %v2008
        %2265 = vst [vmem:[#allocation2 + $0x320] sm:$0xff] %v2009
        %2266 = vst [vmem:[#allocation2 + $0x328] sm:$0xff] %v2010
        %2267 = vst [vmem:[#allocation2 + $0x330] sm:$0xff] %v2011
        %2268 = vst [vmem:[#allocation2 + $0x338] sm:$0xff] %v2012
        %2269 = vst [vmem:[#allocation2 + $0x340] sm:$0xff] %v2013
        %2270 = vst [vmem:[#allocation2 + $0x348] sm:$0xff] %v2014
        %2271 = vst [vmem:[#allocation2 + $0x350] sm:$0xff] %v2015
        %2272 = vst [vmem:[#allocation2 + $0x358] sm:$0xff] %v2016
        %2273 = vst [vmem:[#allocation2 + $0x360] sm:$0xff] %v2017
        %2274 = vst [vmem:[#allocation2 + $0x368] sm:$0xff] %v2018
        %2275 = vst [vmem:[#allocation2 + $0x370] sm:$0xff] %v2019
        %2276 = vst [vmem:[#allocation2 + $0x378] sm:$0xff] %v2020
        %2277 = vst [vmem:[#allocation2 + $0x380] sm:$0xff] %v2021
        %2278 = vst [vmem:[#allocation2 + $0x388] sm:$0xff] %v2022
        %2279 = vst [vmem:[#allocation2 + $0x390] sm:$0xff] %v2023
        %2280 = vst [vmem:[#allocation2 + $0x398] sm:$0xff] %v2024
        %2281 = vst [vmem:[#allocation2 + $0x3a0] sm:$0xff] %v2025
        %2282 = vst [vmem:[#allocation2 + $0x3a8] sm:$0xff] %v2026
        %2283 = vst [vmem:[#allocation2 + $0x3b0] sm:$0xff] %v2027
        %2284 = vst [vmem:[#allocation2 + $0x3b8] sm:$0xff] %v2028
        %2285 = vst [vmem:[#allocation2 + $0x3c0] sm:$0xff] %v2029
        %2286 = vst [vmem:[#allocation2 + $0x3c8] sm:$0xff] %v2030
        %2287 = vst [vmem:[#allocation2 + $0x3d0] sm:$0xff] %v2031
        %2288 = vst [vmem:[#allocation2 + $0x3d8] sm:$0xff] %v2032
        %2289 = vst [vmem:[#allocation2 + $0x3e0] sm:$0xff] %v2033
        %2290 = vst [vmem:[#allocation2 + $0x3e8] sm:$0xff] %v2034
        %2291 = vst [vmem:[#allocation2 + $0x3f0] sm:$0xff] %v2035
        %2292 = vst [vmem:[#allocation2 + $0x3f8] sm:$0xff] %v2036
        %2293 = vst [vmem:[#allocation2 + $0x400] sm:$0xff] %v2037
        %2294 = vst [vmem:[#allocation2 + $0x408] sm:$0xff] %v2038
        %2295 = vst [vmem:[#allocation2 + $0x410] sm:$0xff] %v2039
        %2296 = vst [vmem:[#allocation2 + $0x418] sm:$0xff] %v2040
        %2297 = vst [vmem:[#allocation2 + $0x420] sm:$0xff] %v2041
        %2298 = vst [vmem:[#allocation2 + $0x428] sm:$0xff] %v2042
        %2299 = vst [vmem:[#allocation2 + $0x430] sm:$0xff] %v2043
        %2300 = vst [vmem:[#allocation2 + $0x438] sm:$0xff] %v2044
        %2301 = vst [vmem:[#allocation2 + $0x440] sm:$0xff] %v2045
        %2302 = vst [vmem:[#allocation2 + $0x448] sm:$0xff] %v2046
        %2303 = vst [vmem:[#allocation2 + $0x450] sm:$0xff] %v2047
        %2304 = vst [vmem:[#allocation2 + $0x458] sm:$0xff] %v2048
        %2305 = vst [vmem:[#allocation2 + $0x460] sm:$0xff] %v2049
        %2306 = vst [vmem:[#allocation2 + $0x468] sm:$0xff] %v2050
        %2307 = vst [vmem:[#allocation2 + $0x470] sm:$0xff] %v2051
        %2308 = vst [vmem:[#allocation2 + $0x478] sm:$0xff] %v2052
        %2309 = vst [vmem:[#allocation2 + $0x480] sm:$0xff] %v2053
        %2310 = vst [vmem:[#allocation2 + $0x488] sm:$0xff] %v2054
        %2311 = vst [vmem:[#allocation2 + $0x490] sm:$0xff] %v2055
        %2312 = vst [vmem:[#allocation2 + $0x498] sm:$0xff] %v2056
        %2313 = vst [vmem:[#allocation2 + $0x4a0] sm:$0xff] %v2057
        %2314 = vst [vmem:[#allocation2 + $0x4a8] sm:$0xff] %v2058
        %2315 = vst [vmem:[#allocation2 + $0x4b0] sm:$0xff] %v2059
        %2316 = vst [vmem:[#allocation2 + $0x4b8] sm:$0xff] %v2060
        %2317 = vst [vmem:[#allocation2 + $0x4c0] sm:$0xff] %v2061
        %2318 = vst [vmem:[#allocation2 + $0x4c8] sm:$0xff] %v2062
        %2319 = vst [vmem:[#allocation2 + $0x4d0] sm:$0xff] %v2063
        %2320 = vst [vmem:[#allocation2 + $0x4d8] sm:$0xff] %v2064
        %2321 = vst [vmem:[#allocation2 + $0x4e0] sm:$0xff] %v2065
        %2322 = vst [vmem:[#allocation2 + $0x4e8] sm:$0xff] %v2066
        %2323 = vst [vmem:[#allocation2 + $0x4f0] sm:$0xff] %v2067
        %2324 = vst [vmem:[#allocation2 + $0x4f8] sm:$0xff] %v2068
        %2325 = vst [vmem:[#allocation2 + $0x500] sm:$0xff] %v2069
        %2326 = vst [vmem:[#allocation2 + $0x508] sm:$0xff] %v2070
        %2327 = vst [vmem:[#allocation2 + $0x510] sm:$0xff] %v2071
        %2328 = vst [vmem:[#allocation2 + $0x518] sm:$0xff] %v2072
        %2329 = vst [vmem:[#allocation2 + $0x520] sm:$0xff] %v2073
        %2330 = vst [vmem:[#allocation2 + $0x528] sm:$0xff] %v2074
        %2331 = vst [vmem:[#allocation2 + $0x530] sm:$0xff] %v2075
        %2332 = vst [vmem:[#allocation2 + $0x538] sm:$0xff] %v2076
        %2333 = vst [vmem:[#allocation2 + $0x540] sm:$0xff] %v2077
        %2334 = vst [vmem:[#allocation2 + $0x548] sm:$0xff] %v2078
        %2335 = vst [vmem:[#allocation2 + $0x550] sm:$0xff] %v2079
        %2336 = vst [vmem:[#allocation2 + $0x558] sm:$0xff] %v2080
        %2337 = vst [vmem:[#allocation2 + $0x560] sm:$0xff] %v2081
        %2338 = vst [vmem:[#allocation2 + $0x568] sm:$0xff] %v2082
        %2339 = vst [vmem:[#allocation2 + $0x570] sm:$0xff] %v2083
        %2340 = vst [vmem:[#allocation2 + $0x578] sm:$0xff] %v2084
        %2341 = vst [vmem:[#allocation2 + $0x580] sm:$0xff] %v2085
        %2342 = vst [vmem:[#allocation2 + $0x588] sm:$0xff] %v2086
        %2343 = vst [vmem:[#allocation2 + $0x590] sm:$0xff] %v2087
        %2344 = vst [vmem:[#allocation2 + $0x598] sm:$0xff] %v2088
        %2345 = vst [vmem:[#allocation2 + $0x5a0] sm:$0xff] %v2089
        %2346 = vst [vmem:[#allocation2 + $0x5a8] sm:$0xff] %v2090
        %2347 = vst [vmem:[#allocation2 + $0x5b0] sm:$0xff] %v2091
        %2348 = vst [vmem:[#allocation2 + $0x5b8] sm:$0xff] %v2092
        %2349 = vst [vmem:[#allocation2 + $0x5c0] sm:$0xff] %v2093
        %2350 = vst [vmem:[#allocation2 + $0x5c8] sm:$0xff] %v2094
        %2351 = vst [vmem:[#allocation2 + $0x5d0] sm:$0xff] %v2095
        %2352 = vst [vmem:[#allocation2 + $0x5d8] sm:$0xff] %v2096
        %2353 = vst [vmem:[#allocation2 + $0x5e0] sm:$0xff] %v2097
        %2354 = vst [vmem:[#allocation2 + $0x5e8] sm:$0xff] %v2098
        %2355 = vst [vmem:[#allocation2 + $0x5f0] sm:$0xff] %v2099
        %2356 = vst [vmem:[#allocation2 + $0x5f8] sm:$0xff] %v2100
        %2357 = vst [vmem:[#allocation2 + $0x600] sm:$0xff] %v2101
        %2358 = vst [vmem:[#allocation2 + $0x608] sm:$0xff] %v2102
        %2359 = vst [vmem:[#allocation2 + $0x610] sm:$0xff] %v2103
        %2360 = vst [vmem:[#allocation2 + $0x618] sm:$0xff] %v2104
        %2361 = vst [vmem:[#allocation2 + $0x620] sm:$0xff] %v2105
        %2362 = vst [vmem:[#allocation2 + $0x628] sm:$0xff] %v2106
        %2363 = vst [vmem:[#allocation2 + $0x630] sm:$0xff] %v2107
        %2364 = vst [vmem:[#allocation2 + $0x638] sm:$0xff] %v2108
        %2365 = vst [vmem:[#allocation2 + $0x640] sm:$0xff] %v2109
        %2366 = vst [vmem:[#allocation2 + $0x648] sm:$0xff] %v2110
        %2367 = vst [vmem:[#allocation2 + $0x650] sm:$0xff] %v2111
        %2368 = vst [vmem:[#allocation2 + $0x658] sm:$0xff] %v2112
        %2369 = vst [vmem:[#allocation2 + $0x660] sm:$0xff] %v2113
        %2370 = vst [vmem:[#allocation2 + $0x668] sm:$0xff] %v2114
        %2371 = vst [vmem:[#allocation2 + $0x670] sm:$0xff] %v2115
        %2372 = vst [vmem:[#allocation2 + $0x678] sm:$0xff] %v2116
        %2373 = vst [vmem:[#allocation2 + $0x680] sm:$0xff] %v2117
        %2374 = vst [vmem:[#allocation2 + $0x688] sm:$0xff] %v2118
        %2375 = vst [vmem:[#allocation2 + $0x690] sm:$0xff] %v2119
        %2376 = vst [vmem:[#allocation2 + $0x698] sm:$0xff] %v2120
        %2377 = vst [vmem:[#allocation2 + $0x6a0] sm:$0xff] %v2121
        %2378 = vst [vmem:[#allocation2 + $0x6a8] sm:$0xff] %v2122
        %2379 = vst [vmem:[#allocation2 + $0x6b0] sm:$0xff] %v2123
        %2380 = vst [vmem:[#allocation2 + $0x6b8] sm:$0xff] %v2124
        %2381 = vst [vmem:[#allocation2 + $0x6c0] sm:$0xff] %v2125
        %2382 = vst [vmem:[#allocation2 + $0x6c8] sm:$0xff] %v2126
        %2383 = vst [vmem:[#allocation2 + $0x6d0] sm:$0xff] %v2127
        %2384 = vst [vmem:[#allocation2 + $0x6d8] sm:$0xff] %v2128
        %2385 = vst [vmem:[#allocation2 + $0x6e0] sm:$0xff] %v2129
        %2386 = vst [vmem:[#allocation2 + $0x6e8] sm:$0xff] %v2130
        %2387 = vst [vmem:[#allocation2 + $0x6f0] sm:$0xff] %v2131
        %2388 = vst [vmem:[#allocation2 + $0x6f8] sm:$0xff] %v2132
        %2389 = vst [vmem:[#allocation2 + $0x700] sm:$0xff] %v2133
        %2390 = vst [vmem:[#allocation2 + $0x708] sm:$0xff] %v2134
        %2391 = vst [vmem:[#allocation2 + $0x710] sm:$0xff] %v2135
        %2392 = vst [vmem:[#allocation2 + $0x718] sm:$0xff] %v2136
        %2393 = vst [vmem:[#allocation2 + $0x720] sm:$0xff] %v2137
        %2394 = vst [vmem:[#allocation2 + $0x728] sm:$0xff] %v2138
        %2395 = vst [vmem:[#allocation2 + $0x730] sm:$0xff] %v2139
        %2396 = vst [vmem:[#allocation2 + $0x738] sm:$0xff] %v2140
        %2397 = vst [vmem:[#allocation2 + $0x740] sm:$0xff] %v2141
        %2398 = vst [vmem:[#allocation2 + $0x748] sm:$0xff] %v2142
        %2399 = vst [vmem:[#allocation2 + $0x750] sm:$0xff] %v2143
        %2400 = vst [vmem:[#allocation2 + $0x758] sm:$0xff] %v2144
        %2401 = vst [vmem:[#allocation2 + $0x760] sm:$0xff] %v2145
        %2402 = vst [vmem:[#allocation2 + $0x768] sm:$0xff] %v2146
        %2403 = vst [vmem:[#allocation2 + $0x770] sm:$0xff] %v2147
        %2404 = vst [vmem:[#allocation2 + $0x778] sm:$0xff] %v2148
        %2405 = vst [vmem:[#allocation2 + $0x780] sm:$0xff] %v2149
        %2406 = vst [vmem:[#allocation2 + $0x788] sm:$0xff] %v2150
        %2407 = vst [vmem:[#allocation2 + $0x790] sm:$0xff] %v2151
        %2408 = vst [vmem:[#allocation2 + $0x798] sm:$0xff] %v2152
        %2409 = vst [vmem:[#allocation2 + $0x7a0] sm:$0xff] %v2153
        %2410 = vst [vmem:[#allocation2 + $0x7a8] sm:$0xff] %v2154
        %2411 = vst [vmem:[#allocation2 + $0x7b0] sm:$0xff] %v2155
        %2412 = vst [vmem:[#allocation2 + $0x7b8] sm:$0xff] %v2156
        %2413 = vst [vmem:[#allocation2 + $0x7c0] sm:$0xff] %v2157
        %2414 = vst [vmem:[#allocation2 + $0x7c8] sm:$0xff] %v2158
        %2415 = vst [vmem:[#allocation2 + $0x7d0] sm:$0xff] %v2159
        %2416 = vst [vmem:[#allocation2 + $0x7d8] sm:$0xff] %v2160
        %2417 = vst [vmem:[#allocation2 + $0x7e0] sm:$0xff] %v2161
        %2418 = vst [vmem:[#allocation2 + $0x7e8] sm:$0xff] %v2162
        %2419 = vst [vmem:[#allocation2 + $0x7f0] sm:$0xff] %v2163
        %2420 = vst [vmem:[#allocation2 + $0x7f8] sm:$0xff] %v2164
        %p2421 = scmp.eq.s32.totalorder %s29, 1
        // Predicated region
        $region41: #{tpu_custom_call.1} parent=27 // pred_check
          %p2422 = pneg %p2421
        $region42: #{tpu_custom_call.1} parent=27 // pred_check_branch
          %2424 = sbr.rel (%p2422) target = $region44
        $region43: #{tpu_custom_call.1} parent=27 // pred_region
          %v2425 = vld [vmem:[#allocation2] sm:$0xff]
          %v2426 = vld [vmem:[#allocation2 + $0x8] sm:$0xff]
          %v2427 = vld [vmem:[#allocation2 + $0x10] sm:$0xff]
          %v2428 = vld [vmem:[#allocation2 + $0x18] sm:$0xff]
          %v2429 = vld [vmem:[#allocation2 + $0x20] sm:$0xff]
          %v2430 = vld [vmem:[#allocation2 + $0x28] sm:$0xff]
          %v2431 = vld [vmem:[#allocation2 + $0x30] sm:$0xff]
          %v2432 = vld [vmem:[#allocation2 + $0x38] sm:$0xff]
          %v2433 = vld [vmem:[#allocation2 + $0x40] sm:$0xff]
          %v2434 = vld [vmem:[#allocation2 + $0x48] sm:$0xff]
          %v2435 = vld [vmem:[#allocation2 + $0x50] sm:$0xff]
          %v2436 = vld [vmem:[#allocation2 + $0x58] sm:$0xff]
          %v2437 = vld [vmem:[#allocation2 + $0x60] sm:$0xff]
          %v2438 = vld [vmem:[#allocation2 + $0x68] sm:$0xff]
          %v2439 = vld [vmem:[#allocation2 + $0x70] sm:$0xff]
          %v2440 = vld [vmem:[#allocation2 + $0x78] sm:$0xff]
          %v2441 = vld [vmem:[#allocation2 + $0x80] sm:$0xff]
          %v2442 = vld [vmem:[#allocation2 + $0x88] sm:$0xff]
          %v2443 = vld [vmem:[#allocation2 + $0x90] sm:$0xff]
          %v2444 = vld [vmem:[#allocation2 + $0x98] sm:$0xff]
          %v2445 = vld [vmem:[#allocation2 + $0xa0] sm:$0xff]
          %v2446 = vld [vmem:[#allocation2 + $0xa8] sm:$0xff]
          %v2447 = vld [vmem:[#allocation2 + $0xb0] sm:$0xff]
          %v2448 = vld [vmem:[#allocation2 + $0xb8] sm:$0xff]
          %v2449 = vld [vmem:[#allocation2 + $0xc0] sm:$0xff]
          %v2450 = vld [vmem:[#allocation2 + $0xc8] sm:$0xff]
          %v2451 = vld [vmem:[#allocation2 + $0xd0] sm:$0xff]
          %v2452 = vld [vmem:[#allocation2 + $0xd8] sm:$0xff]
          %v2453 = vld [vmem:[#allocation2 + $0xe0] sm:$0xff]
          %v2454 = vld [vmem:[#allocation2 + $0xe8] sm:$0xff]
          %v2455 = vld [vmem:[#allocation2 + $0xf0] sm:$0xff]
          %v2456 = vld [vmem:[#allocation2 + $0xf8] sm:$0xff]
          %v2457 = vld [vmem:[#allocation2 + $0x100] sm:$0xff]
          %v2458 = vld [vmem:[#allocation2 + $0x108] sm:$0xff]
          %v2459 = vld [vmem:[#allocation2 + $0x110] sm:$0xff]
          %v2460 = vld [vmem:[#allocation2 + $0x118] sm:$0xff]
          %v2461 = vld [vmem:[#allocation2 + $0x120] sm:$0xff]
          %v2462 = vld [vmem:[#allocation2 + $0x128] sm:$0xff]
          %v2463 = vld [vmem:[#allocation2 + $0x130] sm:$0xff]
          %v2464 = vld [vmem:[#allocation2 + $0x138] sm:$0xff]
          %v2465 = vld [vmem:[#allocation2 + $0x140] sm:$0xff]
          %v2466 = vld [vmem:[#allocation2 + $0x148] sm:$0xff]
          %v2467 = vld [vmem:[#allocation2 + $0x150] sm:$0xff]
          %v2468 = vld [vmem:[#allocation2 + $0x158] sm:$0xff]
          %v2469 = vld [vmem:[#allocation2 + $0x160] sm:$0xff]
          %v2470 = vld [vmem:[#allocation2 + $0x168] sm:$0xff]
          %v2471 = vld [vmem:[#allocation2 + $0x170] sm:$0xff]
          %v2472 = vld [vmem:[#allocation2 + $0x178] sm:$0xff]
          %v2473 = vld [vmem:[#allocation2 + $0x180] sm:$0xff]
          %v2474 = vld [vmem:[#allocation2 + $0x188] sm:$0xff]
          %v2475 = vld [vmem:[#allocation2 + $0x190] sm:$0xff]
          %v2476 = vld [vmem:[#allocation2 + $0x198] sm:$0xff]
          %v2477 = vld [vmem:[#allocation2 + $0x1a0] sm:$0xff]
          %v2478 = vld [vmem:[#allocation2 + $0x1a8] sm:$0xff]
          %v2479 = vld [vmem:[#allocation2 + $0x1b0] sm:$0xff]
          %v2480 = vld [vmem:[#allocation2 + $0x1b8] sm:$0xff]
          %v2481 = vld [vmem:[#allocation2 + $0x1c0] sm:$0xff]
          %v2482 = vld [vmem:[#allocation2 + $0x1c8] sm:$0xff]
          %v2483 = vld [vmem:[#allocation2 + $0x1d0] sm:$0xff]
          %v2484 = vld [vmem:[#allocation2 + $0x1d8] sm:$0xff]
          %v2485 = vld [vmem:[#allocation2 + $0x1e0] sm:$0xff]
          %v2486 = vld [vmem:[#allocation2 + $0x1e8] sm:$0xff]
          %v2487 = vld [vmem:[#allocation2 + $0x1f0] sm:$0xff]
          %v2488 = vld [vmem:[#allocation2 + $0x1f8] sm:$0xff]
          %v2489 = vld [vmem:[#allocation2 + $0x200] sm:$0xff]
          %v2490 = vld [vmem:[#allocation2 + $0x208] sm:$0xff]
          %v2491 = vld [vmem:[#allocation2 + $0x210] sm:$0xff]
          %v2492 = vld [vmem:[#allocation2 + $0x218] sm:$0xff]
          %v2493 = vld [vmem:[#allocation2 + $0x220] sm:$0xff]
          %v2494 = vld [vmem:[#allocation2 + $0x228] sm:$0xff]
          %v2495 = vld [vmem:[#allocation2 + $0x230] sm:$0xff]
          %v2496 = vld [vmem:[#allocation2 + $0x238] sm:$0xff]
          %v2497 = vld [vmem:[#allocation2 + $0x240] sm:$0xff]
          %v2498 = vld [vmem:[#allocation2 + $0x248] sm:$0xff]
          %v2499 = vld [vmem:[#allocation2 + $0x250] sm:$0xff]
          %v2500 = vld [vmem:[#allocation2 + $0x258] sm:$0xff]
          %v2501 = vld [vmem:[#allocation2 + $0x260] sm:$0xff]
          %v2502 = vld [vmem:[#allocation2 + $0x268] sm:$0xff]
          %v2503 = vld [vmem:[#allocation2 + $0x270] sm:$0xff]
          %v2504 = vld [vmem:[#allocation2 + $0x278] sm:$0xff]
          %v2505 = vld [vmem:[#allocation2 + $0x280] sm:$0xff]
          %v2506 = vld [vmem:[#allocation2 + $0x288] sm:$0xff]
          %v2507 = vld [vmem:[#allocation2 + $0x290] sm:$0xff]
          %v2508 = vld [vmem:[#allocation2 + $0x298] sm:$0xff]
          %v2509 = vld [vmem:[#allocation2 + $0x2a0] sm:$0xff]
          %v2510 = vld [vmem:[#allocation2 + $0x2a8] sm:$0xff]
          %v2511 = vld [vmem:[#allocation2 + $0x2b0] sm:$0xff]
          %v2512 = vld [vmem:[#allocation2 + $0x2b8] sm:$0xff]
          %v2513 = vld [vmem:[#allocation2 + $0x2c0] sm:$0xff]
          %v2514 = vld [vmem:[#allocation2 + $0x2c8] sm:$0xff]
          %v2515 = vld [vmem:[#allocation2 + $0x2d0] sm:$0xff]
          %v2516 = vld [vmem:[#allocation2 + $0x2d8] sm:$0xff]
          %v2517 = vld [vmem:[#allocation2 + $0x2e0] sm:$0xff]
          %v2518 = vld [vmem:[#allocation2 + $0x2e8] sm:$0xff]
          %v2519 = vld [vmem:[#allocation2 + $0x2f0] sm:$0xff]
          %v2520 = vld [vmem:[#allocation2 + $0x2f8] sm:$0xff]
          %v2521 = vld [vmem:[#allocation2 + $0x300] sm:$0xff]
          %v2522 = vld [vmem:[#allocation2 + $0x308] sm:$0xff]
          %v2523 = vld [vmem:[#allocation2 + $0x310] sm:$0xff]
          %v2524 = vld [vmem:[#allocation2 + $0x318] sm:$0xff]
          %v2525 = vld [vmem:[#allocation2 + $0x320] sm:$0xff]
          %v2526 = vld [vmem:[#allocation2 + $0x328] sm:$0xff]
          %v2527 = vld [vmem:[#allocation2 + $0x330] sm:$0xff]
          %v2528 = vld [vmem:[#allocation2 + $0x338] sm:$0xff]
          %v2529 = vld [vmem:[#allocation2 + $0x340] sm:$0xff]
          %v2530 = vld [vmem:[#allocation2 + $0x348] sm:$0xff]
          %v2531 = vld [vmem:[#allocation2 + $0x350] sm:$0xff]
          %v2532 = vld [vmem:[#allocation2 + $0x358] sm:$0xff]
          %v2533 = vld [vmem:[#allocation2 + $0x360] sm:$0xff]
          %v2534 = vld [vmem:[#allocation2 + $0x368] sm:$0xff]
          %v2535 = vld [vmem:[#allocation2 + $0x370] sm:$0xff]
          %v2536 = vld [vmem:[#allocation2 + $0x378] sm:$0xff]
          %v2537 = vld [vmem:[#allocation2 + $0x380] sm:$0xff]
          %v2538 = vld [vmem:[#allocation2 + $0x388] sm:$0xff]
          %v2539 = vld [vmem:[#allocation2 + $0x390] sm:$0xff]
          %v2540 = vld [vmem:[#allocation2 + $0x398] sm:$0xff]
          %v2541 = vld [vmem:[#allocation2 + $0x3a0] sm:$0xff]
          %v2542 = vld [vmem:[#allocation2 + $0x3a8] sm:$0xff]
          %v2543 = vld [vmem:[#allocation2 + $0x3b0] sm:$0xff]
          %v2544 = vld [vmem:[#allocation2 + $0x3b8] sm:$0xff]
          %v2545 = vld [vmem:[#allocation2 + $0x3c0] sm:$0xff]
          %v2546 = vld [vmem:[#allocation2 + $0x3c8] sm:$0xff]
          %v2547 = vld [vmem:[#allocation2 + $0x3d0] sm:$0xff]
          %v2548 = vld [vmem:[#allocation2 + $0x3d8] sm:$0xff]
          %v2549 = vld [vmem:[#allocation2 + $0x3e0] sm:$0xff]
          %v2550 = vld [vmem:[#allocation2 + $0x3e8] sm:$0xff]
          %v2551 = vld [vmem:[#allocation2 + $0x3f0] sm:$0xff]
          %v2552 = vld [vmem:[#allocation2 + $0x3f8] sm:$0xff]
          %v2553 = vld [vmem:[#allocation2 + $0x400] sm:$0xff]
          %v2554 = vld [vmem:[#allocation2 + $0x408] sm:$0xff]
          %v2555 = vld [vmem:[#allocation2 + $0x410] sm:$0xff]
          %v2556 = vld [vmem:[#allocation2 + $0x418] sm:$0xff]
          %v2557 = vld [vmem:[#allocation2 + $0x420] sm:$0xff]
          %v2558 = vld [vmem:[#allocation2 + $0x428] sm:$0xff]
          %v2559 = vld [vmem:[#allocation2 + $0x430] sm:$0xff]
          %v2560 = vld [vmem:[#allocation2 + $0x438] sm:$0xff]
          %v2561 = vld [vmem:[#allocation2 + $0x440] sm:$0xff]
          %v2562 = vld [vmem:[#allocation2 + $0x448] sm:$0xff]
          %v2563 = vld [vmem:[#allocation2 + $0x450] sm:$0xff]
          %v2564 = vld [vmem:[#allocation2 + $0x458] sm:$0xff]
          %v2565 = vld [vmem:[#allocation2 + $0x460] sm:$0xff]
          %v2566 = vld [vmem:[#allocation2 + $0x468] sm:$0xff]
          %v2567 = vld [vmem:[#allocation2 + $0x470] sm:$0xff]
          %v2568 = vld [vmem:[#allocation2 + $0x478] sm:$0xff]
          %v2569 = vld [vmem:[#allocation2 + $0x480] sm:$0xff]
          %v2570 = vld [vmem:[#allocation2 + $0x488] sm:$0xff]
          %v2571 = vld [vmem:[#allocation2 + $0x490] sm:$0xff]
          %v2572 = vld [vmem:[#allocation2 + $0x498] sm:$0xff]
          %v2573 = vld [vmem:[#allocation2 + $0x4a0] sm:$0xff]
          %v2574 = vld [vmem:[#allocation2 + $0x4a8] sm:$0xff]
          %v2575 = vld [vmem:[#allocation2 + $0x4b0] sm:$0xff]
          %v2576 = vld [vmem:[#allocation2 + $0x4b8] sm:$0xff]
          %v2577 = vld [vmem:[#allocation2 + $0x4c0] sm:$0xff]
          %v2578 = vld [vmem:[#allocation2 + $0x4c8] sm:$0xff]
          %v2579 = vld [vmem:[#allocation2 + $0x4d0] sm:$0xff]
          %v2580 = vld [vmem:[#allocation2 + $0x4d8] sm:$0xff]
          %v2581 = vld [vmem:[#allocation2 + $0x4e0] sm:$0xff]
          %v2582 = vld [vmem:[#allocation2 + $0x4e8] sm:$0xff]
          %v2583 = vld [vmem:[#allocation2 + $0x4f0] sm:$0xff]
          %v2584 = vld [vmem:[#allocation2 + $0x4f8] sm:$0xff]
          %v2585 = vld [vmem:[#allocation2 + $0x500] sm:$0xff]
          %v2586 = vld [vmem:[#allocation2 + $0x508] sm:$0xff]
          %v2587 = vld [vmem:[#allocation2 + $0x510] sm:$0xff]
          %v2588 = vld [vmem:[#allocation2 + $0x518] sm:$0xff]
          %v2589 = vld [vmem:[#allocation2 + $0x520] sm:$0xff]
          %v2590 = vld [vmem:[#allocation2 + $0x528] sm:$0xff]
          %v2591 = vld [vmem:[#allocation2 + $0x530] sm:$0xff]
          %v2592 = vld [vmem:[#allocation2 + $0x538] sm:$0xff]
          %v2593 = vld [vmem:[#allocation2 + $0x540] sm:$0xff]
          %v2594 = vld [vmem:[#allocation2 + $0x548] sm:$0xff]
          %v2595 = vld [vmem:[#allocation2 + $0x550] sm:$0xff]
          %v2596 = vld [vmem:[#allocation2 + $0x558] sm:$0xff]
          %v2597 = vld [vmem:[#allocation2 + $0x560] sm:$0xff]
          %v2598 = vld [vmem:[#allocation2 + $0x568] sm:$0xff]
          %v2599 = vld [vmem:[#allocation2 + $0x570] sm:$0xff]
          %v2600 = vld [vmem:[#allocation2 + $0x578] sm:$0xff]
          %v2601 = vld [vmem:[#allocation2 + $0x580] sm:$0xff]
          %v2602 = vld [vmem:[#allocation2 + $0x588] sm:$0xff]
          %v2603 = vld [vmem:[#allocation2 + $0x590] sm:$0xff]
          %v2604 = vld [vmem:[#allocation2 + $0x598] sm:$0xff]
          %v2605 = vld [vmem:[#allocation2 + $0x5a0] sm:$0xff]
          %v2606 = vld [vmem:[#allocation2 + $0x5a8] sm:$0xff]
          %v2607 = vld [vmem:[#allocation2 + $0x5b0] sm:$0xff]
          %v2608 = vld [vmem:[#allocation2 + $0x5b8] sm:$0xff]
          %v2609 = vld [vmem:[#allocation2 + $0x5c0] sm:$0xff]
          %v2610 = vld [vmem:[#allocation2 + $0x5c8] sm:$0xff]
          %v2611 = vld [vmem:[#allocation2 + $0x5d0] sm:$0xff]
          %v2612 = vld [vmem:[#allocation2 + $0x5d8] sm:$0xff]
          %v2613 = vld [vmem:[#allocation2 + $0x5e0] sm:$0xff]
          %v2614 = vld [vmem:[#allocation2 + $0x5e8] sm:$0xff]
          %v2615 = vld [vmem:[#allocation2 + $0x5f0] sm:$0xff]
          %v2616 = vld [vmem:[#allocation2 + $0x5f8] sm:$0xff]
          %v2617 = vld [vmem:[#allocation2 + $0x600] sm:$0xff]
          %v2618 = vld [vmem:[#allocation2 + $0x608] sm:$0xff]
          %v2619 = vld [vmem:[#allocation2 + $0x610] sm:$0xff]
          %v2620 = vld [vmem:[#allocation2 + $0x618] sm:$0xff]
          %v2621 = vld [vmem:[#allocation2 + $0x620] sm:$0xff]
          %v2622 = vld [vmem:[#allocation2 + $0x628] sm:$0xff]
          %v2623 = vld [vmem:[#allocation2 + $0x630] sm:$0xff]
          %v2624 = vld [vmem:[#allocation2 + $0x638] sm:$0xff]
          %v2625 = vld [vmem:[#allocation2 + $0x640] sm:$0xff]
          %v2626 = vld [vmem:[#allocation2 + $0x648] sm:$0xff]
          %v2627 = vld [vmem:[#allocation2 + $0x650] sm:$0xff]
          %v2628 = vld [vmem:[#allocation2 + $0x658] sm:$0xff]
          %v2629 = vld [vmem:[#allocation2 + $0x660] sm:$0xff]
          %v2630 = vld [vmem:[#allocation2 + $0x668] sm:$0xff]
          %v2631 = vld [vmem:[#allocation2 + $0x670] sm:$0xff]
          %v2632 = vld [vmem:[#allocation2 + $0x678] sm:$0xff]
          %v2633 = vld [vmem:[#allocation2 + $0x680] sm:$0xff]
          %v2634 = vld [vmem:[#allocation2 + $0x688] sm:$0xff]
          %v2635 = vld [vmem:[#allocation2 + $0x690] sm:$0xff]
          %v2636 = vld [vmem:[#allocation2 + $0x698] sm:$0xff]
          %v2637 = vld [vmem:[#allocation2 + $0x6a0] sm:$0xff]
          %v2638 = vld [vmem:[#allocation2 + $0x6a8] sm:$0xff]
          %v2639 = vld [vmem:[#allocation2 + $0x6b0] sm:$0xff]
          %v2640 = vld [vmem:[#allocation2 + $0x6b8] sm:$0xff]
          %v2641 = vld [vmem:[#allocation2 + $0x6c0] sm:$0xff]
          %v2642 = vld [vmem:[#allocation2 + $0x6c8] sm:$0xff]
          %v2643 = vld [vmem:[#allocation2 + $0x6d0] sm:$0xff]
          %v2644 = vld [vmem:[#allocation2 + $0x6d8] sm:$0xff]
          %v2645 = vld [vmem:[#allocation2 + $0x6e0] sm:$0xff]
          %v2646 = vld [vmem:[#allocation2 + $0x6e8] sm:$0xff]
          %v2647 = vld [vmem:[#allocation2 + $0x6f0] sm:$0xff]
          %v2648 = vld [vmem:[#allocation2 + $0x6f8] sm:$0xff]
          %v2649 = vld [vmem:[#allocation2 + $0x700] sm:$0xff]
          %v2650 = vld [vmem:[#allocation2 + $0x708] sm:$0xff]
          %v2651 = vld [vmem:[#allocation2 + $0x710] sm:$0xff]
          %v2652 = vld [vmem:[#allocation2 + $0x718] sm:$0xff]
          %v2653 = vld [vmem:[#allocation2 + $0x720] sm:$0xff]
          %v2654 = vld [vmem:[#allocation2 + $0x728] sm:$0xff]
          %v2655 = vld [vmem:[#allocation2 + $0x730] sm:$0xff]
          %v2656 = vld [vmem:[#allocation2 + $0x738] sm:$0xff]
          %v2657 = vld [vmem:[#allocation2 + $0x740] sm:$0xff]
          %v2658 = vld [vmem:[#allocation2 + $0x748] sm:$0xff]
          %v2659 = vld [vmem:[#allocation2 + $0x750] sm:$0xff]
          %v2660 = vld [vmem:[#allocation2 + $0x758] sm:$0xff]
          %v2661 = vld [vmem:[#allocation2 + $0x760] sm:$0xff]
          %v2662 = vld [vmem:[#allocation2 + $0x768] sm:$0xff]
          %v2663 = vld [vmem:[#allocation2 + $0x770] sm:$0xff]
          %v2664 = vld [vmem:[#allocation2 + $0x778] sm:$0xff]
          %v2665 = vld [vmem:[#allocation2 + $0x780] sm:$0xff]
          %v2666 = vld [vmem:[#allocation2 + $0x788] sm:$0xff]
          %v2667 = vld [vmem:[#allocation2 + $0x790] sm:$0xff]
          %v2668 = vld [vmem:[#allocation2 + $0x798] sm:$0xff]
          %v2669 = vld [vmem:[#allocation2 + $0x7a0] sm:$0xff]
          %v2670 = vld [vmem:[#allocation2 + $0x7a8] sm:$0xff]
          %v2671 = vld [vmem:[#allocation2 + $0x7b0] sm:$0xff]
          %v2672 = vld [vmem:[#allocation2 + $0x7b8] sm:$0xff]
          %v2673 = vld [vmem:[#allocation2 + $0x7c0] sm:$0xff]
          %v2674 = vld [vmem:[#allocation2 + $0x7c8] sm:$0xff]
          %v2675 = vld [vmem:[#allocation2 + $0x7d0] sm:$0xff]
          %v2676 = vld [vmem:[#allocation2 + $0x7d8] sm:$0xff]
          %v2677 = vld [vmem:[#allocation2 + $0x7e0] sm:$0xff]
          %v2678 = vld [vmem:[#allocation2 + $0x7e8] sm:$0xff]
          %v2679 = vld [vmem:[#allocation2 + $0x7f0] sm:$0xff]
          %v2680 = vld [vmem:[#allocation2 + $0x7f8] sm:$0xff]
          %2681 = vst [vmem:[%s232] sm:$0xff] %v2425
          %2682 = vst [vmem:[%s232 + $0x8] sm:$0xff] %v2426
          %2683 = vst [vmem:[%s232 + $0x10] sm:$0xff] %v2427
          %2684 = vst [vmem:[%s232 + $0x18] sm:$0xff] %v2428
          %2685 = vst [vmem:[%s232 + $0x20] sm:$0xff] %v2429
          %2686 = vst [vmem:[%s232 + $0x28] sm:$0xff] %v2430
          %2687 = vst [vmem:[%s232 + $0x30] sm:$0xff] %v2431
          %2688 = vst [vmem:[%s232 + $0x38] sm:$0xff] %v2432
          %2689 = vst [vmem:[%s232 + $0x40] sm:$0xff] %v2433
          %2690 = vst [vmem:[%s232 + $0x48] sm:$0xff] %v2434
          %2691 = vst [vmem:[%s232 + $0x50] sm:$0xff] %v2435
          %2692 = vst [vmem:[%s232 + $0x58] sm:$0xff] %v2436
          %2693 = vst [vmem:[%s232 + $0x60] sm:$0xff] %v2437
          %2694 = vst [vmem:[%s232 + $0x68] sm:$0xff] %v2438
          %2695 = vst [vmem:[%s232 + $0x70] sm:$0xff] %v2439
          %2696 = vst [vmem:[%s232 + $0x78] sm:$0xff] %v2440
          %2697 = vst [vmem:[%s232 + $0x80] sm:$0xff] %v2441
          %2698 = vst [vmem:[%s232 + $0x88] sm:$0xff] %v2442
          %2699 = vst [vmem:[%s232 + $0x90] sm:$0xff] %v2443
          %2700 = vst [vmem:[%s232 + $0x98] sm:$0xff] %v2444
          %2701 = vst [vmem:[%s232 + $0xa0] sm:$0xff] %v2445
          %2702 = vst [vmem:[%s232 + $0xa8] sm:$0xff] %v2446
          %2703 = vst [vmem:[%s232 + $0xb0] sm:$0xff] %v2447
          %2704 = vst [vmem:[%s232 + $0xb8] sm:$0xff] %v2448
          %2705 = vst [vmem:[%s232 + $0xc0] sm:$0xff] %v2449
          %2706 = vst [vmem:[%s232 + $0xc8] sm:$0xff] %v2450
          %2707 = vst [vmem:[%s232 + $0xd0] sm:$0xff] %v2451
          %2708 = vst [vmem:[%s232 + $0xd8] sm:$0xff] %v2452
          %2709 = vst [vmem:[%s232 + $0xe0] sm:$0xff] %v2453
          %2710 = vst [vmem:[%s232 + $0xe8] sm:$0xff] %v2454
          %2711 = vst [vmem:[%s232 + $0xf0] sm:$0xff] %v2455
          %2712 = vst [vmem:[%s232 + $0xf8] sm:$0xff] %v2456
          %2713 = vst [vmem:[%s232 + $0x100] sm:$0xff] %v2457
          %2714 = vst [vmem:[%s232 + $0x108] sm:$0xff] %v2458
          %2715 = vst [vmem:[%s232 + $0x110] sm:$0xff] %v2459
          %2716 = vst [vmem:[%s232 + $0x118] sm:$0xff] %v2460
          %2717 = vst [vmem:[%s232 + $0x120] sm:$0xff] %v2461
          %2718 = vst [vmem:[%s232 + $0x128] sm:$0xff] %v2462
          %2719 = vst [vmem:[%s232 + $0x130] sm:$0xff] %v2463
          %2720 = vst [vmem:[%s232 + $0x138] sm:$0xff] %v2464
          %2721 = vst [vmem:[%s232 + $0x140] sm:$0xff] %v2465
          %2722 = vst [vmem:[%s232 + $0x148] sm:$0xff] %v2466
          %2723 = vst [vmem:[%s232 + $0x150] sm:$0xff] %v2467
          %2724 = vst [vmem:[%s232 + $0x158] sm:$0xff] %v2468
          %2725 = vst [vmem:[%s232 + $0x160] sm:$0xff] %v2469
          %2726 = vst [vmem:[%s232 + $0x168] sm:$0xff] %v2470
          %2727 = vst [vmem:[%s232 + $0x170] sm:$0xff] %v2471
          %2728 = vst [vmem:[%s232 + $0x178] sm:$0xff] %v2472
          %2729 = vst [vmem:[%s232 + $0x180] sm:$0xff] %v2473
          %2730 = vst [vmem:[%s232 + $0x188] sm:$0xff] %v2474
          %2731 = vst [vmem:[%s232 + $0x190] sm:$0xff] %v2475
          %2732 = vst [vmem:[%s232 + $0x198] sm:$0xff] %v2476
          %2733 = vst [vmem:[%s232 + $0x1a0] sm:$0xff] %v2477
          %2734 = vst [vmem:[%s232 + $0x1a8] sm:$0xff] %v2478
          %2735 = vst [vmem:[%s232 + $0x1b0] sm:$0xff] %v2479
          %2736 = vst [vmem:[%s232 + $0x1b8] sm:$0xff] %v2480
          %2737 = vst [vmem:[%s232 + $0x1c0] sm:$0xff] %v2481
          %2738 = vst [vmem:[%s232 + $0x1c8] sm:$0xff] %v2482
          %2739 = vst [vmem:[%s232 + $0x1d0] sm:$0xff] %v2483
          %2740 = vst [vmem:[%s232 + $0x1d8] sm:$0xff] %v2484
          %2741 = vst [vmem:[%s232 + $0x1e0] sm:$0xff] %v2485
          %2742 = vst [vmem:[%s232 + $0x1e8] sm:$0xff] %v2486
          %2743 = vst [vmem:[%s232 + $0x1f0] sm:$0xff] %v2487
          %2744 = vst [vmem:[%s232 + $0x1f8] sm:$0xff] %v2488
          %2745 = vst [vmem:[%s232 + $0x200] sm:$0xff] %v2489
          %2746 = vst [vmem:[%s232 + $0x208] sm:$0xff] %v2490
          %2747 = vst [vmem:[%s232 + $0x210] sm:$0xff] %v2491
          %2748 = vst [vmem:[%s232 + $0x218] sm:$0xff] %v2492
          %2749 = vst [vmem:[%s232 + $0x220] sm:$0xff] %v2493
          %2750 = vst [vmem:[%s232 + $0x228] sm:$0xff] %v2494
          %2751 = vst [vmem:[%s232 + $0x230] sm:$0xff] %v2495
          %2752 = vst [vmem:[%s232 + $0x238] sm:$0xff] %v2496
          %2753 = vst [vmem:[%s232 + $0x240] sm:$0xff] %v2497
          %2754 = vst [vmem:[%s232 + $0x248] sm:$0xff] %v2498
          %2755 = vst [vmem:[%s232 + $0x250] sm:$0xff] %v2499
          %2756 = vst [vmem:[%s232 + $0x258] sm:$0xff] %v2500
          %2757 = vst [vmem:[%s232 + $0x260] sm:$0xff] %v2501
          %2758 = vst [vmem:[%s232 + $0x268] sm:$0xff] %v2502
          %2759 = vst [vmem:[%s232 + $0x270] sm:$0xff] %v2503
          %2760 = vst [vmem:[%s232 + $0x278] sm:$0xff] %v2504
          %2761 = vst [vmem:[%s232 + $0x280] sm:$0xff] %v2505
          %2762 = vst [vmem:[%s232 + $0x288] sm:$0xff] %v2506
          %2763 = vst [vmem:[%s232 + $0x290] sm:$0xff] %v2507
          %2764 = vst [vmem:[%s232 + $0x298] sm:$0xff] %v2508
          %2765 = vst [vmem:[%s232 + $0x2a0] sm:$0xff] %v2509
          %2766 = vst [vmem:[%s232 + $0x2a8] sm:$0xff] %v2510
          %2767 = vst [vmem:[%s232 + $0x2b0] sm:$0xff] %v2511
          %2768 = vst [vmem:[%s232 + $0x2b8] sm:$0xff] %v2512
          %2769 = vst [vmem:[%s232 + $0x2c0] sm:$0xff] %v2513
          %2770 = vst [vmem:[%s232 + $0x2c8] sm:$0xff] %v2514
          %2771 = vst [vmem:[%s232 + $0x2d0] sm:$0xff] %v2515
          %2772 = vst [vmem:[%s232 + $0x2d8] sm:$0xff] %v2516
          %2773 = vst [vmem:[%s232 + $0x2e0] sm:$0xff] %v2517
          %2774 = vst [vmem:[%s232 + $0x2e8] sm:$0xff] %v2518
          %2775 = vst [vmem:[%s232 + $0x2f0] sm:$0xff] %v2519
          %2776 = vst [vmem:[%s232 + $0x2f8] sm:$0xff] %v2520
          %2777 = vst [vmem:[%s232 + $0x300] sm:$0xff] %v2521
          %2778 = vst [vmem:[%s232 + $0x308] sm:$0xff] %v2522
          %2779 = vst [vmem:[%s232 + $0x310] sm:$0xff] %v2523
          %2780 = vst [vmem:[%s232 + $0x318] sm:$0xff] %v2524
          %2781 = vst [vmem:[%s232 + $0x320] sm:$0xff] %v2525
          %2782 = vst [vmem:[%s232 + $0x328] sm:$0xff] %v2526
          %2783 = vst [vmem:[%s232 + $0x330] sm:$0xff] %v2527
          %2784 = vst [vmem:[%s232 + $0x338] sm:$0xff] %v2528
          %2785 = vst [vmem:[%s232 + $0x340] sm:$0xff] %v2529
          %2786 = vst [vmem:[%s232 + $0x348] sm:$0xff] %v2530
          %2787 = vst [vmem:[%s232 + $0x350] sm:$0xff] %v2531
          %2788 = vst [vmem:[%s232 + $0x358] sm:$0xff] %v2532
          %2789 = vst [vmem:[%s232 + $0x360] sm:$0xff] %v2533
          %2790 = vst [vmem:[%s232 + $0x368] sm:$0xff] %v2534
          %2791 = vst [vmem:[%s232 + $0x370] sm:$0xff] %v2535
          %2792 = vst [vmem:[%s232 + $0x378] sm:$0xff] %v2536
          %2793 = vst [vmem:[%s232 + $0x380] sm:$0xff] %v2537
          %2794 = vst [vmem:[%s232 + $0x388] sm:$0xff] %v2538
          %2795 = vst [vmem:[%s232 + $0x390] sm:$0xff] %v2539
          %2796 = vst [vmem:[%s232 + $0x398] sm:$0xff] %v2540
          %2797 = vst [vmem:[%s232 + $0x3a0] sm:$0xff] %v2541
          %2798 = vst [vmem:[%s232 + $0x3a8] sm:$0xff] %v2542
          %2799 = vst [vmem:[%s232 + $0x3b0] sm:$0xff] %v2543
          %2800 = vst [vmem:[%s232 + $0x3b8] sm:$0xff] %v2544
          %2801 = vst [vmem:[%s232 + $0x3c0] sm:$0xff] %v2545
          %2802 = vst [vmem:[%s232 + $0x3c8] sm:$0xff] %v2546
          %2803 = vst [vmem:[%s232 + $0x3d0] sm:$0xff] %v2547
          %2804 = vst [vmem:[%s232 + $0x3d8] sm:$0xff] %v2548
          %2805 = vst [vmem:[%s232 + $0x3e0] sm:$0xff] %v2549
          %2806 = vst [vmem:[%s232 + $0x3e8] sm:$0xff] %v2550
          %2807 = vst [vmem:[%s232 + $0x3f0] sm:$0xff] %v2551
          %2808 = vst [vmem:[%s232 + $0x3f8] sm:$0xff] %v2552
          %2809 = vst [vmem:[%s232 + $0x400] sm:$0xff] %v2553
          %2810 = vst [vmem:[%s232 + $0x408] sm:$0xff] %v2554
          %2811 = vst [vmem:[%s232 + $0x410] sm:$0xff] %v2555
          %2812 = vst [vmem:[%s232 + $0x418] sm:$0xff] %v2556
          %2813 = vst [vmem:[%s232 + $0x420] sm:$0xff] %v2557
          %2814 = vst [vmem:[%s232 + $0x428] sm:$0xff] %v2558
          %2815 = vst [vmem:[%s232 + $0x430] sm:$0xff] %v2559
          %2816 = vst [vmem:[%s232 + $0x438] sm:$0xff] %v2560
          %2817 = vst [vmem:[%s232 + $0x440] sm:$0xff] %v2561
          %2818 = vst [vmem:[%s232 + $0x448] sm:$0xff] %v2562
          %2819 = vst [vmem:[%s232 + $0x450] sm:$0xff] %v2563
          %2820 = vst [vmem:[%s232 + $0x458] sm:$0xff] %v2564
          %2821 = vst [vmem:[%s232 + $0x460] sm:$0xff] %v2565
          %2822 = vst [vmem:[%s232 + $0x468] sm:$0xff] %v2566
          %2823 = vst [vmem:[%s232 + $0x470] sm:$0xff] %v2567
          %2824 = vst [vmem:[%s232 + $0x478] sm:$0xff] %v2568
          %2825 = vst [vmem:[%s232 + $0x480] sm:$0xff] %v2569
          %2826 = vst [vmem:[%s232 + $0x488] sm:$0xff] %v2570
          %2827 = vst [vmem:[%s232 + $0x490] sm:$0xff] %v2571
          %2828 = vst [vmem:[%s232 + $0x498] sm:$0xff] %v2572
          %2829 = vst [vmem:[%s232 + $0x4a0] sm:$0xff] %v2573
          %2830 = vst [vmem:[%s232 + $0x4a8] sm:$0xff] %v2574
          %2831 = vst [vmem:[%s232 + $0x4b0] sm:$0xff] %v2575
          %2832 = vst [vmem:[%s232 + $0x4b8] sm:$0xff] %v2576
          %2833 = vst [vmem:[%s232 + $0x4c0] sm:$0xff] %v2577
          %2834 = vst [vmem:[%s232 + $0x4c8] sm:$0xff] %v2578
          %2835 = vst [vmem:[%s232 + $0x4d0] sm:$0xff] %v2579
          %2836 = vst [vmem:[%s232 + $0x4d8] sm:$0xff] %v2580
          %2837 = vst [vmem:[%s232 + $0x4e0] sm:$0xff] %v2581
          %2838 = vst [vmem:[%s232 + $0x4e8] sm:$0xff] %v2582
          %2839 = vst [vmem:[%s232 + $0x4f0] sm:$0xff] %v2583
          %2840 = vst [vmem:[%s232 + $0x4f8] sm:$0xff] %v2584
          %2841 = vst [vmem:[%s232 + $0x500] sm:$0xff] %v2585
          %2842 = vst [vmem:[%s232 + $0x508] sm:$0xff] %v2586
          %2843 = vst [vmem:[%s232 + $0x510] sm:$0xff] %v2587
          %2844 = vst [vmem:[%s232 + $0x518] sm:$0xff] %v2588
          %2845 = vst [vmem:[%s232 + $0x520] sm:$0xff] %v2589
          %2846 = vst [vmem:[%s232 + $0x528] sm:$0xff] %v2590
          %2847 = vst [vmem:[%s232 + $0x530] sm:$0xff] %v2591
          %2848 = vst [vmem:[%s232 + $0x538] sm:$0xff] %v2592
          %2849 = vst [vmem:[%s232 + $0x540] sm:$0xff] %v2593
          %2850 = vst [vmem:[%s232 + $0x548] sm:$0xff] %v2594
          %2851 = vst [vmem:[%s232 + $0x550] sm:$0xff] %v2595
          %2852 = vst [vmem:[%s232 + $0x558] sm:$0xff] %v2596
          %2853 = vst [vmem:[%s232 + $0x560] sm:$0xff] %v2597
          %2854 = vst [vmem:[%s232 + $0x568] sm:$0xff] %v2598
          %2855 = vst [vmem:[%s232 + $0x570] sm:$0xff] %v2599
          %2856 = vst [vmem:[%s232 + $0x578] sm:$0xff] %v2600
          %2857 = vst [vmem:[%s232 + $0x580] sm:$0xff] %v2601
          %2858 = vst [vmem:[%s232 + $0x588] sm:$0xff] %v2602
          %2859 = vst [vmem:[%s232 + $0x590] sm:$0xff] %v2603
          %2860 = vst [vmem:[%s232 + $0x598] sm:$0xff] %v2604
          %2861 = vst [vmem:[%s232 + $0x5a0] sm:$0xff] %v2605
          %2862 = vst [vmem:[%s232 + $0x5a8] sm:$0xff] %v2606
          %2863 = vst [vmem:[%s232 + $0x5b0] sm:$0xff] %v2607
          %2864 = vst [vmem:[%s232 + $0x5b8] sm:$0xff] %v2608
          %2865 = vst [vmem:[%s232 + $0x5c0] sm:$0xff] %v2609
          %2866 = vst [vmem:[%s232 + $0x5c8] sm:$0xff] %v2610
          %2867 = vst [vmem:[%s232 + $0x5d0] sm:$0xff] %v2611
          %2868 = vst [vmem:[%s232 + $0x5d8] sm:$0xff] %v2612
          %2869 = vst [vmem:[%s232 + $0x5e0] sm:$0xff] %v2613
          %2870 = vst [vmem:[%s232 + $0x5e8] sm:$0xff] %v2614
          %2871 = vst [vmem:[%s232 + $0x5f0] sm:$0xff] %v2615
          %2872 = vst [vmem:[%s232 + $0x5f8] sm:$0xff] %v2616
          %2873 = vst [vmem:[%s232 + $0x600] sm:$0xff] %v2617
          %2874 = vst [vmem:[%s232 + $0x608] sm:$0xff] %v2618
          %2875 = vst [vmem:[%s232 + $0x610] sm:$0xff] %v2619
          %2876 = vst [vmem:[%s232 + $0x618] sm:$0xff] %v2620
          %2877 = vst [vmem:[%s232 + $0x620] sm:$0xff] %v2621
          %2878 = vst [vmem:[%s232 + $0x628] sm:$0xff] %v2622
          %2879 = vst [vmem:[%s232 + $0x630] sm:$0xff] %v2623
          %2880 = vst [vmem:[%s232 + $0x638] sm:$0xff] %v2624
          %2881 = vst [vmem:[%s232 + $0x640] sm:$0xff] %v2625
          %2882 = vst [vmem:[%s232 + $0x648] sm:$0xff] %v2626
          %2883 = vst [vmem:[%s232 + $0x650] sm:$0xff] %v2627
          %2884 = vst [vmem:[%s232 + $0x658] sm:$0xff] %v2628
          %2885 = vst [vmem:[%s232 + $0x660] sm:$0xff] %v2629
          %2886 = vst [vmem:[%s232 + $0x668] sm:$0xff] %v2630
          %2887 = vst [vmem:[%s232 + $0x670] sm:$0xff] %v2631
          %2888 = vst [vmem:[%s232 + $0x678] sm:$0xff] %v2632
          %2889 = vst [vmem:[%s232 + $0x680] sm:$0xff] %v2633
          %2890 = vst [vmem:[%s232 + $0x688] sm:$0xff] %v2634
          %2891 = vst [vmem:[%s232 + $0x690] sm:$0xff] %v2635
          %2892 = vst [vmem:[%s232 + $0x698] sm:$0xff] %v2636
          %2893 = vst [vmem:[%s232 + $0x6a0] sm:$0xff] %v2637
          %2894 = vst [vmem:[%s232 + $0x6a8] sm:$0xff] %v2638
          %2895 = vst [vmem:[%s232 + $0x6b0] sm:$0xff] %v2639
          %2896 = vst [vmem:[%s232 + $0x6b8] sm:$0xff] %v2640
          %2897 = vst [vmem:[%s232 + $0x6c0] sm:$0xff] %v2641
          %2898 = vst [vmem:[%s232 + $0x6c8] sm:$0xff] %v2642
          %2899 = vst [vmem:[%s232 + $0x6d0] sm:$0xff] %v2643
          %2900 = vst [vmem:[%s232 + $0x6d8] sm:$0xff] %v2644
          %2901 = vst [vmem:[%s232 + $0x6e0] sm:$0xff] %v2645
          %2902 = vst [vmem:[%s232 + $0x6e8] sm:$0xff] %v2646
          %2903 = vst [vmem:[%s232 + $0x6f0] sm:$0xff] %v2647
          %2904 = vst [vmem:[%s232 + $0x6f8] sm:$0xff] %v2648
          %2905 = vst [vmem:[%s232 + $0x700] sm:$0xff] %v2649
          %2906 = vst [vmem:[%s232 + $0x708] sm:$0xff] %v2650
          %2907 = vst [vmem:[%s232 + $0x710] sm:$0xff] %v2651
          %2908 = vst [vmem:[%s232 + $0x718] sm:$0xff] %v2652
          %2909 = vst [vmem:[%s232 + $0x720] sm:$0xff] %v2653
          %2910 = vst [vmem:[%s232 + $0x728] sm:$0xff] %v2654
          %2911 = vst [vmem:[%s232 + $0x730] sm:$0xff] %v2655
          %2912 = vst [vmem:[%s232 + $0x738] sm:$0xff] %v2656
          %2913 = vst [vmem:[%s232 + $0x740] sm:$0xff] %v2657
          %2914 = vst [vmem:[%s232 + $0x748] sm:$0xff] %v2658
          %2915 = vst [vmem:[%s232 + $0x750] sm:$0xff] %v2659
          %2916 = vst [vmem:[%s232 + $0x758] sm:$0xff] %v2660
          %2917 = vst [vmem:[%s232 + $0x760] sm:$0xff] %v2661
          %2918 = vst [vmem:[%s232 + $0x768] sm:$0xff] %v2662
          %2919 = vst [vmem:[%s232 + $0x770] sm:$0xff] %v2663
          %2920 = vst [vmem:[%s232 + $0x778] sm:$0xff] %v2664
          %2921 = vst [vmem:[%s232 + $0x780] sm:$0xff] %v2665
          %2922 = vst [vmem:[%s232 + $0x788] sm:$0xff] %v2666
          %2923 = vst [vmem:[%s232 + $0x790] sm:$0xff] %v2667
          %2924 = vst [vmem:[%s232 + $0x798] sm:$0xff] %v2668
          %2925 = vst [vmem:[%s232 + $0x7a0] sm:$0xff] %v2669
          %2926 = vst [vmem:[%s232 + $0x7a8] sm:$0xff] %v2670
          %2927 = vst [vmem:[%s232 + $0x7b0] sm:$0xff] %v2671
          %2928 = vst [vmem:[%s232 + $0x7b8] sm:$0xff] %v2672
          %2929 = vst [vmem:[%s232 + $0x7c0] sm:$0xff] %v2673
          %2930 = vst [vmem:[%s232 + $0x7c8] sm:$0xff] %v2674
          %2931 = vst [vmem:[%s232 + $0x7d0] sm:$0xff] %v2675
          %2932 = vst [vmem:[%s232 + $0x7d8] sm:$0xff] %v2676
          %2933 = vst [vmem:[%s232 + $0x7e0] sm:$0xff] %v2677
          %2934 = vst [vmem:[%s232 + $0x7e8] sm:$0xff] %v2678
          %2935 = vst [vmem:[%s232 + $0x7f0] sm:$0xff] %v2679
          %2936 = vst [vmem:[%s232 + $0x7f8] sm:$0xff] %v2680
        $region44: #{tpu_custom_call.1} parent=27 // pred_fallthru
          _
        %s2937 = sand.u32 %s107, 1
        %s2938 = scalar_lea.sflag [#allocation5], %s2937
        %s2939 = sand.u32 %s107, 1
        %s2940 = smul.addr %s2939, 2048
        %s2941 = scalar_lea.vmem [#allocation8], %s2940
        // Predicated region
        $region45: #{tpu_custom_call.1} parent=27 // pred_check
          %p2942 = pneg %p117
        $region46: #{tpu_custom_call.1} parent=27 // pred_check_branch
          %2944 = sbr.rel (%p2942) target = $region48
        $region47: #{tpu_custom_call.1} parent=27 // pred_region
          %s2945 = smul.u32 64, %s27
          %s2946 = smul.u32 4, %s28
          %s2948 = ssub.s32 32768, 32768
          %2949 = vsyncadd %s2938, %s2948
          %s2950 = smul.addr %s2945, 8
          %s2951 = sadd.s32 %s2946, %s2950
          %s2952 = smul.addr %s2951, 128
          %s2953 = scalar_lea.hbm %s2, %s2952
          %s2954 = sshll.u32 %s2941, 4
          %s2955 = int_to_ptr.vmem [resolvable:$true] %s2954
          %2960 = dma.vmem_to_hbm [thread:$0]  %s2955, 32768, %s2953, %s2938, 512, 1024, 32
        $region48: #{tpu_custom_call.1} parent=27 // pred_fallthru
          _
      $region28: #{tpu_custom_call.1} parent=5 // pred_fallthru
        _
      %p2961 = scmp.le.s32.totalorder 2, %s17
      // Predicated region
      $region49: #{tpu_custom_call.1} parent=5 // pred_check
        %p2962 = pneg %p2961
      $region50: #{tpu_custom_call.1} parent=5 // pred_check_branch
        %2964 = sbr.rel (%p2962) target = $region52
      $region51: #{tpu_custom_call.1} parent=5 // pred_region
        %s2965 = ssub.s32 %s17, 2
        // Predicated region
        $region53: #{tpu_custom_call.1} parent=51 // pred_check
          %p2966 = pneg %p123
        $region54: #{tpu_custom_call.1} parent=51 // pred_check_branch
          %2968 = sbr.rel (%p2966) target = $region56
        $region55: #{tpu_custom_call.1} parent=51 // pred_region
          %s2969 = sand.u32 %s108, 1
          %s2970 = scalar_lea.sflag [#allocation5], %s2969
          %s2971 = sand.u32 %s108, 1
          %s2972 = smul.addr %s2971, 2048
          %s2973 = scalar_lea.vmem [#allocation8], %s2972
          %2974 = dma.done %s2970, 32768
        $region56: #{tpu_custom_call.1} parent=51 // pred_fallthru
          _
      $region52: #{tpu_custom_call.1} parent=5 // pred_fallthru
        _
    $region6: #{tpu_custom_call.1} parent=1 // loop_footer
      %s21 = sadd.s32 1, %s17
    $region7: #{tpu_custom_call.1} parent=1 // loop_footer_branch
      %16 = sbr.rel target = $region3
    $region8: #{tpu_custom_call.1} parent=1 // loop_exit
      _
    %2975 = vsyncpa [#allocation4], 1
    %s2976 = scalar_lea.sflag [#allocation4], 1
    %2977 = vsyncpa %s2976, 1
    %2978 = vsyncpa [#allocation7], 1
    %s2979 = scalar_lea.sflag [#allocation7], 1
    %2980 = vsyncpa %s2979, 1
    %2981 = vsyncpa [#allocation5], 1
    %s2982 = scalar_lea.sflag [#allocation5], 1
    %2983 = vsyncpa %s2982, 1

</llo_original>
